<compile_context>
chip_gen: v5e
topology: v5e:2x2
jax: 0.10.0
libtpu: 0.0.40
codegen_flags: <defaults>
</compile_context>

<pallas_src>
import functools

import jax
import jax.numpy as jnp
import numpy as np
from jax.experimental import pallas as pl
from jax.experimental.pallas import tpu as pltpu

_LANE = 128

# Row layout of the packed per-row parameter array (each row zero-padded to 128).
_VEC_ORDER = ("b_emb", "g_emb", "be_emb", "g_att", "b_att",
              "g1", "b1", "b_ff1", "b_ff2", "g2", "b2", "b_out")
_VROW = {name: i for i, name in enumerate(_VEC_ORDER)}


def _layernorm(x, g, b, eps=1e-5):
    mu = jnp.mean(x, axis=-1, keepdims=True)
    var = jnp.mean((x - mu) ** 2, axis=-1, keepdims=True)
    return (x - mu) * jax.lax.rsqrt(var + eps) * g + b


def transformer_kernel(x_ref, vec_ref, mask_ref, pool_ref,
                       w_emb_ref, w_qkv_ref, w_ff1_ref, w_ff2_ref, w_out_ref,
                       o_ref, *, num_heads):
    E = w_emb_ref.shape[1]
    FF = w_ff1_ref.shape[1]
    H = num_heads
    Dh = E // H
    cdt = jnp.bfloat16                      # MXU operand dtype (f32 accumulation)

    vec = vec_ref[...]                      # (12, 128) f32 packed per-row params

    def vrow(name, width):
        r = _VROW[name]
        return vec[r:r + 1, :width]         # (1, width) f32

    # ---- embed_layer: Linear(C -> E) + LayerNorm(E) ------------------------
    x = x_ref[...]                          # (TBL, C_pad) f32
    emb = jnp.dot(x.astype(cdt), w_emb_ref[...],
                  preferred_element_type=jnp.float32) + vrow("b_emb", E)
    x_src = _layernorm(emb, vrow("g_emb", E), vrow("be_emb", E))   # f32 (TBL, E)

    # ---- multi-head self-attention ------------------------------------------
    # Fused QKV matmul; E**-0.5 scale already folded into the Q columns.
    xb = x_src.astype(cdt)
    qkv = jnp.dot(xb, w_qkv_ref[...],
                  preferred_element_type=jnp.float32).astype(cdt)  # (TBL, 128)
    q = qkv[:, 0:E]
    k = qkv[:, E:2 * E]
    v = qkv[:, 2 * E:3 * E]

    contract_last = (((1,), (1,)), ((), ()))     # contract last dim of both
    heads = []
    for h in range(H):                           # static unroll, H is small
        sl = slice(h * Dh, (h + 1) * Dh)
        s = jax.lax.dot_general(q[:, sl], k[:, sl], contract_last,
                                preferred_element_type=jnp.float32)  # (TBL, TBL)
        # Precomputed block-diagonal additive bias (0 same-batch / -1e30 other),
        # f32 so exp() of masked entries underflows to exactly 0.
        s = s + mask_ref[...]
        s = s - jnp.max(s, axis=-1, keepdims=True)
        p = jnp.exp(s)
        p = p * pl.reciprocal(jnp.sum(p, axis=-1, keepdims=True), approx=True)
        # masked entries are exactly 0 in p, so a dense matmul is correct.
        heads.append(jnp.dot(p.astype(cdt), v[:, sl],
                             preferred_element_type=jnp.float32))   # (TBL, Dh)
    attn = jnp.concatenate(heads, axis=-1)                          # (TBL, E) f32

    attn = _layernorm(attn, vrow("g_att", E), vrow("b_att", E))     # to_out LN
    att = _layernorm(x_src + attn, vrow("g1", E), vrow("b1", E))    # LayerNorm1

    # ---- FeedForward: Linear(E->FF) -> ReLU -> Linear(FF->E) ---------------
    h1 = jnp.maximum(
        jnp.dot(att.astype(cdt), w_ff1_ref[...],
                preferred_element_type=jnp.float32) + vrow("b_ff1", FF), 0.0)
    ff = jnp.dot(h1.astype(cdt), w_ff2_ref[...],
                 preferred_element_type=jnp.float32) + vrow("b_ff2", E)
    out = _layernorm(att + ff, vrow("g2", E), vrow("b2", E))        # LayerNorm2

    # ---- GAP over seq axis via precomputed block-pooling matmul -------------
    gap = jnp.dot(pool_ref[...], out, preferred_element_type=jnp.float32)  # (tb, E)

    # ---- classifier, lane-padded to 128 (lane-dense store) -----------------
    b_out = vec[_VROW["b_out"]:_VROW["b_out"] + 1, :]               # (1, 128)
    logits = jnp.dot(gap.astype(cdt), w_out_ref[...],
                     preferred_element_type=jnp.float32) + b_out
    o_ref[...] = logits


def transformer_forward(x_ncl, params, num_heads, *, tb=None):
    B, C, L = x_ncl.shape
    E = params["w_emb"].shape[1]
    FF = params["w_ff1"].shape[1]
    NC = params["w_out"].shape[1]
    assert E % num_heads == 0
    # packed per-row params / fused QKV use 128-lane rows
    assert E <= _LANE and FF <= _LANE and NC <= _LANE and 3 * E <= _LANE

    # Tile selection: aim for TBL = tb*L ~= 128 packed rows per grid step and
    # CAP it there (don't grow tb); scale batch via more grid steps.  Keep tb
    # 8-aligned (sublane tiles) and prefer >= 2 grid steps (v7x has 2 TCs).
    if tb is None:
        tb = max(1, _LANE // L)
    tb = max(8, (tb // 8) * 8)
    B_pad = -(-B // tb) * tb
    if B_pad // tb < 2 and tb > 8:          # keep both v7x TensorCores busy
        tb = max(8, (tb // 2) // 8 * 8)
        B_pad = -(-B // tb) * tb
    TBL = tb * L
    NC_pad = -(-NC // _LANE) * _LANE        # 128 for small NC
    C_pad = -(-C // 8) * 8                  # >= 8-wide input rows

    # NLC layout, pad batch + channels, flatten (batch, seq) onto sublanes.
    x = jnp.transpose(x_ncl, (0, 2, 1)).astype(jnp.float32)          # [B, L, C]
    x = jnp.pad(x, ((0, B_pad - B), (0, 0), (0, C_pad - C)))
    x2 = x.reshape(B_pad * L, C_pad)

    cdt = jnp.bfloat16
    w_emb = jnp.pad(params["w_emb"].astype(jnp.float32),
                    ((0, C_pad - C), (0, 0))).astype(cdt)
    # Fused QKV weight; softmax scale folded into the Q slice; 128-lane padded.
    scale = jnp.float32(E) ** -0.5
    w_qkv = jnp.concatenate([params["wq"].astype(jnp.float32) * scale,
                             params["wk"].astype(jnp.float32),
                             params["wv"].astype(jnp.float32)], axis=1)
    w_qkv = jnp.pad(w_qkv, ((0, 0), (0, _LANE - 3 * E))).astype(cdt)
    w_ff1 = params["w_ff1"].astype(cdt)
    w_ff2 = params["w_ff2"].astype(cdt)
    w_out = jnp.pad(params["w_out"].astype(jnp.float32),
                    ((0, 0), (0, NC_pad - NC))).astype(cdt)

    def packed_row(name):
        v = jnp.asarray(params[name], jnp.float32).reshape(1, -1)
        return jnp.pad(v, ((0, 0), (0, _LANE - v.shape[1])))
    vecs = jnp.concatenate([packed_row(n) for n in _VEC_ORDER], axis=0)  # (12, 128)

    # Host-side constants (constant index_map -> DMA'd once), replacing the
    # in-kernel iota / integer-divide mask and pool construction.
    blk = np.arange(TBL, dtype=np.int32) // L
    mask_bias = jnp.asarray(
        np.where(blk[:, None] == blk[None, :], 0.0, -1e30).astype(np.float32))
    pool = jnp.asarray(
        np.where(np.arange(tb, dtype=np.int32)[:, None] == blk[None, :],
                 1.0 / L, 0.0).astype(np.float32))                       # (tb, TBL)

    kernel = functools.partial(transformer_kernel, num_heads=num_heads)

    out = pl.pallas_call(
        kernel,
        out_shape=jax.ShapeDtypeStruct((B_pad, NC_pad), jnp.float32),
        grid=(B_pad // tb,),
        in_specs=[
            pl.BlockSpec((TBL, C_pad), lambda b: (b, 0)),
            pl.BlockSpec(vecs.shape, lambda b: (0, 0)),
            pl.BlockSpec(mask_bias.shape, lambda b: (0, 0)),
            pl.BlockSpec(pool.shape, lambda b: (0, 0)),
            pl.BlockSpec(w_emb.shape, lambda b: (0, 0)),
            pl.BlockSpec(w_qkv.shape, lambda b: (0, 0)),
            pl.BlockSpec(w_ff1.shape, lambda b: (0, 0)),
            pl.BlockSpec(w_ff2.shape, lambda b: (0, 0)),
            pl.BlockSpec(w_out.shape, lambda b: (0, 0)),
        ],
        out_specs=pl.BlockSpec((tb, NC_pad), lambda b: (b, 0)),
        compiler_params=pltpu.CompilerParams(
            dimension_semantics=("parallel",)),
    )(x2, vecs, mask_bias, pool, w_emb, w_qkv, w_ff1, w_ff2, w_out)
    return out[:B, :NC]


def reference_forward(x_ncl, params, num_heads):
    """Pure-JAX f32 reference mirroring the PyTorch module semantics."""
    x = jnp.transpose(x_ncl, (0, 2, 1)).astype(jnp.float32)

    def ln(z, g, b):
        mu = jnp.mean(z, -1, keepdims=True)
        var = jnp.mean((z - mu) ** 2, -1, keepdims=True)
        return (z - mu) / jnp.sqrt(var + 1e-5) * g + b

    emb = x @ params["w_emb"] + params["b_emb"]
    x_src = ln(emb, params["g_emb"], params["be_emb"])
    B, L, E = x_src.shape
    H = num_heads
    Dh = E // H
    q = (x_src @ params["wq"]).reshape(B, L, H, Dh).transpose(0, 2, 1, 3)
    k = (x_src @ params["wk"]).reshape(B, L, H, Dh).transpose(0, 2, 1, 3)
    v = (x_src @ params["wv"]).reshape(B, L, H, Dh).transpose(0, 2, 1, 3)
    s = jnp.einsum("bhqd,bhkd->bhqk", q, k) * (E ** -0.5)
    p = jax.nn.softmax(s, axis=-1)
    attn = jnp.einsum("bhqk,bhkd->bhqd", p, v).transpose(0, 2, 1, 3).reshape(B, L, E)
    attn = ln(attn, params["g_att"], params["b_att"])
    att = ln(x_src + attn, params["g1"], params["b1"])
    h1 = jax.nn.relu(att @ params["w_ff1"] + params["b_ff1"])
    ff = h1 @ params["w_ff2"] + params["b_ff2"]
    out = ln(att + ff, params["g2"], params["b2"])
    gap = jnp.mean(out, axis=1)                                          # [B, E]
    return gap @ params["w_out"] + params["b_out"]


if __name__ == "__main__":
    # Small shapes consistent with the module (Data_shape = [B, C, L]).
    # B=32 with TB=16 gives 128-row tiles and a 2-step parallel grid.
    B, C, L = 32, 4, 8
    E, H, FF, NC = 32, 4, 64, 5

    key = jax.random.PRNGKey(0)
    keys = jax.random.split(key, 16)

    def w(k, shape, scale=0.1):
        return jax.random.normal(k, shape, jnp.float32) * scale

    ones = lambda s: jnp.ones(s, jnp.float32)
    zeros = lambda s: jnp.zeros(s, jnp.float32)

    params = {
        "w_emb": w(keys[0], (C, E)), "b_emb": w(keys[1], (1, E)),
        "g_emb": ones((1, E)), "be_emb": zeros((1, E)),
        "wq": w(keys[2], (E, E)), "wk": w(keys[3], (E, E)), "wv": w(keys[4], (E, E)),
        "g_att": ones((1, E)), "b_att": zeros((1, E)),
        "g1": ones((1, E)), "b1": zeros((1, E)),
        "w_ff1": w(keys[5], (E, FF)), "b_ff1": w(keys[6], (1, FF)),
        "w_ff2": w(keys[7], (FF, E)), "b_ff2": w(keys[8], (1, E)),
        "g2": ones((1, E)), "b2": zeros((1, E)),
        "w_out": w(keys[9], (E, NC)), "b_out": w(keys[10], (1, NC)),
    }

    x = jax.random.normal(keys[11], (B, C, L), jnp.float32)

    out = transformer_forward(x, params, H)
    out = jax.block_until_ready(out)
    assert out.shape == (B, NC)

    ref = reference_forward(x, params, H)
    # bf16 MXU operands (f32 accumulation) + approx reciprocal vs the pure-f32
    # reference -> ~1e-2 level agreement; tolerance set accordingly.
    np.testing.assert_allclose(np.asarray(out), np.asarray(ref),
                               rtol=5e-2, atol=5e-2)
    print("KERNEL_OK")
</pallas_src>

<mosaic_0001>
module attributes {stable_mosaic.version = 11 : i64} {
  func.func @transformer_kernel(%arg0: i32, %arg1: memref<128x8xf32, #tpu.memory_space<vmem>>, %arg2: memref<12x128xf32, #tpu.memory_space<vmem>>, %arg3: memref<128x128xf32, #tpu.memory_space<vmem>>, %arg4: memref<16x128xf32, #tpu.memory_space<vmem>>, %arg5: memref<8x32xbf16, #tpu.memory_space<vmem>>, %arg6: memref<32x128xbf16, #tpu.memory_space<vmem>>, %arg7: memref<32x64xbf16, #tpu.memory_space<vmem>>, %arg8: memref<64x32xbf16, #tpu.memory_space<vmem>>, %arg9: memref<32x128xbf16, #tpu.memory_space<vmem>>, %arg10: memref<16x128xf32, #tpu.memory_space<vmem>>) attributes {dimension_semantics = [#tpu.dimension_semantics<parallel>], iteration_bounds = array<i64: 2>, scalar_prefetch = 0 : i64, scratch_operands = 0 : i64, tpu.core_type = #tpu.core_type<tc>, window_params = [{transform_indices = @transform_0, window_bounds = array<i64: 128, 8>}, {pipeline_mode = #tpu.pipeline_mode<synchronous>, transform_indices = @transform_1, window_bounds = array<i64: 12, 128>}, {pipeline_mode = #tpu.pipeline_mode<synchronous>, transform_indices = @transform_2, window_bounds = array<i64: 128, 128>}, {pipeline_mode = #tpu.pipeline_mode<synchronous>, transform_indices = @transform_3, window_bounds = array<i64: 16, 128>}, {pipeline_mode = #tpu.pipeline_mode<synchronous>, transform_indices = @transform_4, window_bounds = array<i64: 8, 32>}, {pipeline_mode = #tpu.pipeline_mode<synchronous>, transform_indices = @transform_5, window_bounds = array<i64: 32, 128>}, {pipeline_mode = #tpu.pipeline_mode<synchronous>, transform_indices = @transform_6, window_bounds = array<i64: 32, 64>}, {pipeline_mode = #tpu.pipeline_mode<synchronous>, transform_indices = @transform_7, window_bounds = array<i64: 64, 32>}, {pipeline_mode = #tpu.pipeline_mode<synchronous>, transform_indices = @transform_8, window_bounds = array<i64: 32, 128>}, {transform_indices = @transform_9, window_bounds = array<i64: 16, 128>}]} {
    %c0 = arith.constant 0 : index
    %c0_0 = arith.constant 0 : index
    %0 = vector.load %arg2[%c0, %c0_0] : memref<12x128xf32, #tpu.memory_space<vmem>>, vector<12x128xf32>
    %c0_1 = arith.constant 0 : index
    %c0_2 = arith.constant 0 : index
    %1 = vector.load %arg1[%c0_1, %c0_2] : memref<128x8xf32, #tpu.memory_space<vmem>>, vector<128x8xf32>
    %2 = arith.truncf %1 : vector<128x8xf32> to vector<128x8xbf16>
    %c0_3 = arith.constant 0 : index
    %c0_4 = arith.constant 0 : index
    %3 = vector.load %arg5[%c0_3, %c0_4] : memref<8x32xbf16, #tpu.memory_space<vmem>>, vector<8x32xbf16>
    %cst = arith.constant dense<0.000000e+00> : vector<128x32xf32>
    %4 = tpu.matmul %2, %3, %cst {dimension_numbers = #tpu.dot_dimension_numbers<[1], [0], [0], [1], [0, 0, 1, 1], [], []>} : vector<128x8xbf16>, vector<8x32xbf16>, vector<128x32xf32> -> vector<128x32xf32>
    %5 = vector.extract_strided_slice %0 {offsets = [0, 0], sizes = [1, 32], strides = [1, 1]} : vector<12x128xf32> to vector<1x32xf32>
    %6 = vector.broadcast %5 : vector<1x32xf32> to vector<128x32xf32>
    %7 = arith.addf %4, %6 : vector<128x32xf32>
    %8 = vector.extract_strided_slice %0 {offsets = [1, 0], sizes = [1, 32], strides = [1, 1]} : vector<12x128xf32> to vector<1x32xf32>
    %9 = vector.extract_strided_slice %0 {offsets = [2, 0], sizes = [1, 32], strides = [1, 1]} : vector<12x128xf32> to vector<1x32xf32>
    %cst_5 = arith.constant dense<0.000000e+00> : vector<128xf32>
    %10 = vector.multi_reduction <add>, %7, %cst_5 [1] : vector<128x32xf32> to vector<128xf32>
    %11 = vector.shape_cast %10 : vector<128xf32> to vector<128x1xf32>
    %cst_6 = arith.constant 3.200000e+01 : f32
    %12 = vector.broadcast %cst_6 : f32 to vector<128x1xf32>
    %13 = arith.divf %11, %12 : vector<128x1xf32>
    %14 = vector.broadcast %13 : vector<128x1xf32> to vector<128x32xf32>
    %15 = arith.subf %7, %14 : vector<128x32xf32>
    %16 = arith.mulf %15, %15 : vector<128x32xf32>
    %cst_7 = arith.constant dense<0.000000e+00> : vector<128xf32>
    %17 = vector.multi_reduction <add>, %16, %cst_7 [1] : vector<128x32xf32> to vector<128xf32>
    %18 = vector.shape_cast %17 : vector<128xf32> to vector<128x1xf32>
    %cst_8 = arith.constant 3.200000e+01 : f32
    %19 = vector.broadcast %cst_8 : f32 to vector<128x1xf32>
    %20 = arith.divf %18, %19 : vector<128x1xf32>
    %21 = vector.broadcast %13 : vector<128x1xf32> to vector<128x32xf32>
    %22 = arith.subf %7, %21 : vector<128x32xf32>
    %cst_9 = arith.constant 9.99999974E-6 : f32
    %23 = vector.broadcast %cst_9 : f32 to vector<128x1xf32>
    %24 = arith.addf %20, %23 : vector<128x1xf32>
    %25 = math.rsqrt %24 : vector<128x1xf32>
    %26 = vector.broadcast %25 : vector<128x1xf32> to vector<128x32xf32>
    %27 = arith.mulf %22, %26 : vector<128x32xf32>
    %28 = vector.broadcast %8 : vector<1x32xf32> to vector<128x32xf32>
    %29 = arith.mulf %27, %28 : vector<128x32xf32>
    %30 = vector.broadcast %9 : vector<1x32xf32> to vector<128x32xf32>
    %31 = arith.addf %29, %30 : vector<128x32xf32>
    %32 = arith.truncf %31 : vector<128x32xf32> to vector<128x32xbf16>
    %c0_10 = arith.constant 0 : index
    %c0_11 = arith.constant 0 : index
    %33 = vector.load %arg6[%c0_10, %c0_11] : memref<32x128xbf16, #tpu.memory_space<vmem>>, vector<32x128xbf16>
    %cst_12 = arith.constant dense<0.000000e+00> : vector<128x128xf32>
    %34 = tpu.matmul %32, %33, %cst_12 {dimension_numbers = #tpu.dot_dimension_numbers<[1], [0], [0], [1], [0, 0, 1, 1], [], []>} : vector<128x32xbf16>, vector<32x128xbf16>, vector<128x128xf32> -> vector<128x128xf32>
    %35 = arith.truncf %34 : vector<128x128xf32> to vector<128x128xbf16>
    %36 = vector.extract_strided_slice %35 {offsets = [0, 0], sizes = [128, 32], strides = [1, 1]} : vector<128x128xbf16> to vector<128x32xbf16>
    %37 = vector.extract_strided_slice %35 {offsets = [0, 32], sizes = [128, 32], strides = [1, 1]} : vector<128x128xbf16> to vector<128x32xbf16>
    %38 = vector.extract_strided_slice %35 {offsets = [0, 64], sizes = [128, 32], strides = [1, 1]} : vector<128x128xbf16> to vector<128x32xbf16>
    %39 = vector.extract_strided_slice %36 {offsets = [0, 0], sizes = [128, 8], strides = [1, 1]} : vector<128x32xbf16> to vector<128x8xbf16>
    %40 = vector.extract_strided_slice %37 {offsets = [0, 0], sizes = [128, 8], strides = [1, 1]} : vector<128x32xbf16> to vector<128x8xbf16>
    %cst_13 = arith.constant dense<0.000000e+00> : vector<128x128xf32>
    %41 = tpu.matmul %39, %40, %cst_13 {dimension_numbers = #tpu.dot_dimension_numbers<[1], [1], [0], [0], [0, 0, 1, 0], [], []>} : vector<128x8xbf16>, vector<128x8xbf16>, vector<128x128xf32> -> vector<128x128xf32>
    %c0_14 = arith.constant 0 : index
    %c0_15 = arith.constant 0 : index
    %42 = vector.load %arg3[%c0_14, %c0_15] : memref<128x128xf32, #tpu.memory_space<vmem>>, vector<128x128xf32>
    %43 = arith.addf %41, %42 : vector<128x128xf32>
    %cst_16 = arith.constant dense<0xFF800000> : vector<128xf32>
    %44 = vector.multi_reduction <maximumf>, %43, %cst_16 [1] : vector<128x128xf32> to vector<128xf32>
    %45 = vector.shape_cast %44 : vector<128xf32> to vector<128x1xf32>
    %46 = vector.broadcast %45 : vector<128x1xf32> to vector<128x128xf32>
    %47 = arith.subf %43, %46 : vector<128x128xf32>
    %48 = math.exp %47 : vector<128x128xf32>
    %cst_17 = arith.constant dense<0.000000e+00> : vector<128xf32>
    %49 = vector.multi_reduction <add>, %48, %cst_17 [1] : vector<128x128xf32> to vector<128xf32>
    %50 = vector.shape_cast %49 : vector<128xf32> to vector<128x1xf32>
    %51 = tpu.reciprocal %50 {approx = true} : vector<128x1xf32> -> vector<128x1xf32>
    %52 = vector.broadcast %51 : vector<128x1xf32> to vector<128x128xf32>
    %53 = arith.mulf %48, %52 : vector<128x128xf32>
    %54 = arith.truncf %53 : vector<128x128xf32> to vector<128x128xbf16>
    %55 = vector.extract_strided_slice %38 {offsets = [0, 0], sizes = [128, 8], strides = [1, 1]} : vector<128x32xbf16> to vector<128x8xbf16>
    %cst_18 = arith.constant dense<0.000000e+00> : vector<128x8xf32>
    %56 = tpu.matmul %54, %55, %cst_18 {dimension_numbers = #tpu.dot_dimension_numbers<[1], [0], [0], [1], [0, 0, 1, 1], [], []>} : vector<128x128xbf16>, vector<128x8xbf16>, vector<128x8xf32> -> vector<128x8xf32>
    %57 = vector.extract_strided_slice %36 {offsets = [0, 8], sizes = [128, 8], strides = [1, 1]} : vector<128x32xbf16> to vector<128x8xbf16>
    %58 = vector.extract_strided_slice %37 {offsets = [0, 8], sizes = [128, 8], strides = [1, 1]} : vector<128x32xbf16> to vector<128x8xbf16>
    %cst_19 = arith.constant dense<0.000000e+00> : vector<128x128xf32>
    %59 = tpu.matmul %57, %58, %cst_19 {dimension_numbers = #tpu.dot_dimension_numbers<[1], [1], [0], [0], [0, 0, 1, 0], [], []>} : vector<128x8xbf16>, vector<128x8xbf16>, vector<128x128xf32> -> vector<128x128xf32>
    %c0_20 = arith.constant 0 : index
    %c0_21 = arith.constant 0 : index
    %60 = vector.load %arg3[%c0_20, %c0_21] : memref<128x128xf32, #tpu.memory_space<vmem>>, vector<128x128xf32>
    %61 = arith.addf %59, %60 : vector<128x128xf32>
    %cst_22 = arith.constant dense<0xFF800000> : vector<128xf32>
    %62 = vector.multi_reduction <maximumf>, %61, %cst_22 [1] : vector<128x128xf32> to vector<128xf32>
    %63 = vector.shape_cast %62 : vector<128xf32> to vector<128x1xf32>
    %64 = vector.broadcast %63 : vector<128x1xf32> to vector<128x128xf32>
    %65 = arith.subf %61, %64 : vector<128x128xf32>
    %66 = math.exp %65 : vector<128x128xf32>
    %cst_23 = arith.constant dense<0.000000e+00> : vector<128xf32>
    %67 = vector.multi_reduction <add>, %66, %cst_23 [1] : vector<128x128xf32> to vector<128xf32>
    %68 = vector.shape_cast %67 : vector<128xf32> to vector<128x1xf32>
    %69 = tpu.reciprocal %68 {approx = true} : vector<128x1xf32> -> vector<128x1xf32>
    %70 = vector.broadcast %69 : vector<128x1xf32> to vector<128x128xf32>
    %71 = arith.mulf %66, %70 : vector<128x128xf32>
    %72 = arith.truncf %71 : vector<128x128xf32> to vector<128x128xbf16>
    %73 = vector.extract_strided_slice %38 {offsets = [0, 8], sizes = [128, 8], strides = [1, 1]} : vector<128x32xbf16> to vector<128x8xbf16>
    %cst_24 = arith.constant dense<0.000000e+00> : vector<128x8xf32>
    %74 = tpu.matmul %72, %73, %cst_24 {dimension_numbers = #tpu.dot_dimension_numbers<[1], [0], [0], [1], [0, 0, 1, 1], [], []>} : vector<128x128xbf16>, vector<128x8xbf16>, vector<128x8xf32> -> vector<128x8xf32>
    %75 = vector.extract_strided_slice %36 {offsets = [0, 16], sizes = [128, 8], strides = [1, 1]} : vector<128x32xbf16> to vector<128x8xbf16>
    %76 = vector.extract_strided_slice %37 {offsets = [0, 16], sizes = [128, 8], strides = [1, 1]} : vector<128x32xbf16> to vector<128x8xbf16>
    %cst_25 = arith.constant dense<0.000000e+00> : vector<128x128xf32>
    %77 = tpu.matmul %75, %76, %cst_25 {dimension_numbers = #tpu.dot_dimension_numbers<[1], [1], [0], [0], [0, 0, 1, 0], [], []>} : vector<128x8xbf16>, vector<128x8xbf16>, vector<128x128xf32> -> vector<128x128xf32>
    %c0_26 = arith.constant 0 : index
    %c0_27 = arith.constant 0 : index
    %78 = vector.load %arg3[%c0_26, %c0_27] : memref<128x128xf32, #tpu.memory_space<vmem>>, vector<128x128xf32>
    %79 = arith.addf %77, %78 : vector<128x128xf32>
    %cst_28 = arith.constant dense<0xFF800000> : vector<128xf32>
    %80 = vector.multi_reduction <maximumf>, %79, %cst_28 [1] : vector<128x128xf32> to vector<128xf32>
    %81 = vector.shape_cast %80 : vector<128xf32> to vector<128x1xf32>
    %82 = vector.broadcast %81 : vector<128x1xf32> to vector<128x128xf32>
    %83 = arith.subf %79, %82 : vector<128x128xf32>
    %84 = math.exp %83 : vector<128x128xf32>
    %cst_29 = arith.constant dense<0.000000e+00> : vector<128xf32>
    %85 = vector.multi_reduction <add>, %84, %cst_29 [1] : vector<128x128xf32> to vector<128xf32>
    %86 = vector.shape_cast %85 : vector<128xf32> to vector<128x1xf32>
    %87 = tpu.reciprocal %86 {approx = true} : vector<128x1xf32> -> vector<128x1xf32>
    %88 = vector.broadcast %87 : vector<128x1xf32> to vector<128x128xf32>
    %89 = arith.mulf %84, %88 : vector<128x128xf32>
    %90 = arith.truncf %89 : vector<128x128xf32> to vector<128x128xbf16>
    %91 = vector.extract_strided_slice %38 {offsets = [0, 16], sizes = [128, 8], strides = [1, 1]} : vector<128x32xbf16> to vector<128x8xbf16>
    %cst_30 = arith.constant dense<0.000000e+00> : vector<128x8xf32>
    %92 = tpu.matmul %90, %91, %cst_30 {dimension_numbers = #tpu.dot_dimension_numbers<[1], [0], [0], [1], [0, 0, 1, 1], [], []>} : vector<128x128xbf16>, vector<128x8xbf16>, vector<128x8xf32> -> vector<128x8xf32>
    %93 = vector.extract_strided_slice %36 {offsets = [0, 24], sizes = [128, 8], strides = [1, 1]} : vector<128x32xbf16> to vector<128x8xbf16>
    %94 = vector.extract_strided_slice %37 {offsets = [0, 24], sizes = [128, 8], strides = [1, 1]} : vector<128x32xbf16> to vector<128x8xbf16>
    %cst_31 = arith.constant dense<0.000000e+00> : vector<128x128xf32>
    %95 = tpu.matmul %93, %94, %cst_31 {dimension_numbers = #tpu.dot_dimension_numbers<[1], [1], [0], [0], [0, 0, 1, 0], [], []>} : vector<128x8xbf16>, vector<128x8xbf16>, vector<128x128xf32> -> vector<128x128xf32>
    %c0_32 = arith.constant 0 : index
    %c0_33 = arith.constant 0 : index
    %96 = vector.load %arg3[%c0_32, %c0_33] : memref<128x128xf32, #tpu.memory_space<vmem>>, vector<128x128xf32>
    %97 = arith.addf %95, %96 : vector<128x128xf32>
    %cst_34 = arith.constant dense<0xFF800000> : vector<128xf32>
    %98 = vector.multi_reduction <maximumf>, %97, %cst_34 [1] : vector<128x128xf32> to vector<128xf32>
    %99 = vector.shape_cast %98 : vector<128xf32> to vector<128x1xf32>
    %100 = vector.broadcast %99 : vector<128x1xf32> to vector<128x128xf32>
    %101 = arith.subf %97, %100 : vector<128x128xf32>
    %102 = math.exp %101 : vector<128x128xf32>
    %cst_35 = arith.constant dense<0.000000e+00> : vector<128xf32>
    %103 = vector.multi_reduction <add>, %102, %cst_35 [1] : vector<128x128xf32> to vector<128xf32>
    %104 = vector.shape_cast %103 : vector<128xf32> to vector<128x1xf32>
    %105 = tpu.reciprocal %104 {approx = true} : vector<128x1xf32> -> vector<128x1xf32>
    %106 = vector.broadcast %105 : vector<128x1xf32> to vector<128x128xf32>
    %107 = arith.mulf %102, %106 : vector<128x128xf32>
    %108 = arith.truncf %107 : vector<128x128xf32> to vector<128x128xbf16>
    %109 = vector.extract_strided_slice %38 {offsets = [0, 24], sizes = [128, 8], strides = [1, 1]} : vector<128x32xbf16> to vector<128x8xbf16>
    %cst_36 = arith.constant dense<0.000000e+00> : vector<128x8xf32>
    %110 = tpu.matmul %108, %109, %cst_36 {dimension_numbers = #tpu.dot_dimension_numbers<[1], [0], [0], [1], [0, 0, 1, 1], [], []>} : vector<128x128xbf16>, vector<128x8xbf16>, vector<128x8xf32> -> vector<128x8xf32>
    %111 = tpu.concatenate %56, %74, %92, %110 in 1 : vector<128x8xf32>, vector<128x8xf32>, vector<128x8xf32>, vector<128x8xf32> -> vector<128x32xf32>
    %112 = vector.extract_strided_slice %0 {offsets = [3, 0], sizes = [1, 32], strides = [1, 1]} : vector<12x128xf32> to vector<1x32xf32>
    %113 = vector.extract_strided_slice %0 {offsets = [4, 0], sizes = [1, 32], strides = [1, 1]} : vector<12x128xf32> to vector<1x32xf32>
    %cst_37 = arith.constant dense<0.000000e+00> : vector<128xf32>
    %114 = vector.multi_reduction <add>, %111, %cst_37 [1] : vector<128x32xf32> to vector<128xf32>
    %115 = vector.shape_cast %114 : vector<128xf32> to vector<128x1xf32>
    %cst_38 = arith.constant 3.200000e+01 : f32
    %116 = vector.broadcast %cst_38 : f32 to vector<128x1xf32>
    %117 = arith.divf %115, %116 : vector<128x1xf32>
    %118 = vector.broadcast %117 : vector<128x1xf32> to vector<128x32xf32>
    %119 = arith.subf %111, %118 : vector<128x32xf32>
    %120 = arith.mulf %119, %119 : vector<128x32xf32>
    %cst_39 = arith.constant dense<0.000000e+00> : vector<128xf32>
    %121 = vector.multi_reduction <add>, %120, %cst_39 [1] : vector<128x32xf32> to vector<128xf32>
    %122 = vector.shape_cast %121 : vector<128xf32> to vector<128x1xf32>
    %cst_40 = arith.constant 3.200000e+01 : f32
    %123 = vector.broadcast %cst_40 : f32 to vector<128x1xf32>
    %124 = arith.divf %122, %123 : vector<128x1xf32>
    %125 = vector.broadcast %117 : vector<128x1xf32> to vector<128x32xf32>
    %126 = arith.subf %111, %125 : vector<128x32xf32>
    %cst_41 = arith.constant 9.99999974E-6 : f32
    %127 = vector.broadcast %cst_41 : f32 to vector<128x1xf32>
    %128 = arith.addf %124, %127 : vector<128x1xf32>
    %129 = math.rsqrt %128 : vector<128x1xf32>
    %130 = vector.broadcast %129 : vector<128x1xf32> to vector<128x32xf32>
    %131 = arith.mulf %126, %130 : vector<128x32xf32>
    %132 = vector.broadcast %112 : vector<1x32xf32> to vector<128x32xf32>
    %133 = arith.mulf %131, %132 : vector<128x32xf32>
    %134 = vector.broadcast %113 : vector<1x32xf32> to vector<128x32xf32>
    %135 = arith.addf %133, %134 : vector<128x32xf32>
    %136 = arith.addf %31, %135 : vector<128x32xf32>
    %137 = vector.extract_strided_slice %0 {offsets = [5, 0], sizes = [1, 32], strides = [1, 1]} : vector<12x128xf32> to vector<1x32xf32>
    %138 = vector.extract_strided_slice %0 {offsets = [6, 0], sizes = [1, 32], strides = [1, 1]} : vector<12x128xf32> to vector<1x32xf32>
    %cst_42 = arith.constant dense<0.000000e+00> : vector<128xf32>
    %139 = vector.multi_reduction <add>, %136, %cst_42 [1] : vector<128x32xf32> to vector<128xf32>
    %140 = vector.shape_cast %139 : vector<128xf32> to vector<128x1xf32>
    %cst_43 = arith.constant 3.200000e+01 : f32
    %141 = vector.broadcast %cst_43 : f32 to vector<128x1xf32>
    %142 = arith.divf %140, %141 : vector<128x1xf32>
    %143 = vector.broadcast %142 : vector<128x1xf32> to vector<128x32xf32>
    %144 = arith.subf %136, %143 : vector<128x32xf32>
    %145 = arith.mulf %144, %144 : vector<128x32xf32>
    %cst_44 = arith.constant dense<0.000000e+00> : vector<128xf32>
    %146 = vector.multi_reduction <add>, %145, %cst_44 [1] : vector<128x32xf32> to vector<128xf32>
    %147 = vector.shape_cast %146 : vector<128xf32> to vector<128x1xf32>
    %cst_45 = arith.constant 3.200000e+01 : f32
    %148 = vector.broadcast %cst_45 : f32 to vector<128x1xf32>
    %149 = arith.divf %147, %148 : vector<128x1xf32>
    %150 = vector.broadcast %142 : vector<128x1xf32> to vector<128x32xf32>
    %151 = arith.subf %136, %150 : vector<128x32xf32>
    %cst_46 = arith.constant 9.99999974E-6 : f32
    %152 = vector.broadcast %cst_46 : f32 to vector<128x1xf32>
    %153 = arith.addf %149, %152 : vector<128x1xf32>
    %154 = math.rsqrt %153 : vector<128x1xf32>
    %155 = vector.broadcast %154 : vector<128x1xf32> to vector<128x32xf32>
    %156 = arith.mulf %151, %155 : vector<128x32xf32>
    %157 = vector.broadcast %137 : vector<1x32xf32> to vector<128x32xf32>
    %158 = arith.mulf %156, %157 : vector<128x32xf32>
    %159 = vector.broadcast %138 : vector<1x32xf32> to vector<128x32xf32>
    %160 = arith.addf %158, %159 : vector<128x32xf32>
    %161 = arith.truncf %160 : vector<128x32xf32> to vector<128x32xbf16>
    %c0_47 = arith.constant 0 : index
    %c0_48 = arith.constant 0 : index
    %162 = vector.load %arg7[%c0_47, %c0_48] : memref<32x64xbf16, #tpu.memory_space<vmem>>, vector<32x64xbf16>
    %cst_49 = arith.constant dense<0.000000e+00> : vector<128x64xf32>
    %163 = tpu.matmul %161, %162, %cst_49 {dimension_numbers = #tpu.dot_dimension_numbers<[1], [0], [0], [1], [0, 0, 1, 1], [], []>} : vector<128x32xbf16>, vector<32x64xbf16>, vector<128x64xf32> -> vector<128x64xf32>
    %164 = vector.extract_strided_slice %0 {offsets = [7, 0], sizes = [1, 64], strides = [1, 1]} : vector<12x128xf32> to vector<1x64xf32>
    %165 = vector.broadcast %164 : vector<1x64xf32> to vector<128x64xf32>
    %166 = arith.addf %163, %165 : vector<128x64xf32>
    %cst_50 = arith.constant 0.000000e+00 : f32
    %167 = vector.broadcast %cst_50 : f32 to vector<128x64xf32>
    %168 = arith.maximumf %166, %167 : vector<128x64xf32>
    %169 = arith.truncf %168 : vector<128x64xf32> to vector<128x64xbf16>
    %c0_51 = arith.constant 0 : index
    %c0_52 = arith.constant 0 : index
    %170 = vector.load %arg8[%c0_51, %c0_52] : memref<64x32xbf16, #tpu.memory_space<vmem>>, vector<64x32xbf16>
    %cst_53 = arith.constant dense<0.000000e+00> : vector<128x32xf32>
    %171 = tpu.matmul %169, %170, %cst_53 {dimension_numbers = #tpu.dot_dimension_numbers<[1], [0], [0], [1], [0, 0, 1, 1], [], []>} : vector<128x64xbf16>, vector<64x32xbf16>, vector<128x32xf32> -> vector<128x32xf32>
    %172 = vector.extract_strided_slice %0 {offsets = [8, 0], sizes = [1, 32], strides = [1, 1]} : vector<12x128xf32> to vector<1x32xf32>
    %173 = vector.broadcast %172 : vector<1x32xf32> to vector<128x32xf32>
    %174 = arith.addf %171, %173 : vector<128x32xf32>
    %175 = arith.addf %160, %174 : vector<128x32xf32>
    %176 = vector.extract_strided_slice %0 {offsets = [9, 0], sizes = [1, 32], strides = [1, 1]} : vector<12x128xf32> to vector<1x32xf32>
    %177 = vector.extract_strided_slice %0 {offsets = [10, 0], sizes = [1, 32], strides = [1, 1]} : vector<12x128xf32> to vector<1x32xf32>
    %cst_54 = arith.constant dense<0.000000e+00> : vector<128xf32>
    %178 = vector.multi_reduction <add>, %175, %cst_54 [1] : vector<128x32xf32> to vector<128xf32>
    %179 = vector.shape_cast %178 : vector<128xf32> to vector<128x1xf32>
    %cst_55 = arith.constant 3.200000e+01 : f32
    %180 = vector.broadcast %cst_55 : f32 to vector<128x1xf32>
    %181 = arith.divf %179, %180 : vector<128x1xf32>
    %182 = vector.broadcast %181 : vector<128x1xf32> to vector<128x32xf32>
    %183 = arith.subf %175, %182 : vector<128x32xf32>
    %184 = arith.mulf %183, %183 : vector<128x32xf32>
    %cst_56 = arith.constant dense<0.000000e+00> : vector<128xf32>
    %185 = vector.multi_reduction <add>, %184, %cst_56 [1] : vector<128x32xf32> to vector<128xf32>
    %186 = vector.shape_cast %185 : vector<128xf32> to vector<128x1xf32>
    %cst_57 = arith.constant 3.200000e+01 : f32
    %187 = vector.broadcast %cst_57 : f32 to vector<128x1xf32>
    %188 = arith.divf %186, %187 : vector<128x1xf32>
    %189 = vector.broadcast %181 : vector<128x1xf32> to vector<128x32xf32>
    %190 = arith.subf %175, %189 : vector<128x32xf32>
    %cst_58 = arith.constant 9.99999974E-6 : f32
    %191 = vector.broadcast %cst_58 : f32 to vector<128x1xf32>
    %192 = arith.addf %188, %191 : vector<128x1xf32>
    %193 = math.rsqrt %192 : vector<128x1xf32>
    %194 = vector.broadcast %193 : vector<128x1xf32> to vector<128x32xf32>
    %195 = arith.mulf %190, %194 : vector<128x32xf32>
    %196 = vector.broadcast %176 : vector<1x32xf32> to vector<128x32xf32>
    %197 = arith.mulf %195, %196 : vector<128x32xf32>
    %198 = vector.broadcast %177 : vector<1x32xf32> to vector<128x32xf32>
    %199 = arith.addf %197, %198 : vector<128x32xf32>
    %c0_59 = arith.constant 0 : index
    %c0_60 = arith.constant 0 : index
    %200 = vector.load %arg4[%c0_59, %c0_60] : memref<16x128xf32, #tpu.memory_space<vmem>>, vector<16x128xf32>
    %cst_61 = arith.constant dense<0.000000e+00> : vector<16x32xf32>
    %201 = tpu.matmul %200, %199, %cst_61 {dimension_numbers = #tpu.dot_dimension_numbers<[1], [0], [0], [1], [0, 0, 1, 1], [], []>} : vector<16x128xf32>, vector<128x32xf32>, vector<16x32xf32> -> vector<16x32xf32>
    %202 = vector.extract_strided_slice %0 {offsets = [11, 0], sizes = [1, 128], strides = [1, 1]} : vector<12x128xf32> to vector<1x128xf32>
    %203 = arith.truncf %201 : vector<16x32xf32> to vector<16x32xbf16>
    %c0_62 = arith.constant 0 : index
    %c0_63 = arith.constant 0 : index
    %204 = vector.load %arg9[%c0_62, %c0_63] : memref<32x128xbf16, #tpu.memory_space<vmem>>, vector<32x128xbf16>
    %cst_64 = arith.constant dense<0.000000e+00> : vector<16x128xf32>
    %205 = tpu.matmul %203, %204, %cst_64 {dimension_numbers = #tpu.dot_dimension_numbers<[1], [0], [0], [1], [0, 0, 1, 1], [], []>} : vector<16x32xbf16>, vector<32x128xbf16>, vector<16x128xf32> -> vector<16x128xf32>
    %206 = vector.broadcast %202 : vector<1x128xf32> to vector<16x128xf32>
    %207 = arith.addf %205, %206 : vector<16x128xf32>
    %c0_65 = arith.constant 0 : index
    %c0_66 = arith.constant 0 : index
    %208 = vector.load %arg10[%c0_65, %c0_66] : memref<16x128xf32, #tpu.memory_space<vmem>>, vector<16x128xf32>
    tpu.vector_store %arg10[%c0_65, %c0_66], %207 {strides = array<i32>} : memref<16x128xf32, #tpu.memory_space<vmem>>, vector<16x128xf32>,
    return
  }
  func.func @transform_0(%arg0: i32) -> (i32, i32) {
    %c0_i32 = arith.constant 0 : i32
    %c0_i32_0 = arith.constant 0 : i32
    return %arg0, %c0_i32 : i32, i32
  }
  func.func @transform_1(%arg0: i32) -> (i32, i32) {
    %c0_i32 = arith.constant 0 : i32
    %c0_i32_0 = arith.constant 0 : i32
    %c0_i32_1 = arith.constant 0 : i32
    return %c0_i32, %c0_i32_0 : i32, i32
  }
  func.func @transform_2(%arg0: i32) -> (i32, i32) {
    %c0_i32 = arith.constant 0 : i32
    %c0_i32_0 = arith.constant 0 : i32
    %c0_i32_1 = arith.constant 0 : i32
    return %c0_i32, %c0_i32_0 : i32, i32
  }
  func.func @transform_3(%arg0: i32) -> (i32, i32) {
    %c0_i32 = arith.constant 0 : i32
    %c0_i32_0 = arith.constant 0 : i32
    %c0_i32_1 = arith.constant 0 : i32
    return %c0_i32, %c0_i32_0 : i32, i32
  }
  func.func @transform_4(%arg0: i32) -> (i32, i32) {
    %c0_i32 = arith.constant 0 : i32
    %c0_i32_0 = arith.constant 0 : i32
    %c0_i32_1 = arith.constant 0 : i32
    return %c0_i32, %c0_i32_0 : i32, i32
  }
  func.func @transform_5(%arg0: i32) -> (i32, i32) {
    %c0_i32 = arith.constant 0 : i32
    %c0_i32_0 = arith.constant 0 : i32
    %c0_i32_1 = arith.constant 0 : i32
    return %c0_i32, %c0_i32_0 : i32, i32
  }
  func.func @transform_6(%arg0: i32) -> (i32, i32) {
    %c0_i32 = arith.constant 0 : i32
    %c0_i32_0 = arith.constant 0 : i32
    %c0_i32_1 = arith.constant 0 : i32
    return %c0_i32, %c0_i32_0 : i32, i32
  }
  func.func @transform_7(%arg0: i32) -> (i32, i32) {
    %c0_i32 = arith.constant 0 : i32
    %c0_i32_0 = arith.constant 0 : i32
    %c0_i32_1 = arith.constant 0 : i32
    return %c0_i32, %c0_i32_0 : i32, i32
  }
  func.func @transform_8(%arg0: i32) -> (i32, i32) {
    %c0_i32 = arith.constant 0 : i32
    %c0_i32_0 = arith.constant 0 : i32
    %c0_i32_1 = arith.constant 0 : i32
    return %c0_i32, %c0_i32_0 : i32, i32
  }
  func.func @transform_9(%arg0: i32) -> (i32, i32) {
    %c0_i32 = arith.constant 0 : i32
    %c0_i32_0 = arith.constant 0 : i32
    return %arg0, %c0_i32 : i32, i32
  }
}

</mosaic_0001>

<llo_original>
// kernel: tpu_custom_call.1
$region0: #{tpu_custom_call.1}
  #allocation0 [shape = 'u32[]', space=smem, size = 0x4, offset = 0x4, fixed_abs, tag = 'smem constant byte address 0x4 - core index']
  #allocation1 [shape = 'u32[72,128]{1,0:T(1,128)}', space=vmem, size = 0x9000, scoped, tag = 'internal scratch']
  %s0 = inlined_call_operand.vmem [shape: f32[256,8], index: 0, kind: input, shape index: {}]
  %s1 = inlined_call_operand.vmem [shape: f32[12,128], index: 1, kind: input, shape index: {}]
  %s2 = inlined_call_operand.vmem [shape: f32[128,128], index: 2, kind: input, shape index: {}]
  %s3 = inlined_call_operand.vmem [shape: f32[16,128], index: 3, kind: input, shape index: {}]
  %s4 = inlined_call_operand.vmem [shape: bf16[8,32], index: 4, kind: input, shape index: {}]
  %s5 = inlined_call_operand.vmem [shape: bf16[32,128], index: 5, kind: input, shape index: {}]
  %s6 = inlined_call_operand.vmem [shape: bf16[32,64], index: 6, kind: input, shape index: {}]
  %s7 = inlined_call_operand.vmem [shape: bf16[64,32], index: 7, kind: input, shape index: {}]
  %s8 = inlined_call_operand.vmem [shape: bf16[32,128], index: 8, kind: input, shape index: {}]
  %s9 = inlined_call_operand.hbm [shape: f32[32,128], index: 9, kind: output, shape index: {}]
  %s10 = sld [smem:[#allocation0]]
  $region69: #{tpu_custom_call.1} parent=0
    _
  %s12 = ssub.s32 1, %s10
  %s13 = scalar_select 0, %s12, %s10
  $region1: #{tpu_custom_call.1} parent=0
    #allocation2 [shape = 'u8[16384]{0}', space=vmem, size = 0x4000, scoped, tag = 'output window, operand 0']
    #allocation3 [shape = 's32[2]{0}', space=sflag, size = 0x8, scoped, tag = 'scoped memory for tpu_custom_call.1']
    %14 = vsyncpa [#allocation3], 0
    %s15 = scalar_lea.sflag [#allocation3], 1
    %16 = vsyncpa %s15, 0
    loop: start=0, step=1, limit=4
    $region2: #{tpu_custom_call.1} parent=1 // loop_pre_header
      _
    $region3: #{tpu_custom_call.1} parent=1 // loop_header
      %s18 = sphi 0, %s22
      %p19 = scmp.ge.s32.totalorder %s18, 4
      %s28 = sphi 0, %s30
      %s31 = sphi 0, %s28
      %s32 = sphi 0, %s31
      %s48 = sphi 0, %s32
      %s52 = sphi 0, %s52
      %s54 = sphi 0, %s52
      %s55 = sphi 0, %s54
      %s69 = sphi 0, %s55
      %s73 = sphi 0, %s73
      %s75 = sphi 0, %s73
      %s76 = sphi 0, %s75
      %s90 = sphi 0, %s76
      %s94 = sphi 0, %s94
      %s96 = sphi 0, %s94
      %s97 = sphi 0, %s96
      %s111 = sphi 0, %s97
      %s115 = sphi 0, %s115
      %s117 = sphi 0, %s115
      %s118 = sphi 0, %s117
      %s132 = sphi 0, %s118
      %s136 = sphi 0, %s136
      %s138 = sphi 0, %s136
      %s139 = sphi 0, %s138
      %s153 = sphi 0, %s139
      %s157 = sphi 0, %s157
      %s159 = sphi 0, %s157
      %s160 = sphi 0, %s159
      %s174 = sphi 0, %s160
      %s178 = sphi 0, %s178
      %s180 = sphi 0, %s178
      %s181 = sphi 0, %s180
      %s195 = sphi 0, %s181
      %s199 = sphi 0, %s199
      %s201 = sphi 0, %s199
      %s202 = sphi 0, %s201
      %s216 = sphi 0, %s202
      %s222 = sphi 0, %s224
      %s225 = sphi 0, %s222
      %s226 = sphi 0, %s225
      %s242 = sphi 0, %s226
    $region4: #{tpu_custom_call.1} parent=1 // loop_header_branch
      %21 = sbr.rel (%p19) target = $region8
    $region5: #{tpu_custom_call.1} parent=1 // loop_body
      %s23 = ssub.s32 %s18, 1
      %s24 = ssub.s32 %s18, 2
      %s25 = sadd.s32 %s18, 1
      %s26 = ssub.s32 %s18, %s25
      %p27 = scmp.eq.s32.totalorder %s26, 0
      %s29 = sadd.s32 %s28, 1
      %s30 = scalar_select %p27, %s28, %s29
      %p33 = pneg %p27
      %p34 = scmp.eq.s32.totalorder %s18, 1
      %p35 = por %p33, %p34
      %p36 = scmp.ne.s32.totalorder %s28, %s31
      %p37 = scmp.eq.s32.totalorder %s18, 0
      %p38 = por %p36, %p37
      %p39 = scmp.ne.s32.totalorder %s28, %s31
      %p40 = scmp.eq.s32.totalorder %s23, 1
      %p41 = por %p39, %p40
      %p42 = scmp.ne.s32.totalorder %s31, %s32
      %p43 = scmp.eq.s32.totalorder %s23, 0
      %p44 = por %p42, %p43
      %p45 = scmp.ne.s32.totalorder %s31, %s32
      %p46 = scmp.eq.s32.totalorder %s24, 1
      %p47 = por %p45, %p46
      %p49 = scmp.ne.s32.totalorder %s32, %s48
      %p50 = scmp.eq.s32.totalorder %s24, 0
      %p51 = por %p49, %p50
      %s53 = sadd.s32 %s52, 1
      %p56 = scmp.eq.s32.totalorder %s18, 1
      %p57 = scmp.ne.s32.totalorder %s52, %s54
      %p58 = scmp.eq.s32.totalorder %s18, 0
      %p59 = por %p57, %p58
      %p60 = scmp.ne.s32.totalorder %s52, %s54
      %p61 = scmp.eq.s32.totalorder %s23, 1
      %p62 = por %p60, %p61
      %p63 = scmp.ne.s32.totalorder %s54, %s55
      %p64 = scmp.eq.s32.totalorder %s23, 0
      %p65 = por %p63, %p64
      %p66 = scmp.ne.s32.totalorder %s54, %s55
      %p67 = scmp.eq.s32.totalorder %s24, 1
      %p68 = por %p66, %p67
      %p70 = scmp.ne.s32.totalorder %s55, %s69
      %p71 = scmp.eq.s32.totalorder %s24, 0
      %p72 = por %p70, %p71
      %s74 = sadd.s32 %s73, 1
      %p77 = scmp.eq.s32.totalorder %s18, 1
      %p78 = scmp.ne.s32.totalorder %s73, %s75
      %p79 = scmp.eq.s32.totalorder %s18, 0
      %p80 = por %p78, %p79
      %p81 = scmp.ne.s32.totalorder %s73, %s75
      %p82 = scmp.eq.s32.totalorder %s23, 1
      %p83 = por %p81, %p82
      %p84 = scmp.ne.s32.totalorder %s75, %s76
      %p85 = scmp.eq.s32.totalorder %s23, 0
      %p86 = por %p84, %p85
      %p87 = scmp.ne.s32.totalorder %s75, %s76
      %p88 = scmp.eq.s32.totalorder %s24, 1
      %p89 = por %p87, %p88
      %p91 = scmp.ne.s32.totalorder %s76, %s90
      %p92 = scmp.eq.s32.totalorder %s24, 0
      %p93 = por %p91, %p92
      %s95 = sadd.s32 %s94, 1
      %p98 = scmp.eq.s32.totalorder %s18, 1
      %p99 = scmp.ne.s32.totalorder %s94, %s96
      %p100 = scmp.eq.s32.totalorder %s18, 0
      %p101 = por %p99, %p100
      %p102 = scmp.ne.s32.totalorder %s94, %s96
      %p103 = scmp.eq.s32.totalorder %s23, 1
      %p104 = por %p102, %p103
      %p105 = scmp.ne.s32.totalorder %s96, %s97
      %p106 = scmp.eq.s32.totalorder %s23, 0
      %p107 = por %p105, %p106
      %p108 = scmp.ne.s32.totalorder %s96, %s97
      %p109 = scmp.eq.s32.totalorder %s24, 1
      %p110 = por %p108, %p109
      %p112 = scmp.ne.s32.totalorder %s97, %s111
      %p113 = scmp.eq.s32.totalorder %s24, 0
      %p114 = por %p112, %p113
      %s116 = sadd.s32 %s115, 1
      %p119 = scmp.eq.s32.totalorder %s18, 1
      %p120 = scmp.ne.s32.totalorder %s115, %s117
      %p121 = scmp.eq.s32.totalorder %s18, 0
      %p122 = por %p120, %p121
      %p123 = scmp.ne.s32.totalorder %s115, %s117
      %p124 = scmp.eq.s32.totalorder %s23, 1
      %p125 = por %p123, %p124
      %p126 = scmp.ne.s32.totalorder %s117, %s118
      %p127 = scmp.eq.s32.totalorder %s23, 0
      %p128 = por %p126, %p127
      %p129 = scmp.ne.s32.totalorder %s117, %s118
      %p130 = scmp.eq.s32.totalorder %s24, 1
      %p131 = por %p129, %p130
      %p133 = scmp.ne.s32.totalorder %s118, %s132
      %p134 = scmp.eq.s32.totalorder %s24, 0
      %p135 = por %p133, %p134
      %s137 = sadd.s32 %s136, 1
      %p140 = scmp.eq.s32.totalorder %s18, 1
      %p141 = scmp.ne.s32.totalorder %s136, %s138
      %p142 = scmp.eq.s32.totalorder %s18, 0
      %p143 = por %p141, %p142
      %p144 = scmp.ne.s32.totalorder %s136, %s138
      %p145 = scmp.eq.s32.totalorder %s23, 1
      %p146 = por %p144, %p145
      %p147 = scmp.ne.s32.totalorder %s138, %s139
      %p148 = scmp.eq.s32.totalorder %s23, 0
      %p149 = por %p147, %p148
      %p150 = scmp.ne.s32.totalorder %s138, %s139
      %p151 = scmp.eq.s32.totalorder %s24, 1
      %p152 = por %p150, %p151
      %p154 = scmp.ne.s32.totalorder %s139, %s153
      %p155 = scmp.eq.s32.totalorder %s24, 0
      %p156 = por %p154, %p155
      %s158 = sadd.s32 %s157, 1
      %p161 = scmp.eq.s32.totalorder %s18, 1
      %p162 = scmp.ne.s32.totalorder %s157, %s159
      %p163 = scmp.eq.s32.totalorder %s18, 0
      %p164 = por %p162, %p163
      %p165 = scmp.ne.s32.totalorder %s157, %s159
      %p166 = scmp.eq.s32.totalorder %s23, 1
      %p167 = por %p165, %p166
      %p168 = scmp.ne.s32.totalorder %s159, %s160
      %p169 = scmp.eq.s32.totalorder %s23, 0
      %p170 = por %p168, %p169
      %p171 = scmp.ne.s32.totalorder %s159, %s160
      %p172 = scmp.eq.s32.totalorder %s24, 1
      %p173 = por %p171, %p172
      %p175 = scmp.ne.s32.totalorder %s160, %s174
      %p176 = scmp.eq.s32.totalorder %s24, 0
      %p177 = por %p175, %p176
      %s179 = sadd.s32 %s178, 1
      %p182 = scmp.eq.s32.totalorder %s18, 1
      %p183 = scmp.ne.s32.totalorder %s178, %s180
      %p184 = scmp.eq.s32.totalorder %s18, 0
      %p185 = por %p183, %p184
      %p186 = scmp.ne.s32.totalorder %s178, %s180
      %p187 = scmp.eq.s32.totalorder %s23, 1
      %p188 = por %p186, %p187
      %p189 = scmp.ne.s32.totalorder %s180, %s181
      %p190 = scmp.eq.s32.totalorder %s23, 0
      %p191 = por %p189, %p190
      %p192 = scmp.ne.s32.totalorder %s180, %s181
      %p193 = scmp.eq.s32.totalorder %s24, 1
      %p194 = por %p192, %p193
      %p196 = scmp.ne.s32.totalorder %s181, %s195
      %p197 = scmp.eq.s32.totalorder %s24, 0
      %p198 = por %p196, %p197
      %s200 = sadd.s32 %s199, 1
      %p203 = scmp.eq.s32.totalorder %s18, 1
      %p204 = scmp.ne.s32.totalorder %s199, %s201
      %p205 = scmp.eq.s32.totalorder %s18, 0
      %p206 = por %p204, %p205
      %p207 = scmp.ne.s32.totalorder %s199, %s201
      %p208 = scmp.eq.s32.totalorder %s23, 1
      %p209 = por %p207, %p208
      %p210 = scmp.ne.s32.totalorder %s201, %s202
      %p211 = scmp.eq.s32.totalorder %s23, 0
      %p212 = por %p210, %p211
      %p213 = scmp.ne.s32.totalorder %s201, %s202
      %p214 = scmp.eq.s32.totalorder %s24, 1
      %p215 = por %p213, %p214
      %p217 = scmp.ne.s32.totalorder %s202, %s216
      %p218 = scmp.eq.s32.totalorder %s24, 0
      %p219 = por %p217, %p218
      %s220 = ssub.s32 %s18, %s25
      %p221 = scmp.eq.s32.totalorder %s220, 0
      %s223 = sadd.s32 %s222, 1
      %s224 = scalar_select %p221, %s222, %s223
      %p227 = pneg %p221
      %p228 = scmp.eq.s32.totalorder %s18, 1
      %p229 = por %p227, %p228
      %p230 = scmp.ne.s32.totalorder %s222, %s225
      %p231 = scmp.eq.s32.totalorder %s18, 0
      %p232 = por %p230, %p231
      %p233 = scmp.ne.s32.totalorder %s222, %s225
      %p234 = scmp.eq.s32.totalorder %s23, 1
      %p235 = por %p233, %p234
      %p236 = scmp.ne.s32.totalorder %s225, %s226
      %p237 = scmp.eq.s32.totalorder %s23, 0
      %p238 = por %p236, %p237
      %p239 = scmp.ne.s32.totalorder %s225, %s226
      %p240 = scmp.eq.s32.totalorder %s24, 1
      %p241 = por %p239, %p240
      %p243 = scmp.ne.s32.totalorder %s226, %s242
      %p244 = scmp.eq.s32.totalorder %s24, 0
      %p245 = por %p243, %p244
      %p246 = scmp.le.s32.totalorder 1, %s18
      %p247 = scmp.lt.s32.totalorder %s18, 3
      %p248 = pnand %p246, %p247
      %p249 = pneg %p248
      // Predicated region
      $region9: #{tpu_custom_call.1} parent=5 // pred_check
        _
      $region10: #{tpu_custom_call.1} parent=5 // pred_check_branch
        %251 = sbr.rel (%p248) target = $region12
      $region11: #{tpu_custom_call.1} parent=5 // pred_region
        %s252 = ssub.s32 %s18, 1
        // Predicated region
        $region13: #{tpu_custom_call.1} parent=11 // pred_check
          %p253 = pneg %p65
        $region14: #{tpu_custom_call.1} parent=11 // pred_check_branch
          %255 = sbr.rel (%p253) target = $region16
        $region15: #{tpu_custom_call.1} parent=11 // pred_region
          _
        $region16: #{tpu_custom_call.1} parent=11 // pred_fallthru
          _
        // Predicated region
        $region17: #{tpu_custom_call.1} parent=11 // pred_check
          %p256 = pneg %p86
        $region18: #{tpu_custom_call.1} parent=11 // pred_check_branch
          %258 = sbr.rel (%p256) target = $region20
        $region19: #{tpu_custom_call.1} parent=11 // pred_region
          _
        $region20: #{tpu_custom_call.1} parent=11 // pred_fallthru
          _
        // Predicated region
        $region21: #{tpu_custom_call.1} parent=11 // pred_check
          %p259 = pneg %p107
        $region22: #{tpu_custom_call.1} parent=11 // pred_check_branch
          %261 = sbr.rel (%p259) target = $region24
        $region23: #{tpu_custom_call.1} parent=11 // pred_region
          _
        $region24: #{tpu_custom_call.1} parent=11 // pred_fallthru
          _
        // Predicated region
        $region25: #{tpu_custom_call.1} parent=11 // pred_check
          %p262 = pneg %p128
        $region26: #{tpu_custom_call.1} parent=11 // pred_check_branch
          %264 = sbr.rel (%p262) target = $region28
        $region27: #{tpu_custom_call.1} parent=11 // pred_region
          _
        $region28: #{tpu_custom_call.1} parent=11 // pred_fallthru
          _
        // Predicated region
        $region29: #{tpu_custom_call.1} parent=11 // pred_check
          %p265 = pneg %p149
        $region30: #{tpu_custom_call.1} parent=11 // pred_check_branch
          %267 = sbr.rel (%p265) target = $region32
        $region31: #{tpu_custom_call.1} parent=11 // pred_region
          _
        $region32: #{tpu_custom_call.1} parent=11 // pred_fallthru
          _
        // Predicated region
        $region33: #{tpu_custom_call.1} parent=11 // pred_check
          %p268 = pneg %p170
        $region34: #{tpu_custom_call.1} parent=11 // pred_check_branch
          %270 = sbr.rel (%p268) target = $region36
        $region35: #{tpu_custom_call.1} parent=11 // pred_region
          _
        $region36: #{tpu_custom_call.1} parent=11 // pred_fallthru
          _
        // Predicated region
        $region37: #{tpu_custom_call.1} parent=11 // pred_check
          %p271 = pneg %p191
        $region38: #{tpu_custom_call.1} parent=11 // pred_check_branch
          %273 = sbr.rel (%p271) target = $region40
        $region39: #{tpu_custom_call.1} parent=11 // pred_region
          _
        $region40: #{tpu_custom_call.1} parent=11 // pred_fallthru
          _
        // Predicated region
        $region41: #{tpu_custom_call.1} parent=11 // pred_check
          %p274 = pneg %p212
        $region42: #{tpu_custom_call.1} parent=11 // pred_check_branch
          %276 = sbr.rel (%p274) target = $region44
        $region43: #{tpu_custom_call.1} parent=11 // pred_region
          _
        $region44: #{tpu_custom_call.1} parent=11 // pred_fallthru
          _
      $region12: #{tpu_custom_call.1} parent=5 // pred_fallthru
        _
      %p277 = scmp.lt.s32.totalorder %s18, 2
      // Predicated region
      $region45: #{tpu_custom_call.1} parent=5 // pred_check
        %p278 = pneg %p277
      $region46: #{tpu_custom_call.1} parent=5 // pred_check_branch
        %280 = sbr.rel (%p278) target = $region48
      $region47: #{tpu_custom_call.1} parent=5 // pred_region
        // Predicated region
        $region49: #{tpu_custom_call.1} parent=47 // pred_check
          %p281 = pneg %p38
        $region50: #{tpu_custom_call.1} parent=47 // pred_check_branch
          %283 = sbr.rel (%p281) target = $region52
        $region51: #{tpu_custom_call.1} parent=47 // pred_region
          %s284 = smul.u32 16, %s18
          %p285 = scmp.lt.s32.totalorder %s284, 31
          %s286 = scalar_select %p285, %s284, 31
          %s287 = smul.addr %s286, 8
          %s288 = scalar_lea.vmem %s0, %s287
          %s289 = smul.u32 16, %s18
        $region52: #{tpu_custom_call.1} parent=47 // pred_fallthru
          _
      $region48: #{tpu_custom_call.1} parent=5 // pred_fallthru
        _
      %p290 = scmp.le.s32.totalorder 1, %s18
      %p291 = scmp.lt.s32.totalorder %s18, 3
      %p292 = pnand %p290, %p291
      %p293 = pneg %p292
      // Predicated region
      $region53: #{tpu_custom_call.1} parent=5 // pred_check
        _
      $region54: #{tpu_custom_call.1} parent=5 // pred_check_branch
        %295 = sbr.rel (%p292) target = $region56
      $region55: #{tpu_custom_call.1} parent=5 // pred_region
        %s296 = ssub.s32 %s18, 1
        %s297 = smul.u32 16, %s23
        %p298 = scmp.lt.s32.totalorder %s297, 31
        %s299 = scalar_select %p298, %s297, 31
        %s300 = smul.addr %s299, 8
        %s301 = scalar_lea.vmem %s0, %s300
        %p302 = pneg %p44
        %p303 = pneg %p41
        %p304 = pneg %p65
        %p305 = pneg %p62
        %p306 = pneg %p86
        %p307 = pneg %p83
        %p308 = pneg %p107
        %p309 = pneg %p104
        %p310 = pneg %p128
        %p311 = pneg %p125
        %p312 = pneg %p149
        %p313 = pneg %p146
        %p314 = pneg %p170
        %p315 = pneg %p167
        %p316 = pneg %p191
        %p317 = pneg %p188
        %p318 = pneg %p212
        %p319 = pneg %p209
        %p320 = pneg %p238
        %p321 = pneg %p235
        %s322 = sand.u32 %s225, 1
        %s323 = scalar_lea.sflag [#allocation3], %s322
        %s324 = sand.u32 %s225, 1
        %s325 = smul.addr %s324, 16
        %s326 = scalar_lea.vmem [#allocation2], %s325
        %s327 = smul.u32 16, %s23
        %p328 = scmp.lt.s32.totalorder %s327, 31
        %s329 = scalar_select %p328, %s327, 31
        %s330 = smul.addr %s329, 8
        %s331 = scalar_lea.vmem %s0, %s330
        %s332 = smul.u32 16, %s23
        %s333 = smul.u32 2, %s23
        %v335 = vld [vmem:[%s1] sm:$0xff]
        %v336 = vld [vmem:[%s1 + $0x8] sm:$0xf]
        %v337 = vld [vmem:[%s331] sm:$0xff]
        %v338 = vld [vmem:[%s331 + $0x8] sm:$0xff]
        %v339 = vld [vmem:[%s331 + $0x10] sm:$0xff]
        %v340 = vld [vmem:[%s331 + $0x18] sm:$0xff]
        %v341 = vld [vmem:[%s331 + $0x20] sm:$0xff]
        %v342 = vld [vmem:[%s331 + $0x28] sm:$0xff]
        %v343 = vld [vmem:[%s331 + $0x30] sm:$0xff]
        %v344 = vld [vmem:[%s331 + $0x38] sm:$0xff]
        %v345 = vld [vmem:[%s331 + $0x40] sm:$0xff]
        %v346 = vld [vmem:[%s331 + $0x48] sm:$0xff]
        %v347 = vld [vmem:[%s331 + $0x50] sm:$0xff]
        %v348 = vld [vmem:[%s331 + $0x58] sm:$0xff]
        %v349 = vld [vmem:[%s331 + $0x60] sm:$0xff]
        %v350 = vld [vmem:[%s331 + $0x68] sm:$0xff]
        %v351 = vld [vmem:[%s331 + $0x70] sm:$0xff]
        %v352 = vld [vmem:[%s331 + $0x78] sm:$0xff]
        %v353 = vpack.c.bf16 %v338, %v337
        %v354 = vpack.c.bf16 %v340, %v339
        %v355 = vpack.c.bf16 %v342, %v341
        %v356 = vpack.c.bf16 %v344, %v343
        %v357 = vpack.c.bf16 %v346, %v345
        %v358 = vpack.c.bf16 %v348, %v347
        %v359 = vpack.c.bf16 %v350, %v349
        %v360 = vpack.c.bf16 %v352, %v351
        %v361 = vld [vmem:[%s4] sm:$0xf]
        %v362 = vperm.slane %v335, 0
        %vm363 = vcmask 64512
        %v365 = vsel %vm363, %v353, 0
        %v368 = vsel %vm363, %v354, 0
        %v371 = vsel %vm363, %v355, 0
        %v374 = vsel %vm363, %v356, 0
        %v377 = vsel %vm363, %v357, 0
        %v380 = vsel %vm363, %v358, 0
        %v383 = vsel %vm363, %v359, 0
        %v386 = vsel %vm363, %v360, 0
        %vm388 = vcmask 1043456
        %v390 = vsel %vm388, %v361, 0
        %392 = vmatpush.bf16.msra.mxu0 0
        %393 = vmatpush.bf16.msra.mxu0 0
        %394 = vmatpush.bf16.msra.mxu0 0
        %395 = vmatpush.bf16.msra.mxu0 0
        %396 = vmatpush.bf16.msra.mxu0 0
        %397 = vmatpush.bf16.msra.mxu0 0
        %398 = vmatpush.bf16.msra.mxu0 0
        %399 = vmatpush.bf16.msra.mxu0 %v390
        %400 = vmatmul.bf16.gmra.mxu0 %v365
        %v401 = vpop.f32.mrf.mxu0
        %v402 = vadd.f32 %v362, %v401
        %v403 = vpop.f32.mrf.mxu0
        %v404 = vadd.f32 %v362, %v403
        %405 = vmatmul.bf16.gmra.mxu0 %v368
        %v406 = vpop.f32.mrf.mxu0
        %v407 = vadd.f32 %v362, %v406
        %v408 = vpop.f32.mrf.mxu0
        %v409 = vadd.f32 %v362, %v408
        %410 = vmatmul.bf16.gmra.mxu0 %v371
        %v411 = vpop.f32.mrf.mxu0
        %v412 = vadd.f32 %v362, %v411
        %v413 = vpop.f32.mrf.mxu0
        %v414 = vadd.f32 %v362, %v413
        %415 = vmatmul.bf16.gmra.mxu0 %v374
        %v416 = vpop.f32.mrf.mxu0
        %v417 = vadd.f32 %v362, %v416
        %v418 = vpop.f32.mrf.mxu0
        %v419 = vadd.f32 %v362, %v418
        %420 = vmatmul.bf16.gmra.mxu0 %v377
        %v421 = vpop.f32.mrf.mxu0
        %v422 = vadd.f32 %v362, %v421
        %v423 = vpop.f32.mrf.mxu0
        %v424 = vadd.f32 %v362, %v423
        %425 = vmatmul.bf16.gmra.mxu0 %v380
        %v426 = vpop.f32.mrf.mxu0
        %v427 = vadd.f32 %v362, %v426
        %v428 = vpop.f32.mrf.mxu0
        %v429 = vadd.f32 %v362, %v428
        %430 = vmatmul.bf16.gmra.mxu0 %v383
        %v431 = vpop.f32.mrf.mxu0
        %v432 = vadd.f32 %v362, %v431
        %v433 = vpop.f32.mrf.mxu0
        %v434 = vadd.f32 %v362, %v433
        %435 = vmatmul.bf16.gmra.mxu0 %v386
        %v436 = vpop.f32.mrf.mxu0
        %v437 = vadd.f32 %v362, %v436
        %v438 = vpop.f32.mrf.mxu0
        %v439 = vadd.f32 %v362, %v438
        %440 = vdwg.mxu0
        %vm441 = vcmask 261120
        %v442 = vsel %vm441, %v402, 0.0
        %443 = vadd.xlane.f32.xlu0 %v442
        %v444 = vpop.xlane.xlu0 %443
        %v445 = vsel %vm441, %v404, 0.0
        %446 = vadd.xlane.f32.xlu0 %v445
        %v447 = vpop.xlane.xlu0 %446
        %v448 = vsel %vm441, %v407, 0.0
        %449 = vadd.xlane.f32.xlu0 %v448
        %v450 = vpop.xlane.xlu0 %449
        %v451 = vsel %vm441, %v409, 0.0
        %452 = vadd.xlane.f32.xlu0 %v451
        %v453 = vpop.xlane.xlu0 %452
        %v454 = vsel %vm441, %v412, 0.0
        %455 = vadd.xlane.f32.xlu0 %v454
        %v456 = vpop.xlane.xlu0 %455
        %v457 = vsel %vm441, %v414, 0.0
        %458 = vadd.xlane.f32.xlu0 %v457
        %v459 = vpop.xlane.xlu0 %458
        %v460 = vsel %vm441, %v417, 0.0
        %461 = vadd.xlane.f32.xlu0 %v460
        %v462 = vpop.xlane.xlu0 %461
        %v463 = vsel %vm441, %v419, 0.0
        %464 = vadd.xlane.f32.xlu0 %v463
        %v465 = vpop.xlane.xlu0 %464
        %v466 = vsel %vm441, %v422, 0.0
        %467 = vadd.xlane.f32.xlu0 %v466
        %v468 = vpop.xlane.xlu0 %467
        %v469 = vsel %vm441, %v424, 0.0
        %470 = vadd.xlane.f32.xlu0 %v469
        %v471 = vpop.xlane.xlu0 %470
        %v472 = vsel %vm441, %v427, 0.0
        %473 = vadd.xlane.f32.xlu0 %v472
        %v474 = vpop.xlane.xlu0 %473
        %v475 = vsel %vm441, %v429, 0.0
        %476 = vadd.xlane.f32.xlu0 %v475
        %v477 = vpop.xlane.xlu0 %476
        %v478 = vsel %vm441, %v432, 0.0
        %479 = vadd.xlane.f32.xlu0 %v478
        %v480 = vpop.xlane.xlu0 %479
        %v481 = vsel %vm441, %v434, 0.0
        %482 = vadd.xlane.f32.xlu0 %v481
        %v483 = vpop.xlane.xlu0 %482
        %v484 = vsel %vm441, %v437, 0.0
        %485 = vadd.xlane.f32.xlu0 %v484
        %v486 = vpop.xlane.xlu0 %485
        %v487 = vsel %vm441, %v439, 0.0
        %488 = vadd.xlane.f32.xlu0 %v487
        %v489 = vpop.xlane.xlu0 %488
        %v490 = vrcp.pop 32.0
        %v491 = vmul.f32 32.0, %v490
        %v492 = vsub.f32 1.0, %v491
        %v493 = vmul.f32 %v490, %v492
        %v494 = vadd.f32 %v490, %v493
        %vm495 = vweird.f32 %v490
        %v496 = vsel %vm495, %v490, %v494
        %v497 = vmul.f32 %v444, %v496
        %v498 = vmul.f32 %v447, %v496
        %v499 = vmul.f32 %v450, %v496
        %v500 = vmul.f32 %v453, %v496
        %v501 = vmul.f32 %v456, %v496
        %v502 = vmul.f32 %v459, %v496
        %v503 = vmul.f32 %v462, %v496
        %v504 = vmul.f32 %v465, %v496
        %v505 = vmul.f32 %v468, %v496
        %v506 = vmul.f32 %v471, %v496
        %v507 = vmul.f32 %v474, %v496
        %v508 = vmul.f32 %v477, %v496
        %v509 = vmul.f32 %v480, %v496
        %v510 = vmul.f32 %v483, %v496
        %v511 = vmul.f32 %v486, %v496
        %v512 = vmul.f32 %v489, %v496
        %v513 = vsub.f32 %v402, %v497
        %v514 = vsub.f32 %v404, %v498
        %v515 = vsub.f32 %v407, %v499
        %v516 = vsub.f32 %v409, %v500
        %v517 = vsub.f32 %v412, %v501
        %v518 = vsub.f32 %v414, %v502
        %v519 = vsub.f32 %v417, %v503
        %v520 = vsub.f32 %v419, %v504
        %v521 = vsub.f32 %v422, %v505
        %v522 = vsub.f32 %v424, %v506
        %v523 = vsub.f32 %v427, %v507
        %v524 = vsub.f32 %v429, %v508
        %v525 = vsub.f32 %v432, %v509
        %v526 = vsub.f32 %v434, %v510
        %v527 = vsub.f32 %v437, %v511
        %v528 = vsub.f32 %v439, %v512
        %v529 = vmul.f32 %v513, %v513
        %v530 = vmul.f32 %v514, %v514
        %v531 = vmul.f32 %v515, %v515
        %v532 = vmul.f32 %v516, %v516
        %v533 = vmul.f32 %v517, %v517
        %v534 = vmul.f32 %v518, %v518
        %v535 = vmul.f32 %v519, %v519
        %v536 = vmul.f32 %v520, %v520
        %v537 = vmul.f32 %v521, %v521
        %v538 = vmul.f32 %v522, %v522
        %v539 = vmul.f32 %v523, %v523
        %v540 = vmul.f32 %v524, %v524
        %v541 = vmul.f32 %v525, %v525
        %v542 = vmul.f32 %v526, %v526
        %v543 = vmul.f32 %v527, %v527
        %v544 = vmul.f32 %v528, %v528
        %v545 = vsel %vm441, %v529, 0.0
        %546 = vadd.xlane.f32.xlu0 %v545
        %v547 = vpop.xlane.xlu0 %546
        %v548 = vsel %vm441, %v530, 0.0
        %549 = vadd.xlane.f32.xlu0 %v548
        %v550 = vpop.xlane.xlu0 %549
        %v551 = vsel %vm441, %v531, 0.0
        %552 = vadd.xlane.f32.xlu0 %v551
        %v553 = vpop.xlane.xlu0 %552
        %v554 = vsel %vm441, %v532, 0.0
        %555 = vadd.xlane.f32.xlu0 %v554
        %v556 = vpop.xlane.xlu0 %555
        %v557 = vsel %vm441, %v533, 0.0
        %558 = vadd.xlane.f32.xlu0 %v557
        %v559 = vpop.xlane.xlu0 %558
        %v560 = vsel %vm441, %v534, 0.0
        %561 = vadd.xlane.f32.xlu0 %v560
        %v562 = vpop.xlane.xlu0 %561
        %v563 = vsel %vm441, %v535, 0.0
        %564 = vadd.xlane.f32.xlu0 %v563
        %v565 = vpop.xlane.xlu0 %564
        %v566 = vsel %vm441, %v536, 0.0
        %567 = vadd.xlane.f32.xlu0 %v566
        %v568 = vpop.xlane.xlu0 %567
        %v569 = vsel %vm441, %v537, 0.0
        %570 = vadd.xlane.f32.xlu0 %v569
        %v571 = vpop.xlane.xlu0 %570
        %v572 = vsel %vm441, %v538, 0.0
        %573 = vadd.xlane.f32.xlu0 %v572
        %v574 = vpop.xlane.xlu0 %573
        %v575 = vsel %vm441, %v539, 0.0
        %576 = vadd.xlane.f32.xlu0 %v575
        %v577 = vpop.xlane.xlu0 %576
        %v578 = vsel %vm441, %v540, 0.0
        %579 = vadd.xlane.f32.xlu0 %v578
        %v580 = vpop.xlane.xlu0 %579
        %v581 = vsel %vm441, %v541, 0.0
        %582 = vadd.xlane.f32.xlu0 %v581
        %v583 = vpop.xlane.xlu0 %582
        %v584 = vsel %vm441, %v542, 0.0
        %585 = vadd.xlane.f32.xlu0 %v584
        %v586 = vpop.xlane.xlu0 %585
        %v587 = vsel %vm441, %v543, 0.0
        %588 = vadd.xlane.f32.xlu0 %v587
        %v589 = vpop.xlane.xlu0 %588
        %v590 = vsel %vm441, %v544, 0.0
        %591 = vadd.xlane.f32.xlu0 %v590
        %v592 = vpop.xlane.xlu0 %591
        %v593 = vmul.f32 %v547, %v496
        %v594 = vmul.f32 %v550, %v496
        %v595 = vmul.f32 %v553, %v496
        %v596 = vmul.f32 %v556, %v496
        %v597 = vmul.f32 %v559, %v496
        %v598 = vmul.f32 %v562, %v496
        %v599 = vmul.f32 %v565, %v496
        %v600 = vmul.f32 %v568, %v496
        %v601 = vmul.f32 %v571, %v496
        %v602 = vmul.f32 %v574, %v496
        %v603 = vmul.f32 %v577, %v496
        %v604 = vmul.f32 %v580, %v496
        %v605 = vmul.f32 %v583, %v496
        %v606 = vmul.f32 %v586, %v496
        %v607 = vmul.f32 %v589, %v496
        %v608 = vmul.f32 %v592, %v496
        %v609 = vadd.f32 %v593, 1e-05
        %v610 = vadd.f32 %v594, 1e-05
        %v611 = vadd.f32 %v595, 1e-05
        %v612 = vadd.f32 %v596, 1e-05
        %v613 = vadd.f32 %v597, 1e-05
        %v614 = vadd.f32 %v598, 1e-05
        %v615 = vadd.f32 %v599, 1e-05
        %v616 = vadd.f32 %v600, 1e-05
        %v617 = vadd.f32 %v601, 1e-05
        %v618 = vadd.f32 %v602, 1e-05
        %v619 = vadd.f32 %v603, 1e-05
        %v620 = vadd.f32 %v604, 1e-05
        %v621 = vadd.f32 %v605, 1e-05
        %v622 = vadd.f32 %v606, 1e-05
        %v623 = vadd.f32 %v607, 1e-05
        %v624 = vadd.f32 %v608, 1e-05
        %v625 = vrsqrt.pop %v609
        %v626 = vmul.f32 %v625, %v609
        %v627 = vmul.f32 %v626, %v625
        %v628 = vmul.f32 0.5, %v627
        %v629 = vsub.f32 1.5, %v628
        %v630 = vmul.f32 %v625, %v629
        %vm631 = vweird.f32 %v609
        %vm632 = vweird.f32 %v625
        %vm633 = vmor %vm631, %vm632
        %v634 = vsel %vm633, %v625, %v630
        %v635 = vrsqrt.pop %v610
        %v636 = vmul.f32 %v635, %v610
        %v637 = vmul.f32 %v636, %v635
        %v638 = vmul.f32 0.5, %v637
        %v639 = vsub.f32 1.5, %v638
        %v640 = vmul.f32 %v635, %v639
        %vm641 = vweird.f32 %v610
        %vm642 = vweird.f32 %v635
        %vm643 = vmor %vm641, %vm642
        %v644 = vsel %vm643, %v635, %v640
        %v645 = vrsqrt.pop %v611
        %v646 = vmul.f32 %v645, %v611
        %v647 = vmul.f32 %v646, %v645
        %v648 = vmul.f32 0.5, %v647
        %v649 = vsub.f32 1.5, %v648
        %v650 = vmul.f32 %v645, %v649
        %vm651 = vweird.f32 %v611
        %vm652 = vweird.f32 %v645
        %vm653 = vmor %vm651, %vm652
        %v654 = vsel %vm653, %v645, %v650
        %v655 = vrsqrt.pop %v612
        %v656 = vmul.f32 %v655, %v612
        %v657 = vmul.f32 %v656, %v655
        %v658 = vmul.f32 0.5, %v657
        %v659 = vsub.f32 1.5, %v658
        %v660 = vmul.f32 %v655, %v659
        %vm661 = vweird.f32 %v612
        %vm662 = vweird.f32 %v655
        %vm663 = vmor %vm661, %vm662
        %v664 = vsel %vm663, %v655, %v660
        %v665 = vrsqrt.pop %v613
        %v666 = vmul.f32 %v665, %v613
        %v667 = vmul.f32 %v666, %v665
        %v668 = vmul.f32 0.5, %v667
        %v669 = vsub.f32 1.5, %v668
        %v670 = vmul.f32 %v665, %v669
        %vm671 = vweird.f32 %v613
        %vm672 = vweird.f32 %v665
        %vm673 = vmor %vm671, %vm672
        %v674 = vsel %vm673, %v665, %v670
        %v675 = vrsqrt.pop %v614
        %v676 = vmul.f32 %v675, %v614
        %v677 = vmul.f32 %v676, %v675
        %v678 = vmul.f32 0.5, %v677
        %v679 = vsub.f32 1.5, %v678
        %v680 = vmul.f32 %v675, %v679
        %vm681 = vweird.f32 %v614
        %vm682 = vweird.f32 %v675
        %vm683 = vmor %vm681, %vm682
        %v684 = vsel %vm683, %v675, %v680
        %v685 = vrsqrt.pop %v615
        %v686 = vmul.f32 %v685, %v615
        %v687 = vmul.f32 %v686, %v685
        %v688 = vmul.f32 0.5, %v687
        %v689 = vsub.f32 1.5, %v688
        %v690 = vmul.f32 %v685, %v689
        %vm691 = vweird.f32 %v615
        %vm692 = vweird.f32 %v685
        %vm693 = vmor %vm691, %vm692
        %v694 = vsel %vm693, %v685, %v690
        %v695 = vrsqrt.pop %v616
        %v696 = vmul.f32 %v695, %v616
        %v697 = vmul.f32 %v696, %v695
        %v698 = vmul.f32 0.5, %v697
        %v699 = vsub.f32 1.5, %v698
        %v700 = vmul.f32 %v695, %v699
        %vm701 = vweird.f32 %v616
        %vm702 = vweird.f32 %v695
        %vm703 = vmor %vm701, %vm702
        %v704 = vsel %vm703, %v695, %v700
        %v705 = vrsqrt.pop %v617
        %v706 = vmul.f32 %v705, %v617
        %v707 = vmul.f32 %v706, %v705
        %v708 = vmul.f32 0.5, %v707
        %v709 = vsub.f32 1.5, %v708
        %v710 = vmul.f32 %v705, %v709
        %vm711 = vweird.f32 %v617
        %vm712 = vweird.f32 %v705
        %vm713 = vmor %vm711, %vm712
        %v714 = vsel %vm713, %v705, %v710
        %v715 = vrsqrt.pop %v618
        %v716 = vmul.f32 %v715, %v618
        %v717 = vmul.f32 %v716, %v715
        %v718 = vmul.f32 0.5, %v717
        %v719 = vsub.f32 1.5, %v718
        %v720 = vmul.f32 %v715, %v719
        %vm721 = vweird.f32 %v618
        %vm722 = vweird.f32 %v715
        %vm723 = vmor %vm721, %vm722
        %v724 = vsel %vm723, %v715, %v720
        %v725 = vrsqrt.pop %v619
        %v726 = vmul.f32 %v725, %v619
        %v727 = vmul.f32 %v726, %v725
        %v728 = vmul.f32 0.5, %v727
        %v729 = vsub.f32 1.5, %v728
        %v730 = vmul.f32 %v725, %v729
        %vm731 = vweird.f32 %v619
        %vm732 = vweird.f32 %v725
        %vm733 = vmor %vm731, %vm732
        %v734 = vsel %vm733, %v725, %v730
        %v735 = vrsqrt.pop %v620
        %v736 = vmul.f32 %v735, %v620
        %v737 = vmul.f32 %v736, %v735
        %v738 = vmul.f32 0.5, %v737
        %v739 = vsub.f32 1.5, %v738
        %v740 = vmul.f32 %v735, %v739
        %vm741 = vweird.f32 %v620
        %vm742 = vweird.f32 %v735
        %vm743 = vmor %vm741, %vm742
        %v744 = vsel %vm743, %v735, %v740
        %v745 = vrsqrt.pop %v621
        %v746 = vmul.f32 %v745, %v621
        %v747 = vmul.f32 %v746, %v745
        %v748 = vmul.f32 0.5, %v747
        %v749 = vsub.f32 1.5, %v748
        %v750 = vmul.f32 %v745, %v749
        %vm751 = vweird.f32 %v621
        %vm752 = vweird.f32 %v745
        %vm753 = vmor %vm751, %vm752
        %v754 = vsel %vm753, %v745, %v750
        %v755 = vrsqrt.pop %v622
        %v756 = vmul.f32 %v755, %v622
        %v757 = vmul.f32 %v756, %v755
        %v758 = vmul.f32 0.5, %v757
        %v759 = vsub.f32 1.5, %v758
        %v760 = vmul.f32 %v755, %v759
        %vm761 = vweird.f32 %v622
        %vm762 = vweird.f32 %v755
        %vm763 = vmor %vm761, %vm762
        %v764 = vsel %vm763, %v755, %v760
        %v765 = vrsqrt.pop %v623
        %v766 = vmul.f32 %v765, %v623
        %v767 = vmul.f32 %v766, %v765
        %v768 = vmul.f32 0.5, %v767
        %v769 = vsub.f32 1.5, %v768
        %v770 = vmul.f32 %v765, %v769
        %vm771 = vweird.f32 %v623
        %vm772 = vweird.f32 %v765
        %vm773 = vmor %vm771, %vm772
        %v774 = vsel %vm773, %v765, %v770
        %v775 = vrsqrt.pop %v624
        %v776 = vmul.f32 %v775, %v624
        %v777 = vmul.f32 %v776, %v775
        %v778 = vmul.f32 0.5, %v777
        %v779 = vsub.f32 1.5, %v778
        %v780 = vmul.f32 %v775, %v779
        %vm781 = vweird.f32 %v624
        %vm782 = vweird.f32 %v775
        %vm783 = vmor %vm781, %vm782
        %v784 = vsel %vm783, %v775, %v780
        %v785 = vmul.f32 %v513, %v634
        %v786 = vmul.f32 %v514, %v644
        %v787 = vmul.f32 %v515, %v654
        %v788 = vmul.f32 %v516, %v664
        %v789 = vmul.f32 %v517, %v674
        %v790 = vmul.f32 %v518, %v684
        %v791 = vmul.f32 %v519, %v694
        %v792 = vmul.f32 %v520, %v704
        %v793 = vmul.f32 %v521, %v714
        %v794 = vmul.f32 %v522, %v724
        %v795 = vmul.f32 %v523, %v734
        %v796 = vmul.f32 %v524, %v744
        %v797 = vmul.f32 %v525, %v754
        %v798 = vmul.f32 %v526, %v764
        %v799 = vmul.f32 %v527, %v774
        %v800 = vmul.f32 %v528, %v784
        %v801 = vperm.slane %v335, 1
        %v802 = vmul.f32 %v785, %v801
        %v803 = vmul.f32 %v786, %v801
        %v804 = vmul.f32 %v787, %v801
        %v805 = vmul.f32 %v788, %v801
        %v806 = vmul.f32 %v789, %v801
        %v807 = vmul.f32 %v790, %v801
        %v808 = vmul.f32 %v791, %v801
        %v809 = vmul.f32 %v792, %v801
        %v810 = vmul.f32 %v793, %v801
        %v811 = vmul.f32 %v794, %v801
        %v812 = vmul.f32 %v795, %v801
        %v813 = vmul.f32 %v796, %v801
        %v814 = vmul.f32 %v797, %v801
        %v815 = vmul.f32 %v798, %v801
        %v816 = vmul.f32 %v799, %v801
        %v817 = vmul.f32 %v800, %v801
        %v818 = vperm.slane %v335, 2
        %v819 = vadd.f32 %v802, %v818
        %v820 = vadd.f32 %v803, %v818
        %v821 = vadd.f32 %v804, %v818
        %v822 = vadd.f32 %v805, %v818
        %v823 = vadd.f32 %v806, %v818
        %v824 = vadd.f32 %v807, %v818
        %v825 = vadd.f32 %v808, %v818
        %v826 = vadd.f32 %v809, %v818
        %v827 = vadd.f32 %v810, %v818
        %v828 = vadd.f32 %v811, %v818
        %v829 = vadd.f32 %v812, %v818
        %v830 = vadd.f32 %v813, %v818
        %v831 = vadd.f32 %v814, %v818
        %v832 = vadd.f32 %v815, %v818
        %v833 = vadd.f32 %v816, %v818
        %v834 = vadd.f32 %v817, %v818
        %v835 = vpack.c.bf16 %v820, %v819
        %v836 = vpack.c.bf16 %v822, %v821
        %v837 = vpack.c.bf16 %v824, %v823
        %v838 = vpack.c.bf16 %v826, %v825
        %v839 = vpack.c.bf16 %v828, %v827
        %v840 = vpack.c.bf16 %v830, %v829
        %v841 = vpack.c.bf16 %v832, %v831
        %v842 = vpack.c.bf16 %v834, %v833
        %v843 = vld [vmem:[%s5] sm:$0xf]
        %v844 = vld [vmem:[%s5 + $0x4] sm:$0xf]
        %v845 = vld [vmem:[%s5 + $0x8] sm:$0xf]
        %v846 = vld [vmem:[%s5 + $0xc] sm:$0xf]
        %v851 = vunpack.c.l.b16 %v843
        %v852 = vunpack.c.l.b16 %v844
        %v853 = vunpack.c.l.b16 %v845
        %v854 = vunpack.c.l.b16 %v846
        %v855 = vpack.c.b16 %v852, %v851
        %v856 = vpack.c.b16 %v854, %v853
        %v860 = vsel %vm441, %v835, 0
        %v863 = vsel %vm441, %v836, 0
        %v866 = vsel %vm441, %v837, 0
        %v869 = vsel %vm441, %v838, 0
        %v872 = vsel %vm441, %v839, 0
        %v875 = vsel %vm441, %v840, 0
        %v878 = vsel %vm441, %v841, 0
        %v881 = vsel %vm441, %v842, 0
        %883 = vmatpush.bf16.msra.mxu0 0
        %884 = vmatpush.bf16.msra.mxu0 0
        %885 = vmatpush.bf16.msra.mxu0 0
        %886 = vmatpush.bf16.msra.mxu0 0
        %887 = vmatpush.bf16.msra.mxu0 0
        %888 = vmatpush.bf16.msra.mxu0 0
        %889 = vmatpush.bf16.msra.mxu0 %v856
        %890 = vmatpush.bf16.msra.mxu0 %v855
        %891 = vmatmul.bf16.gmra.mxu0 %v860
        %v892 = vpop.f32.mrf.mxu0
        %v893 = vadd.f32 0.0, %v892
        %v894 = vpop.f32.mrf.mxu0
        %v895 = vadd.f32 0.0, %v894
        %896 = vmatmul.bf16.gmra.mxu0 %v863
        %v897 = vpop.f32.mrf.mxu0
        %v898 = vadd.f32 0.0, %v897
        %v899 = vpop.f32.mrf.mxu0
        %v900 = vadd.f32 0.0, %v899
        %901 = vmatmul.bf16.gmra.mxu0 %v866
        %v902 = vpop.f32.mrf.mxu0
        %v903 = vadd.f32 0.0, %v902
        %v904 = vpop.f32.mrf.mxu0
        %v905 = vadd.f32 0.0, %v904
        %906 = vmatmul.bf16.gmra.mxu0 %v869
        %v907 = vpop.f32.mrf.mxu0
        %v908 = vadd.f32 0.0, %v907
        %v909 = vpop.f32.mrf.mxu0
        %v910 = vadd.f32 0.0, %v909
        %911 = vmatmul.bf16.gmra.mxu0 %v872
        %v912 = vpop.f32.mrf.mxu0
        %v913 = vadd.f32 0.0, %v912
        %v914 = vpop.f32.mrf.mxu0
        %v915 = vadd.f32 0.0, %v914
        %916 = vmatmul.bf16.gmra.mxu0 %v875
        %v917 = vpop.f32.mrf.mxu0
        %v918 = vadd.f32 0.0, %v917
        %v919 = vpop.f32.mrf.mxu0
        %v920 = vadd.f32 0.0, %v919
        %921 = vmatmul.bf16.gmra.mxu0 %v878
        %v922 = vpop.f32.mrf.mxu0
        %v923 = vadd.f32 0.0, %v922
        %v924 = vpop.f32.mrf.mxu0
        %v925 = vadd.f32 0.0, %v924
        %926 = vmatmul.bf16.gmra.mxu0 %v881
        %v927 = vpop.f32.mrf.mxu0
        %v928 = vadd.f32 0.0, %v927
        %v929 = vpop.f32.mrf.mxu0
        %v930 = vadd.f32 0.0, %v929
        %931 = vdwg.mxu0
        %v932 = vpack.c.bf16 %v893, %v893
        %v933 = vpack.c.bf16 %v895, %v895
        %v934 = vpack.c.bf16 %v898, %v898
        %v935 = vpack.c.bf16 %v900, %v900
        %v936 = vpack.c.bf16 %v903, %v903
        %v937 = vpack.c.bf16 %v905, %v905
        %v938 = vpack.c.bf16 %v908, %v908
        %v939 = vpack.c.bf16 %v910, %v910
        %v940 = vpack.c.bf16 %v913, %v913
        %v941 = vpack.c.bf16 %v915, %v915
        %v942 = vpack.c.bf16 %v918, %v918
        %v943 = vpack.c.bf16 %v920, %v920
        %v944 = vpack.c.bf16 %v923, %v923
        %v945 = vpack.c.bf16 %v925, %v925
        %v946 = vpack.c.bf16 %v928, %v928
        %v947 = vpack.c.bf16 %v930, %v930
        %v948 = vld [vmem:[%s2] sm:$0xff]
        %v949 = vld [vmem:[%s2 + $0x8] sm:$0xff]
        %v950 = vld [vmem:[%s2 + $0x10] sm:$0xff]
        %v951 = vld [vmem:[%s2 + $0x18] sm:$0xff]
        %v952 = vld [vmem:[%s2 + $0x20] sm:$0xff]
        %v953 = vld [vmem:[%s2 + $0x28] sm:$0xff]
        %v954 = vld [vmem:[%s2 + $0x30] sm:$0xff]
        %v955 = vld [vmem:[%s2 + $0x38] sm:$0xff]
        %v956 = vld [vmem:[%s2 + $0x40] sm:$0xff]
        %v957 = vld [vmem:[%s2 + $0x48] sm:$0xff]
        %v958 = vld [vmem:[%s2 + $0x50] sm:$0xff]
        %v959 = vld [vmem:[%s2 + $0x58] sm:$0xff]
        %v960 = vld [vmem:[%s2 + $0x60] sm:$0xff]
        %v961 = vld [vmem:[%s2 + $0x68] sm:$0xff]
        %v962 = vld [vmem:[%s2 + $0x70] sm:$0xff]
        %v963 = vld [vmem:[%s2 + $0x78] sm:$0xff]
        %v980 = vunpack.c.l.b16 %v932
        %v981 = vunpack.c.l.b16 %v933
        %v982 = vunpack.c.l.b16 %v934
        %v983 = vunpack.c.l.b16 %v935
        %v984 = vunpack.c.l.b16 %v936
        %v985 = vunpack.c.l.b16 %v937
        %v986 = vunpack.c.l.b16 %v938
        %v987 = vunpack.c.l.b16 %v939
        %v988 = vunpack.c.l.b16 %v940
        %v989 = vunpack.c.l.b16 %v941
        %v990 = vunpack.c.l.b16 %v942
        %v991 = vunpack.c.l.b16 %v943
        %v992 = vunpack.c.l.b16 %v944
        %v993 = vunpack.c.l.b16 %v945
        %v994 = vunpack.c.l.b16 %v946
        %v995 = vunpack.c.l.b16 %v947
        %v996 = vpack.c.b16 %v981, %v980
        %v997 = vpack.c.b16 %v983, %v982
        %v998 = vpack.c.b16 %v985, %v984
        %v999 = vpack.c.b16 %v987, %v986
        %v1000 = vpack.c.b16 %v989, %v988
        %v1001 = vpack.c.b16 %v991, %v990
        %v1002 = vpack.c.b16 %v993, %v992
        %v1003 = vpack.c.b16 %v995, %v994
        %1004 = vrot.lane.b32.xlu0 %v996, 96
        %v1005 = vpop.permute.xlu0 %1004
        %1006 = vrot.lane.b32.xlu0 %v997, 96
        %v1007 = vpop.permute.xlu0 %1006
        %1008 = vrot.lane.b32.xlu0 %v998, 96
        %v1009 = vpop.permute.xlu0 %1008
        %1010 = vrot.lane.b32.xlu0 %v999, 96
        %v1011 = vpop.permute.xlu0 %1010
        %1012 = vrot.lane.b32.xlu0 %v1000, 96
        %v1013 = vpop.permute.xlu0 %1012
        %1014 = vrot.lane.b32.xlu0 %v1001, 96
        %v1015 = vpop.permute.xlu0 %1014
        %1016 = vrot.lane.b32.xlu0 %v1002, 96
        %v1017 = vpop.permute.xlu0 %1016
        %1018 = vrot.lane.b32.xlu0 %v1003, 96
        %v1019 = vpop.permute.xlu0 %1018
        %v1021 = vsel %vm363, %v996, 0
        %v1024 = vsel %vm363, %v997, 0
        %v1027 = vsel %vm363, %v998, 0
        %v1030 = vsel %vm363, %v999, 0
        %v1033 = vsel %vm363, %v1000, 0
        %v1036 = vsel %vm363, %v1001, 0
        %v1039 = vsel %vm363, %v1002, 0
        %v1042 = vsel %vm363, %v1003, 0
        %v1045 = vsel %vm363, %v1005, 0
        %v1048 = vsel %vm363, %v1007, 0
        %v1051 = vsel %vm363, %v1009, 0
        %v1054 = vsel %vm363, %v1011, 0
        %v1057 = vsel %vm363, %v1013, 0
        %v1060 = vsel %vm363, %v1015, 0
        %v1063 = vsel %vm363, %v1017, 0
        %v1066 = vsel %vm363, %v1019, 0
        %1068 = vmatpush.bf16.xpose.msra.mxu0 %v1066
        %1069 = vmatpush.bf16.xpose.msra.mxu0 %v1063
        %1070 = vmatpush.bf16.xpose.msra.mxu0 %v1060
        %1071 = vmatpush.bf16.xpose.msra.mxu0 %v1057
        %1072 = vmatpush.bf16.xpose.msra.mxu0 %v1054
        %1073 = vmatpush.bf16.xpose.msra.mxu0 %v1051
        %1074 = vmatpush.bf16.xpose.msra.mxu0 %v1048
        %1075 = vmatpush.bf16.xpose.msra.mxu0 %v1045
        %1076 = vmatmul.bf16.gmra.mxu0 %v1021
        %v1077 = vpop.f32.mrf.mxu0
        %v1078 = vadd.f32 %v948, %v1077
        %v1079 = vpop.f32.mrf.mxu0
        %v1080 = vadd.f32 %v949, %v1079
        %1081 = vmatmul.bf16.gmra.mxu0 %v1024
        %v1082 = vpop.f32.mrf.mxu0
        %v1083 = vadd.f32 %v950, %v1082
        %v1084 = vpop.f32.mrf.mxu0
        %v1085 = vadd.f32 %v951, %v1084
        %1086 = vmatmul.bf16.gmra.mxu0 %v1027
        %v1087 = vpop.f32.mrf.mxu0
        %v1088 = vadd.f32 %v952, %v1087
        %v1089 = vpop.f32.mrf.mxu0
        %v1090 = vadd.f32 %v953, %v1089
        %1091 = vmatmul.bf16.gmra.mxu0 %v1030
        %v1092 = vpop.f32.mrf.mxu0
        %v1093 = vadd.f32 %v954, %v1092
        %v1094 = vpop.f32.mrf.mxu0
        %v1095 = vadd.f32 %v955, %v1094
        %1096 = vmatmul.bf16.gmra.mxu0 %v1033
        %v1097 = vpop.f32.mrf.mxu0
        %v1098 = vadd.f32 %v956, %v1097
        %v1099 = vpop.f32.mrf.mxu0
        %v1100 = vadd.f32 %v957, %v1099
        %1101 = vmatmul.bf16.gmra.mxu0 %v1036
        %v1102 = vpop.f32.mrf.mxu0
        %v1103 = vadd.f32 %v958, %v1102
        %v1104 = vpop.f32.mrf.mxu0
        %v1105 = vadd.f32 %v959, %v1104
        %1106 = vmatmul.bf16.gmra.mxu0 %v1039
        %v1107 = vpop.f32.mrf.mxu0
        %v1108 = vadd.f32 %v960, %v1107
        %v1109 = vpop.f32.mrf.mxu0
        %v1110 = vadd.f32 %v961, %v1109
        %1111 = vmatmul.bf16.gmra.mxu0 %v1042
        %v1112 = vpop.f32.mrf.mxu0
        %v1113 = vadd.f32 %v962, %v1112
        %v1114 = vpop.f32.mrf.mxu0
        %v1115 = vadd.f32 %v963, %v1114
        %1116 = vdwg.mxu0
        %1117 = vmax.xlane.f32.xlu0 %v1078
        %v1118 = vpop.xlane.xlu0 %1117
        %1119 = vmax.xlane.f32.xlu0 %v1080
        %v1120 = vpop.xlane.xlu0 %1119
        %1121 = vmax.xlane.f32.xlu0 %v1083
        %v1122 = vpop.xlane.xlu0 %1121
        %1123 = vmax.xlane.f32.xlu0 %v1085
        %v1124 = vpop.xlane.xlu0 %1123
        %1125 = vmax.xlane.f32.xlu0 %v1088
        %v1126 = vpop.xlane.xlu0 %1125
        %1127 = vmax.xlane.f32.xlu0 %v1090
        %v1128 = vpop.xlane.xlu0 %1127
        %1129 = vmax.xlane.f32.xlu0 %v1093
        %v1130 = vpop.xlane.xlu0 %1129
        %1131 = vmax.xlane.f32.xlu0 %v1095
        %v1132 = vpop.xlane.xlu0 %1131
        %1133 = vmax.xlane.f32.xlu0 %v1098
        %v1134 = vpop.xlane.xlu0 %1133
        %1135 = vmax.xlane.f32.xlu0 %v1100
        %v1136 = vpop.xlane.xlu0 %1135
        %1137 = vmax.xlane.f32.xlu0 %v1103
        %v1138 = vpop.xlane.xlu0 %1137
        %1139 = vmax.xlane.f32.xlu0 %v1105
        %v1140 = vpop.xlane.xlu0 %1139
        %1141 = vmax.xlane.f32.xlu0 %v1108
        %v1142 = vpop.xlane.xlu0 %1141
        %1143 = vmax.xlane.f32.xlu0 %v1110
        %v1144 = vpop.xlane.xlu0 %1143
        %1145 = vmax.xlane.f32.xlu0 %v1113
        %v1146 = vpop.xlane.xlu0 %1145
        %1147 = vmax.xlane.f32.xlu0 %v1115
        %v1148 = vpop.xlane.xlu0 %1147
        %v1149 = vsub.f32 %v1078, %v1118
        %v1150 = vsub.f32 %v1080, %v1120
        %v1151 = vsub.f32 %v1083, %v1122
        %v1152 = vsub.f32 %v1085, %v1124
        %v1153 = vsub.f32 %v1088, %v1126
        %v1154 = vsub.f32 %v1090, %v1128
        %v1155 = vsub.f32 %v1093, %v1130
        %v1156 = vsub.f32 %v1095, %v1132
        %v1157 = vsub.f32 %v1098, %v1134
        %v1158 = vsub.f32 %v1100, %v1136
        %v1159 = vsub.f32 %v1103, %v1138
        %v1160 = vsub.f32 %v1105, %v1140
        %v1161 = vsub.f32 %v1108, %v1142
        %v1162 = vsub.f32 %v1110, %v1144
        %v1163 = vsub.f32 %v1113, %v1146
        %v1164 = vsub.f32 %v1115, %v1148
        %v1165 = vmul.f32 %v1149, 1.442695
        %v1166 = vpow.pop %v1165
        %v1167 = vmul.f32 %v1150, 1.442695
        %v1168 = vpow.pop %v1167
        %v1169 = vmul.f32 %v1151, 1.442695
        %v1170 = vpow.pop %v1169
        %v1171 = vmul.f32 %v1152, 1.442695
        %v1172 = vpow.pop %v1171
        %v1173 = vmul.f32 %v1153, 1.442695
        %v1174 = vpow.pop %v1173
        %v1175 = vmul.f32 %v1154, 1.442695
        %v1176 = vpow.pop %v1175
        %v1177 = vmul.f32 %v1155, 1.442695
        %v1178 = vpow.pop %v1177
        %v1179 = vmul.f32 %v1156, 1.442695
        %v1180 = vpow.pop %v1179
        %v1181 = vmul.f32 %v1157, 1.442695
        %v1182 = vpow.pop %v1181
        %v1183 = vmul.f32 %v1158, 1.442695
        %v1184 = vpow.pop %v1183
        %v1185 = vmul.f32 %v1159, 1.442695
        %v1186 = vpow.pop %v1185
        %v1187 = vmul.f32 %v1160, 1.442695
        %v1188 = vpow.pop %v1187
        %v1189 = vmul.f32 %v1161, 1.442695
        %v1190 = vpow.pop %v1189
        %v1191 = vmul.f32 %v1162, 1.442695
        %v1192 = vpow.pop %v1191
        %v1193 = vmul.f32 %v1163, 1.442695
        %v1194 = vpow.pop %v1193
        %v1195 = vmul.f32 %v1164, 1.442695
        %v1196 = vpow.pop %v1195
        %1197 = vadd.xlane.f32.xlu0 %v1166
        %v1198 = vpop.xlane.xlu0 %1197
        %1199 = vadd.xlane.f32.xlu0 %v1168
        %v1200 = vpop.xlane.xlu0 %1199
        %1201 = vadd.xlane.f32.xlu0 %v1170
        %v1202 = vpop.xlane.xlu0 %1201
        %1203 = vadd.xlane.f32.xlu0 %v1172
        %v1204 = vpop.xlane.xlu0 %1203
        %1205 = vadd.xlane.f32.xlu0 %v1174
        %v1206 = vpop.xlane.xlu0 %1205
        %1207 = vadd.xlane.f32.xlu0 %v1176
        %v1208 = vpop.xlane.xlu0 %1207
        %1209 = vadd.xlane.f32.xlu0 %v1178
        %v1210 = vpop.xlane.xlu0 %1209
        %1211 = vadd.xlane.f32.xlu0 %v1180
        %v1212 = vpop.xlane.xlu0 %1211
        %1213 = vadd.xlane.f32.xlu0 %v1182
        %v1214 = vpop.xlane.xlu0 %1213
        %1215 = vadd.xlane.f32.xlu0 %v1184
        %v1216 = vpop.xlane.xlu0 %1215
        %1217 = vadd.xlane.f32.xlu0 %v1186
        %v1218 = vpop.xlane.xlu0 %1217
        %1219 = vadd.xlane.f32.xlu0 %v1188
        %v1220 = vpop.xlane.xlu0 %1219
        %1221 = vadd.xlane.f32.xlu0 %v1190
        %v1222 = vpop.xlane.xlu0 %1221
        %1223 = vadd.xlane.f32.xlu0 %v1192
        %v1224 = vpop.xlane.xlu0 %1223
        %1225 = vadd.xlane.f32.xlu0 %v1194
        %v1226 = vpop.xlane.xlu0 %1225
        %1227 = vadd.xlane.f32.xlu0 %v1196
        %v1228 = vpop.xlane.xlu0 %1227
        %v1229 = vrcp.pop %v1198
        %v1230 = vrcp.pop %v1200
        %v1231 = vrcp.pop %v1202
        %v1232 = vrcp.pop %v1204
        %v1233 = vrcp.pop %v1206
        %v1234 = vrcp.pop %v1208
        %v1235 = vrcp.pop %v1210
        %v1236 = vrcp.pop %v1212
        %v1237 = vrcp.pop %v1214
        %v1238 = vrcp.pop %v1216
        %v1239 = vrcp.pop %v1218
        %v1240 = vrcp.pop %v1220
        %v1241 = vrcp.pop %v1222
        %v1242 = vrcp.pop %v1224
        %v1243 = vrcp.pop %v1226
        %v1244 = vrcp.pop %v1228
        %v1245 = vmul.f32 %v1166, %v1229
        %v1246 = vmul.f32 %v1168, %v1230
        %v1247 = vmul.f32 %v1170, %v1231
        %v1248 = vmul.f32 %v1172, %v1232
        %v1249 = vmul.f32 %v1174, %v1233
        %v1250 = vmul.f32 %v1176, %v1234
        %v1251 = vmul.f32 %v1178, %v1235
        %v1252 = vmul.f32 %v1180, %v1236
        %v1253 = vmul.f32 %v1182, %v1237
        %v1254 = vmul.f32 %v1184, %v1238
        %v1255 = vmul.f32 %v1186, %v1239
        %v1256 = vmul.f32 %v1188, %v1240
        %v1257 = vmul.f32 %v1190, %v1241
        %v1258 = vmul.f32 %v1192, %v1242
        %v1259 = vmul.f32 %v1194, %v1243
        %v1260 = vmul.f32 %v1196, %v1244
        %v1261 = vpack.c.bf16 %v1246, %v1245
        %v1262 = vpack.c.bf16 %v1248, %v1247
        %v1263 = vpack.c.bf16 %v1250, %v1249
        %v1264 = vpack.c.bf16 %v1252, %v1251
        %v1265 = vpack.c.bf16 %v1254, %v1253
        %v1266 = vpack.c.bf16 %v1256, %v1255
        %v1267 = vpack.c.bf16 %v1258, %v1257
        %v1268 = vpack.c.bf16 %v1260, %v1259
        %1269 = vrot.lane.b32.xlu0 %v996, 64
        %v1270 = vpop.permute.xlu0 %1269
        %1271 = vrot.lane.b32.xlu0 %v997, 64
        %v1272 = vpop.permute.xlu0 %1271
        %1273 = vrot.lane.b32.xlu0 %v998, 64
        %v1274 = vpop.permute.xlu0 %1273
        %1275 = vrot.lane.b32.xlu0 %v999, 64
        %v1276 = vpop.permute.xlu0 %1275
        %1277 = vrot.lane.b32.xlu0 %v1000, 64
        %v1278 = vpop.permute.xlu0 %1277
        %1279 = vrot.lane.b32.xlu0 %v1001, 64
        %v1280 = vpop.permute.xlu0 %1279
        %1281 = vrot.lane.b32.xlu0 %v1002, 64
        %v1282 = vpop.permute.xlu0 %1281
        %1283 = vrot.lane.b32.xlu0 %v1003, 64
        %v1284 = vpop.permute.xlu0 %1283
        %1293 = vmatpush.bf16.msra.mxu0 %v1284
        %1294 = vmatpush.bf16.msra.mxu0 %v1282
        %1295 = vmatpush.bf16.msra.mxu0 %v1280
        %1296 = vmatpush.bf16.msra.mxu0 %v1278
        %1297 = vmatpush.bf16.msra.mxu0 %v1276
        %1298 = vmatpush.bf16.msra.mxu0 %v1274
        %1299 = vmatpush.bf16.msra.mxu0 %v1272
        %1300 = vmatpush.bf16.msra.mxu0 %v1270
        %1301 = vmatmul.bf16.gmra.mxu0 %v1261
        %v1302 = vpop.f32.mrf.mxu0
        %v1303 = vadd.f32 0.0, %v1302
        %v1304 = vpop.f32.mrf.mxu0
        %v1305 = vadd.f32 0.0, %v1304
        %1306 = vmatmul.bf16.gmra.mxu0 %v1262
        %v1307 = vpop.f32.mrf.mxu0
        %v1308 = vadd.f32 0.0, %v1307
        %v1309 = vpop.f32.mrf.mxu0
        %v1310 = vadd.f32 0.0, %v1309
        %1311 = vmatmul.bf16.gmra.mxu0 %v1263
        %v1312 = vpop.f32.mrf.mxu0
        %v1313 = vadd.f32 0.0, %v1312
        %v1314 = vpop.f32.mrf.mxu0
        %v1315 = vadd.f32 0.0, %v1314
        %1316 = vmatmul.bf16.gmra.mxu0 %v1264
        %v1317 = vpop.f32.mrf.mxu0
        %v1318 = vadd.f32 0.0, %v1317
        %v1319 = vpop.f32.mrf.mxu0
        %v1320 = vadd.f32 0.0, %v1319
        %1321 = vmatmul.bf16.gmra.mxu0 %v1265
        %v1322 = vpop.f32.mrf.mxu0
        %v1323 = vadd.f32 0.0, %v1322
        %v1324 = vpop.f32.mrf.mxu0
        %v1325 = vadd.f32 0.0, %v1324
        %1326 = vmatmul.bf16.gmra.mxu0 %v1266
        %v1327 = vpop.f32.mrf.mxu0
        %v1328 = vadd.f32 0.0, %v1327
        %v1329 = vpop.f32.mrf.mxu0
        %v1330 = vadd.f32 0.0, %v1329
        %1331 = vmatmul.bf16.gmra.mxu0 %v1267
        %v1332 = vpop.f32.mrf.mxu0
        %v1333 = vadd.f32 0.0, %v1332
        %v1334 = vpop.f32.mrf.mxu0
        %v1335 = vadd.f32 0.0, %v1334
        %1336 = vmatmul.bf16.gmra.mxu0 %v1268
        %v1337 = vpop.f32.mrf.mxu0
        %v1338 = vadd.f32 0.0, %v1337
        %v1339 = vpop.f32.mrf.mxu0
        %v1340 = vadd.f32 0.0, %v1339
        %1341 = vdwg.mxu0
        %1342 = vrot.lane.b32.xlu0 %v996, 120
        %v1343 = vpop.permute.xlu0 %1342
        %1344 = vrot.lane.b32.xlu0 %v997, 120
        %v1345 = vpop.permute.xlu0 %1344
        %1346 = vrot.lane.b32.xlu0 %v998, 120
        %v1347 = vpop.permute.xlu0 %1346
        %1348 = vrot.lane.b32.xlu0 %v999, 120
        %v1349 = vpop.permute.xlu0 %1348
        %1350 = vrot.lane.b32.xlu0 %v1000, 120
        %v1351 = vpop.permute.xlu0 %1350
        %1352 = vrot.lane.b32.xlu0 %v1001, 120
        %v1353 = vpop.permute.xlu0 %1352
        %1354 = vrot.lane.b32.xlu0 %v1002, 120
        %v1355 = vpop.permute.xlu0 %1354
        %1356 = vrot.lane.b32.xlu0 %v1003, 120
        %v1357 = vpop.permute.xlu0 %1356
        %1358 = vrot.lane.b32.xlu0 %v996, 88
        %v1359 = vpop.permute.xlu0 %1358
        %1360 = vrot.lane.b32.xlu0 %v997, 88
        %v1361 = vpop.permute.xlu0 %1360
        %1362 = vrot.lane.b32.xlu0 %v998, 88
        %v1363 = vpop.permute.xlu0 %1362
        %1364 = vrot.lane.b32.xlu0 %v999, 88
        %v1365 = vpop.permute.xlu0 %1364
        %1366 = vrot.lane.b32.xlu0 %v1000, 88
        %v1367 = vpop.permute.xlu0 %1366
        %1368 = vrot.lane.b32.xlu0 %v1001, 88
        %v1369 = vpop.permute.xlu0 %1368
        %1370 = vrot.lane.b32.xlu0 %v1002, 88
        %v1371 = vpop.permute.xlu0 %1370
        %1372 = vrot.lane.b32.xlu0 %v1003, 88
        %v1373 = vpop.permute.xlu0 %1372
        %v1375 = vsel %vm363, %v1343, 0
        %v1378 = vsel %vm363, %v1345, 0
        %v1381 = vsel %vm363, %v1347, 0
        %v1384 = vsel %vm363, %v1349, 0
        %v1387 = vsel %vm363, %v1351, 0
        %v1390 = vsel %vm363, %v1353, 0
        %v1393 = vsel %vm363, %v1355, 0
        %v1396 = vsel %vm363, %v1357, 0
        %v1399 = vsel %vm363, %v1359, 0
        %v1402 = vsel %vm363, %v1361, 0
        %v1405 = vsel %vm363, %v1363, 0
        %v1408 = vsel %vm363, %v1365, 0
        %v1411 = vsel %vm363, %v1367, 0
        %v1414 = vsel %vm363, %v1369, 0
        %v1417 = vsel %vm363, %v1371, 0
        %v1420 = vsel %vm363, %v1373, 0
        %1422 = vmatpush.bf16.xpose.msra.mxu0 %v1420
        %1423 = vmatpush.bf16.xpose.msra.mxu0 %v1417
        %1424 = vmatpush.bf16.xpose.msra.mxu0 %v1414
        %1425 = vmatpush.bf16.xpose.msra.mxu0 %v1411
        %1426 = vmatpush.bf16.xpose.msra.mxu0 %v1408
        %1427 = vmatpush.bf16.xpose.msra.mxu0 %v1405
        %1428 = vmatpush.bf16.xpose.msra.mxu0 %v1402
        %1429 = vmatpush.bf16.xpose.msra.mxu0 %v1399
        %1430 = vmatmul.bf16.gmra.mxu0 %v1375
        %v1431 = vpop.f32.mrf.mxu0
        %v1432 = vadd.f32 %v948, %v1431
        %v1433 = vpop.f32.mrf.mxu0
        %v1434 = vadd.f32 %v949, %v1433
        %1435 = vmatmul.bf16.gmra.mxu0 %v1378
        %v1436 = vpop.f32.mrf.mxu0
        %v1437 = vadd.f32 %v950, %v1436
        %v1438 = vpop.f32.mrf.mxu0
        %v1439 = vadd.f32 %v951, %v1438
        %1440 = vmatmul.bf16.gmra.mxu0 %v1381
        %v1441 = vpop.f32.mrf.mxu0
        %v1442 = vadd.f32 %v952, %v1441
        %v1443 = vpop.f32.mrf.mxu0
        %v1444 = vadd.f32 %v953, %v1443
        %1445 = vmatmul.bf16.gmra.mxu0 %v1384
        %v1446 = vpop.f32.mrf.mxu0
        %v1447 = vadd.f32 %v954, %v1446
        %v1448 = vpop.f32.mrf.mxu0
        %v1449 = vadd.f32 %v955, %v1448
        %1450 = vmatmul.bf16.gmra.mxu0 %v1387
        %v1451 = vpop.f32.mrf.mxu0
        %v1452 = vadd.f32 %v956, %v1451
        %v1453 = vpop.f32.mrf.mxu0
        %v1454 = vadd.f32 %v957, %v1453
        %1455 = vmatmul.bf16.gmra.mxu0 %v1390
        %v1456 = vpop.f32.mrf.mxu0
        %v1457 = vadd.f32 %v958, %v1456
        %v1458 = vpop.f32.mrf.mxu0
        %v1459 = vadd.f32 %v959, %v1458
        %1460 = vmatmul.bf16.gmra.mxu0 %v1393
        %v1461 = vpop.f32.mrf.mxu0
        %v1462 = vadd.f32 %v960, %v1461
        %v1463 = vpop.f32.mrf.mxu0
        %v1464 = vadd.f32 %v961, %v1463
        %1465 = vmatmul.bf16.gmra.mxu0 %v1396
        %v1466 = vpop.f32.mrf.mxu0
        %v1467 = vadd.f32 %v962, %v1466
        %v1468 = vpop.f32.mrf.mxu0
        %v1469 = vadd.f32 %v963, %v1468
        %1470 = vdwg.mxu0
        %1471 = vmax.xlane.f32.xlu0 %v1432
        %v1472 = vpop.xlane.xlu0 %1471
        %1473 = vmax.xlane.f32.xlu0 %v1434
        %v1474 = vpop.xlane.xlu0 %1473
        %1475 = vmax.xlane.f32.xlu0 %v1437
        %v1476 = vpop.xlane.xlu0 %1475
        %1477 = vmax.xlane.f32.xlu0 %v1439
        %v1478 = vpop.xlane.xlu0 %1477
        %1479 = vmax.xlane.f32.xlu0 %v1442
        %v1480 = vpop.xlane.xlu0 %1479
        %1481 = vmax.xlane.f32.xlu0 %v1444
        %v1482 = vpop.xlane.xlu0 %1481
        %1483 = vmax.xlane.f32.xlu0 %v1447
        %v1484 = vpop.xlane.xlu0 %1483
        %1485 = vmax.xlane.f32.xlu0 %v1449
        %v1486 = vpop.xlane.xlu0 %1485
        %1487 = vmax.xlane.f32.xlu0 %v1452
        %v1488 = vpop.xlane.xlu0 %1487
        %1489 = vmax.xlane.f32.xlu0 %v1454
        %v1490 = vpop.xlane.xlu0 %1489
        %1491 = vmax.xlane.f32.xlu0 %v1457
        %v1492 = vpop.xlane.xlu0 %1491
        %1493 = vmax.xlane.f32.xlu0 %v1459
        %v1494 = vpop.xlane.xlu0 %1493
        %1495 = vmax.xlane.f32.xlu0 %v1462
        %v1496 = vpop.xlane.xlu0 %1495
        %1497 = vmax.xlane.f32.xlu0 %v1464
        %v1498 = vpop.xlane.xlu0 %1497
        %1499 = vmax.xlane.f32.xlu0 %v1467
        %v1500 = vpop.xlane.xlu0 %1499
        %1501 = vmax.xlane.f32.xlu0 %v1469
        %v1502 = vpop.xlane.xlu0 %1501
        %v1503 = vsub.f32 %v1432, %v1472
        %v1504 = vsub.f32 %v1434, %v1474
        %v1505 = vsub.f32 %v1437, %v1476
        %v1506 = vsub.f32 %v1439, %v1478
        %v1507 = vsub.f32 %v1442, %v1480
        %v1508 = vsub.f32 %v1444, %v1482
        %v1509 = vsub.f32 %v1447, %v1484
        %v1510 = vsub.f32 %v1449, %v1486
        %v1511 = vsub.f32 %v1452, %v1488
        %v1512 = vsub.f32 %v1454, %v1490
        %v1513 = vsub.f32 %v1457, %v1492
        %v1514 = vsub.f32 %v1459, %v1494
        %v1515 = vsub.f32 %v1462, %v1496
        %v1516 = vsub.f32 %v1464, %v1498
        %v1517 = vsub.f32 %v1467, %v1500
        %v1518 = vsub.f32 %v1469, %v1502
        %v1519 = vmul.f32 %v1503, 1.442695
        %v1520 = vpow.pop %v1519
        %v1521 = vmul.f32 %v1504, 1.442695
        %v1522 = vpow.pop %v1521
        %v1523 = vmul.f32 %v1505, 1.442695
        %v1524 = vpow.pop %v1523
        %v1525 = vmul.f32 %v1506, 1.442695
        %v1526 = vpow.pop %v1525
        %v1527 = vmul.f32 %v1507, 1.442695
        %v1528 = vpow.pop %v1527
        %v1529 = vmul.f32 %v1508, 1.442695
        %v1530 = vpow.pop %v1529
        %v1531 = vmul.f32 %v1509, 1.442695
        %v1532 = vpow.pop %v1531
        %v1533 = vmul.f32 %v1510, 1.442695
        %v1534 = vpow.pop %v1533
        %v1535 = vmul.f32 %v1511, 1.442695
        %v1536 = vpow.pop %v1535
        %v1537 = vmul.f32 %v1512, 1.442695
        %v1538 = vpow.pop %v1537
        %v1539 = vmul.f32 %v1513, 1.442695
        %v1540 = vpow.pop %v1539
        %v1541 = vmul.f32 %v1514, 1.442695
        %v1542 = vpow.pop %v1541
        %v1543 = vmul.f32 %v1515, 1.442695
        %v1544 = vpow.pop %v1543
        %v1545 = vmul.f32 %v1516, 1.442695
        %v1546 = vpow.pop %v1545
        %v1547 = vmul.f32 %v1517, 1.442695
        %v1548 = vpow.pop %v1547
        %v1549 = vmul.f32 %v1518, 1.442695
        %v1550 = vpow.pop %v1549
        %1551 = vadd.xlane.f32.xlu0 %v1520
        %v1552 = vpop.xlane.xlu0 %1551
        %1553 = vadd.xlane.f32.xlu0 %v1522
        %v1554 = vpop.xlane.xlu0 %1553
        %1555 = vadd.xlane.f32.xlu0 %v1524
        %v1556 = vpop.xlane.xlu0 %1555
        %1557 = vadd.xlane.f32.xlu0 %v1526
        %v1558 = vpop.xlane.xlu0 %1557
        %1559 = vadd.xlane.f32.xlu0 %v1528
        %v1560 = vpop.xlane.xlu0 %1559
        %1561 = vadd.xlane.f32.xlu0 %v1530
        %v1562 = vpop.xlane.xlu0 %1561
        %1563 = vadd.xlane.f32.xlu0 %v1532
        %v1564 = vpop.xlane.xlu0 %1563
        %1565 = vadd.xlane.f32.xlu0 %v1534
        %v1566 = vpop.xlane.xlu0 %1565
        %1567 = vadd.xlane.f32.xlu0 %v1536
        %v1568 = vpop.xlane.xlu0 %1567
        %1569 = vadd.xlane.f32.xlu0 %v1538
        %v1570 = vpop.xlane.xlu0 %1569
        %1571 = vadd.xlane.f32.xlu0 %v1540
        %v1572 = vpop.xlane.xlu0 %1571
        %1573 = vadd.xlane.f32.xlu0 %v1542
        %v1574 = vpop.xlane.xlu0 %1573
        %1575 = vadd.xlane.f32.xlu0 %v1544
        %v1576 = vpop.xlane.xlu0 %1575
        %1577 = vadd.xlane.f32.xlu0 %v1546
        %v1578 = vpop.xlane.xlu0 %1577
        %1579 = vadd.xlane.f32.xlu0 %v1548
        %v1580 = vpop.xlane.xlu0 %1579
        %1581 = vadd.xlane.f32.xlu0 %v1550
        %v1582 = vpop.xlane.xlu0 %1581
        %v1583 = vrcp.pop %v1552
        %v1584 = vrcp.pop %v1554
        %v1585 = vrcp.pop %v1556
        %v1586 = vrcp.pop %v1558
        %v1587 = vrcp.pop %v1560
        %v1588 = vrcp.pop %v1562
        %v1589 = vrcp.pop %v1564
        %v1590 = vrcp.pop %v1566
        %v1591 = vrcp.pop %v1568
        %v1592 = vrcp.pop %v1570
        %v1593 = vrcp.pop %v1572
        %v1594 = vrcp.pop %v1574
        %v1595 = vrcp.pop %v1576
        %v1596 = vrcp.pop %v1578
        %v1597 = vrcp.pop %v1580
        %v1598 = vrcp.pop %v1582
        %v1599 = vmul.f32 %v1520, %v1583
        %v1600 = vmul.f32 %v1522, %v1584
        %v1601 = vmul.f32 %v1524, %v1585
        %v1602 = vmul.f32 %v1526, %v1586
        %v1603 = vmul.f32 %v1528, %v1587
        %v1604 = vmul.f32 %v1530, %v1588
        %v1605 = vmul.f32 %v1532, %v1589
        %v1606 = vmul.f32 %v1534, %v1590
        %v1607 = vmul.f32 %v1536, %v1591
        %v1608 = vmul.f32 %v1538, %v1592
        %v1609 = vmul.f32 %v1540, %v1593
        %v1610 = vmul.f32 %v1542, %v1594
        %v1611 = vmul.f32 %v1544, %v1595
        %v1612 = vmul.f32 %v1546, %v1596
        %v1613 = vmul.f32 %v1548, %v1597
        %v1614 = vmul.f32 %v1550, %v1598
        %v1615 = vpack.c.bf16 %v1600, %v1599
        %v1616 = vpack.c.bf16 %v1602, %v1601
        %v1617 = vpack.c.bf16 %v1604, %v1603
        %v1618 = vpack.c.bf16 %v1606, %v1605
        %v1619 = vpack.c.bf16 %v1608, %v1607
        %v1620 = vpack.c.bf16 %v1610, %v1609
        %v1621 = vpack.c.bf16 %v1612, %v1611
        %v1622 = vpack.c.bf16 %v1614, %v1613
        %1623 = vrot.lane.b32.xlu0 %v996, 56
        %v1624 = vpop.permute.xlu0 %1623
        %1625 = vrot.lane.b32.xlu0 %v997, 56
        %v1626 = vpop.permute.xlu0 %1625
        %1627 = vrot.lane.b32.xlu0 %v998, 56
        %v1628 = vpop.permute.xlu0 %1627
        %1629 = vrot.lane.b32.xlu0 %v999, 56
        %v1630 = vpop.permute.xlu0 %1629
        %1631 = vrot.lane.b32.xlu0 %v1000, 56
        %v1632 = vpop.permute.xlu0 %1631
        %1633 = vrot.lane.b32.xlu0 %v1001, 56
        %v1634 = vpop.permute.xlu0 %1633
        %1635 = vrot.lane.b32.xlu0 %v1002, 56
        %v1636 = vpop.permute.xlu0 %1635
        %1637 = vrot.lane.b32.xlu0 %v1003, 56
        %v1638 = vpop.permute.xlu0 %1637
        %1647 = vmatpush.bf16.msra.mxu0 %v1638
        %1648 = vmatpush.bf16.msra.mxu0 %v1636
        %1649 = vmatpush.bf16.msra.mxu0 %v1634
        %1650 = vmatpush.bf16.msra.mxu0 %v1632
        %1651 = vmatpush.bf16.msra.mxu0 %v1630
        %1652 = vmatpush.bf16.msra.mxu0 %v1628
        %1653 = vmatpush.bf16.msra.mxu0 %v1626
        %1654 = vmatpush.bf16.msra.mxu0 %v1624
        %1655 = vmatmul.bf16.gmra.mxu0 %v1615
        %v1656 = vpop.f32.mrf.mxu0
        %v1657 = vadd.f32 0.0, %v1656
        %v1658 = vpop.f32.mrf.mxu0
        %v1659 = vadd.f32 0.0, %v1658
        %1660 = vmatmul.bf16.gmra.mxu0 %v1616
        %v1661 = vpop.f32.mrf.mxu0
        %v1662 = vadd.f32 0.0, %v1661
        %v1663 = vpop.f32.mrf.mxu0
        %v1664 = vadd.f32 0.0, %v1663
        %1665 = vmatmul.bf16.gmra.mxu0 %v1617
        %v1666 = vpop.f32.mrf.mxu0
        %v1667 = vadd.f32 0.0, %v1666
        %v1668 = vpop.f32.mrf.mxu0
        %v1669 = vadd.f32 0.0, %v1668
        %1670 = vmatmul.bf16.gmra.mxu0 %v1618
        %v1671 = vpop.f32.mrf.mxu0
        %v1672 = vadd.f32 0.0, %v1671
        %v1673 = vpop.f32.mrf.mxu0
        %v1674 = vadd.f32 0.0, %v1673
        %1675 = vmatmul.bf16.gmra.mxu0 %v1619
        %v1676 = vpop.f32.mrf.mxu0
        %v1677 = vadd.f32 0.0, %v1676
        %v1678 = vpop.f32.mrf.mxu0
        %v1679 = vadd.f32 0.0, %v1678
        %1680 = vmatmul.bf16.gmra.mxu0 %v1620
        %v1681 = vpop.f32.mrf.mxu0
        %v1682 = vadd.f32 0.0, %v1681
        %v1683 = vpop.f32.mrf.mxu0
        %v1684 = vadd.f32 0.0, %v1683
        %1685 = vmatmul.bf16.gmra.mxu0 %v1621
        %v1686 = vpop.f32.mrf.mxu0
        %v1687 = vadd.f32 0.0, %v1686
        %v1688 = vpop.f32.mrf.mxu0
        %v1689 = vadd.f32 0.0, %v1688
        %1690 = vmatmul.bf16.gmra.mxu0 %v1622
        %v1691 = vpop.f32.mrf.mxu0
        %v1692 = vadd.f32 0.0, %v1691
        %v1693 = vpop.f32.mrf.mxu0
        %v1694 = vadd.f32 0.0, %v1693
        %1695 = vdwg.mxu0
        %1696 = vrot.lane.b32.xlu0 %v996, 112
        %v1697 = vpop.permute.xlu0 %1696
        %1698 = vrot.lane.b32.xlu0 %v997, 112
        %v1699 = vpop.permute.xlu0 %1698
        %1700 = vrot.lane.b32.xlu0 %v998, 112
        %v1701 = vpop.permute.xlu0 %1700
        %1702 = vrot.lane.b32.xlu0 %v999, 112
        %v1703 = vpop.permute.xlu0 %1702
        %1704 = vrot.lane.b32.xlu0 %v1000, 112
        %v1705 = vpop.permute.xlu0 %1704
        %1706 = vrot.lane.b32.xlu0 %v1001, 112
        %v1707 = vpop.permute.xlu0 %1706
        %1708 = vrot.lane.b32.xlu0 %v1002, 112
        %v1709 = vpop.permute.xlu0 %1708
        %1710 = vrot.lane.b32.xlu0 %v1003, 112
        %v1711 = vpop.permute.xlu0 %1710
        %1712 = vrot.lane.b32.xlu0 %v996, 80
        %v1713 = vpop.permute.xlu0 %1712
        %1714 = vrot.lane.b32.xlu0 %v997, 80
        %v1715 = vpop.permute.xlu0 %1714
        %1716 = vrot.lane.b32.xlu0 %v998, 80
        %v1717 = vpop.permute.xlu0 %1716
        %1718 = vrot.lane.b32.xlu0 %v999, 80
        %v1719 = vpop.permute.xlu0 %1718
        %1720 = vrot.lane.b32.xlu0 %v1000, 80
        %v1721 = vpop.permute.xlu0 %1720
        %1722 = vrot.lane.b32.xlu0 %v1001, 80
        %v1723 = vpop.permute.xlu0 %1722
        %1724 = vrot.lane.b32.xlu0 %v1002, 80
        %v1725 = vpop.permute.xlu0 %1724
        %1726 = vrot.lane.b32.xlu0 %v1003, 80
        %v1727 = vpop.permute.xlu0 %1726
        %v1729 = vsel %vm363, %v1697, 0
        %v1732 = vsel %vm363, %v1699, 0
        %v1735 = vsel %vm363, %v1701, 0
        %v1738 = vsel %vm363, %v1703, 0
        %v1741 = vsel %vm363, %v1705, 0
        %v1744 = vsel %vm363, %v1707, 0
        %v1747 = vsel %vm363, %v1709, 0
        %v1750 = vsel %vm363, %v1711, 0
        %v1753 = vsel %vm363, %v1713, 0
        %v1756 = vsel %vm363, %v1715, 0
        %v1759 = vsel %vm363, %v1717, 0
        %v1762 = vsel %vm363, %v1719, 0
        %v1765 = vsel %vm363, %v1721, 0
        %v1768 = vsel %vm363, %v1723, 0
        %v1771 = vsel %vm363, %v1725, 0
        %v1774 = vsel %vm363, %v1727, 0
        %1776 = vmatpush.bf16.xpose.msra.mxu0 %v1774
        %1777 = vmatpush.bf16.xpose.msra.mxu0 %v1771
        %1778 = vmatpush.bf16.xpose.msra.mxu0 %v1768
        %1779 = vmatpush.bf16.xpose.msra.mxu0 %v1765
        %1780 = vmatpush.bf16.xpose.msra.mxu0 %v1762
        %1781 = vmatpush.bf16.xpose.msra.mxu0 %v1759
        %1782 = vmatpush.bf16.xpose.msra.mxu0 %v1756
        %1783 = vmatpush.bf16.xpose.msra.mxu0 %v1753
        %1784 = vmatmul.bf16.gmra.mxu0 %v1729
        %v1785 = vpop.f32.mrf.mxu0
        %v1786 = vadd.f32 %v948, %v1785
        %v1787 = vpop.f32.mrf.mxu0
        %v1788 = vadd.f32 %v949, %v1787
        %1789 = vmatmul.bf16.gmra.mxu0 %v1732
        %v1790 = vpop.f32.mrf.mxu0
        %v1791 = vadd.f32 %v950, %v1790
        %v1792 = vpop.f32.mrf.mxu0
        %v1793 = vadd.f32 %v951, %v1792
        %1794 = vmatmul.bf16.gmra.mxu0 %v1735
        %v1795 = vpop.f32.mrf.mxu0
        %v1796 = vadd.f32 %v952, %v1795
        %v1797 = vpop.f32.mrf.mxu0
        %v1798 = vadd.f32 %v953, %v1797
        %1799 = vmatmul.bf16.gmra.mxu0 %v1738
        %v1800 = vpop.f32.mrf.mxu0
        %v1801 = vadd.f32 %v954, %v1800
        %v1802 = vpop.f32.mrf.mxu0
        %v1803 = vadd.f32 %v955, %v1802
        %1804 = vmatmul.bf16.gmra.mxu0 %v1741
        %v1805 = vpop.f32.mrf.mxu0
        %v1806 = vadd.f32 %v956, %v1805
        %v1807 = vpop.f32.mrf.mxu0
        %v1808 = vadd.f32 %v957, %v1807
        %1809 = vmatmul.bf16.gmra.mxu0 %v1744
        %v1810 = vpop.f32.mrf.mxu0
        %v1811 = vadd.f32 %v958, %v1810
        %v1812 = vpop.f32.mrf.mxu0
        %v1813 = vadd.f32 %v959, %v1812
        %1814 = vmatmul.bf16.gmra.mxu0 %v1747
        %v1815 = vpop.f32.mrf.mxu0
        %v1816 = vadd.f32 %v960, %v1815
        %v1817 = vpop.f32.mrf.mxu0
        %v1818 = vadd.f32 %v961, %v1817
        %1819 = vmatmul.bf16.gmra.mxu0 %v1750
        %v1820 = vpop.f32.mrf.mxu0
        %v1821 = vadd.f32 %v962, %v1820
        %v1822 = vpop.f32.mrf.mxu0
        %v1823 = vadd.f32 %v963, %v1822
        %1824 = vdwg.mxu0
        %1825 = vmax.xlane.f32.xlu0 %v1786
        %v1826 = vpop.xlane.xlu0 %1825
        %1827 = vmax.xlane.f32.xlu0 %v1788
        %v1828 = vpop.xlane.xlu0 %1827
        %1829 = vmax.xlane.f32.xlu0 %v1791
        %v1830 = vpop.xlane.xlu0 %1829
        %1831 = vmax.xlane.f32.xlu0 %v1793
        %v1832 = vpop.xlane.xlu0 %1831
        %1833 = vmax.xlane.f32.xlu0 %v1796
        %v1834 = vpop.xlane.xlu0 %1833
        %1835 = vmax.xlane.f32.xlu0 %v1798
        %v1836 = vpop.xlane.xlu0 %1835
        %1837 = vmax.xlane.f32.xlu0 %v1801
        %v1838 = vpop.xlane.xlu0 %1837
        %1839 = vmax.xlane.f32.xlu0 %v1803
        %v1840 = vpop.xlane.xlu0 %1839
        %1841 = vmax.xlane.f32.xlu0 %v1806
        %v1842 = vpop.xlane.xlu0 %1841
        %1843 = vmax.xlane.f32.xlu0 %v1808
        %v1844 = vpop.xlane.xlu0 %1843
        %1845 = vmax.xlane.f32.xlu0 %v1811
        %v1846 = vpop.xlane.xlu0 %1845
        %1847 = vmax.xlane.f32.xlu0 %v1813
        %v1848 = vpop.xlane.xlu0 %1847
        %1849 = vmax.xlane.f32.xlu0 %v1816
        %v1850 = vpop.xlane.xlu0 %1849
        %1851 = vmax.xlane.f32.xlu0 %v1818
        %v1852 = vpop.xlane.xlu0 %1851
        %1853 = vmax.xlane.f32.xlu0 %v1821
        %v1854 = vpop.xlane.xlu0 %1853
        %1855 = vmax.xlane.f32.xlu0 %v1823
        %v1856 = vpop.xlane.xlu0 %1855
        %v1857 = vsub.f32 %v1786, %v1826
        %v1858 = vsub.f32 %v1788, %v1828
        %v1859 = vsub.f32 %v1791, %v1830
        %v1860 = vsub.f32 %v1793, %v1832
        %v1861 = vsub.f32 %v1796, %v1834
        %v1862 = vsub.f32 %v1798, %v1836
        %v1863 = vsub.f32 %v1801, %v1838
        %v1864 = vsub.f32 %v1803, %v1840
        %v1865 = vsub.f32 %v1806, %v1842
        %v1866 = vsub.f32 %v1808, %v1844
        %v1867 = vsub.f32 %v1811, %v1846
        %v1868 = vsub.f32 %v1813, %v1848
        %v1869 = vsub.f32 %v1816, %v1850
        %v1870 = vsub.f32 %v1818, %v1852
        %v1871 = vsub.f32 %v1821, %v1854
        %v1872 = vsub.f32 %v1823, %v1856
        %v1873 = vmul.f32 %v1857, 1.442695
        %v1874 = vpow.pop %v1873
        %v1875 = vmul.f32 %v1858, 1.442695
        %v1876 = vpow.pop %v1875
        %v1877 = vmul.f32 %v1859, 1.442695
        %v1878 = vpow.pop %v1877
        %v1879 = vmul.f32 %v1860, 1.442695
        %v1880 = vpow.pop %v1879
        %v1881 = vmul.f32 %v1861, 1.442695
        %v1882 = vpow.pop %v1881
        %v1883 = vmul.f32 %v1862, 1.442695
        %v1884 = vpow.pop %v1883
        %v1885 = vmul.f32 %v1863, 1.442695
        %v1886 = vpow.pop %v1885
        %v1887 = vmul.f32 %v1864, 1.442695
        %v1888 = vpow.pop %v1887
        %v1889 = vmul.f32 %v1865, 1.442695
        %v1890 = vpow.pop %v1889
        %v1891 = vmul.f32 %v1866, 1.442695
        %v1892 = vpow.pop %v1891
        %v1893 = vmul.f32 %v1867, 1.442695
        %v1894 = vpow.pop %v1893
        %v1895 = vmul.f32 %v1868, 1.442695
        %v1896 = vpow.pop %v1895
        %v1897 = vmul.f32 %v1869, 1.442695
        %v1898 = vpow.pop %v1897
        %v1899 = vmul.f32 %v1870, 1.442695
        %v1900 = vpow.pop %v1899
        %v1901 = vmul.f32 %v1871, 1.442695
        %v1902 = vpow.pop %v1901
        %v1903 = vmul.f32 %v1872, 1.442695
        %v1904 = vpow.pop %v1903
        %1905 = vadd.xlane.f32.xlu0 %v1874
        %v1906 = vpop.xlane.xlu0 %1905
        %1907 = vadd.xlane.f32.xlu0 %v1876
        %v1908 = vpop.xlane.xlu0 %1907
        %1909 = vadd.xlane.f32.xlu0 %v1878
        %v1910 = vpop.xlane.xlu0 %1909
        %1911 = vadd.xlane.f32.xlu0 %v1880
        %v1912 = vpop.xlane.xlu0 %1911
        %1913 = vadd.xlane.f32.xlu0 %v1882
        %v1914 = vpop.xlane.xlu0 %1913
        %1915 = vadd.xlane.f32.xlu0 %v1884
        %v1916 = vpop.xlane.xlu0 %1915
        %1917 = vadd.xlane.f32.xlu0 %v1886
        %v1918 = vpop.xlane.xlu0 %1917
        %1919 = vadd.xlane.f32.xlu0 %v1888
        %v1920 = vpop.xlane.xlu0 %1919
        %1921 = vadd.xlane.f32.xlu0 %v1890
        %v1922 = vpop.xlane.xlu0 %1921
        %1923 = vadd.xlane.f32.xlu0 %v1892
        %v1924 = vpop.xlane.xlu0 %1923
        %1925 = vadd.xlane.f32.xlu0 %v1894
        %v1926 = vpop.xlane.xlu0 %1925
        %1927 = vadd.xlane.f32.xlu0 %v1896
        %v1928 = vpop.xlane.xlu0 %1927
        %1929 = vadd.xlane.f32.xlu0 %v1898
        %v1930 = vpop.xlane.xlu0 %1929
        %1931 = vadd.xlane.f32.xlu0 %v1900
        %v1932 = vpop.xlane.xlu0 %1931
        %1933 = vadd.xlane.f32.xlu0 %v1902
        %v1934 = vpop.xlane.xlu0 %1933
        %1935 = vadd.xlane.f32.xlu0 %v1904
        %v1936 = vpop.xlane.xlu0 %1935
        %v1937 = vrcp.pop %v1906
        %v1938 = vrcp.pop %v1908
        %v1939 = vrcp.pop %v1910
        %v1940 = vrcp.pop %v1912
        %v1941 = vrcp.pop %v1914
        %v1942 = vrcp.pop %v1916
        %v1943 = vrcp.pop %v1918
        %v1944 = vrcp.pop %v1920
        %v1945 = vrcp.pop %v1922
        %v1946 = vrcp.pop %v1924
        %v1947 = vrcp.pop %v1926
        %v1948 = vrcp.pop %v1928
        %v1949 = vrcp.pop %v1930
        %v1950 = vrcp.pop %v1932
        %v1951 = vrcp.pop %v1934
        %v1952 = vrcp.pop %v1936
        %v1953 = vmul.f32 %v1874, %v1937
        %v1954 = vmul.f32 %v1876, %v1938
        %v1955 = vmul.f32 %v1878, %v1939
        %v1956 = vmul.f32 %v1880, %v1940
        %v1957 = vmul.f32 %v1882, %v1941
        %v1958 = vmul.f32 %v1884, %v1942
        %v1959 = vmul.f32 %v1886, %v1943
        %v1960 = vmul.f32 %v1888, %v1944
        %v1961 = vmul.f32 %v1890, %v1945
        %v1962 = vmul.f32 %v1892, %v1946
        %v1963 = vmul.f32 %v1894, %v1947
        %v1964 = vmul.f32 %v1896, %v1948
        %v1965 = vmul.f32 %v1898, %v1949
        %v1966 = vmul.f32 %v1900, %v1950
        %v1967 = vmul.f32 %v1902, %v1951
        %v1968 = vmul.f32 %v1904, %v1952
        %v1969 = vpack.c.bf16 %v1954, %v1953
        %v1970 = vpack.c.bf16 %v1956, %v1955
        %v1971 = vpack.c.bf16 %v1958, %v1957
        %v1972 = vpack.c.bf16 %v1960, %v1959
        %v1973 = vpack.c.bf16 %v1962, %v1961
        %v1974 = vpack.c.bf16 %v1964, %v1963
        %v1975 = vpack.c.bf16 %v1966, %v1965
        %v1976 = vpack.c.bf16 %v1968, %v1967
        %1977 = vrot.lane.b32.xlu0 %v996, 48
        %v1978 = vpop.permute.xlu0 %1977
        %1979 = vrot.lane.b32.xlu0 %v997, 48
        %v1980 = vpop.permute.xlu0 %1979
        %1981 = vrot.lane.b32.xlu0 %v998, 48
        %v1982 = vpop.permute.xlu0 %1981
        %1983 = vrot.lane.b32.xlu0 %v999, 48
        %v1984 = vpop.permute.xlu0 %1983
        %1985 = vrot.lane.b32.xlu0 %v1000, 48
        %v1986 = vpop.permute.xlu0 %1985
        %1987 = vrot.lane.b32.xlu0 %v1001, 48
        %v1988 = vpop.permute.xlu0 %1987
        %1989 = vrot.lane.b32.xlu0 %v1002, 48
        %v1990 = vpop.permute.xlu0 %1989
        %1991 = vrot.lane.b32.xlu0 %v1003, 48
        %v1992 = vpop.permute.xlu0 %1991
        %2001 = vmatpush.bf16.msra.mxu0 %v1992
        %2002 = vmatpush.bf16.msra.mxu0 %v1990
        %2003 = vmatpush.bf16.msra.mxu0 %v1988
        %2004 = vmatpush.bf16.msra.mxu0 %v1986
        %2005 = vmatpush.bf16.msra.mxu0 %v1984
        %2006 = vmatpush.bf16.msra.mxu0 %v1982
        %2007 = vmatpush.bf16.msra.mxu0 %v1980
        %2008 = vmatpush.bf16.msra.mxu0 %v1978
        %2009 = vmatmul.bf16.gmra.mxu0 %v1969
        %v2010 = vpop.f32.mrf.mxu0
        %v2011 = vadd.f32 0.0, %v2010
        %v2012 = vpop.f32.mrf.mxu0
        %v2013 = vadd.f32 0.0, %v2012
        %2014 = vmatmul.bf16.gmra.mxu0 %v1970
        %v2015 = vpop.f32.mrf.mxu0
        %v2016 = vadd.f32 0.0, %v2015
        %v2017 = vpop.f32.mrf.mxu0
        %v2018 = vadd.f32 0.0, %v2017
        %2019 = vmatmul.bf16.gmra.mxu0 %v1971
        %v2020 = vpop.f32.mrf.mxu0
        %v2021 = vadd.f32 0.0, %v2020
        %v2022 = vpop.f32.mrf.mxu0
        %v2023 = vadd.f32 0.0, %v2022
        %2024 = vmatmul.bf16.gmra.mxu0 %v1972
        %v2025 = vpop.f32.mrf.mxu0
        %v2026 = vadd.f32 0.0, %v2025
        %v2027 = vpop.f32.mrf.mxu0
        %v2028 = vadd.f32 0.0, %v2027
        %2029 = vmatmul.bf16.gmra.mxu0 %v1973
        %v2030 = vpop.f32.mrf.mxu0
        %v2031 = vadd.f32 0.0, %v2030
        %v2032 = vpop.f32.mrf.mxu0
        %v2033 = vadd.f32 0.0, %v2032
        %2034 = vmatmul.bf16.gmra.mxu0 %v1974
        %v2035 = vpop.f32.mrf.mxu0
        %v2036 = vadd.f32 0.0, %v2035
        %v2037 = vpop.f32.mrf.mxu0
        %v2038 = vadd.f32 0.0, %v2037
        %2039 = vmatmul.bf16.gmra.mxu0 %v1975
        %v2040 = vpop.f32.mrf.mxu0
        %v2041 = vadd.f32 0.0, %v2040
        %v2042 = vpop.f32.mrf.mxu0
        %v2043 = vadd.f32 0.0, %v2042
        %2044 = vmatmul.bf16.gmra.mxu0 %v1976
        %v2045 = vpop.f32.mrf.mxu0
        %v2046 = vadd.f32 0.0, %v2045
        %v2047 = vpop.f32.mrf.mxu0
        %v2048 = vadd.f32 0.0, %v2047
        %2049 = vdwg.mxu0
        %2050 = vrot.lane.b32.xlu0 %v996, 104
        %v2051 = vpop.permute.xlu0 %2050
        %2052 = vrot.lane.b32.xlu0 %v997, 104
        %v2053 = vpop.permute.xlu0 %2052
        %2054 = vrot.lane.b32.xlu0 %v998, 104
        %v2055 = vpop.permute.xlu0 %2054
        %2056 = vrot.lane.b32.xlu0 %v999, 104
        %v2057 = vpop.permute.xlu0 %2056
        %2058 = vrot.lane.b32.xlu0 %v1000, 104
        %v2059 = vpop.permute.xlu0 %2058
        %2060 = vrot.lane.b32.xlu0 %v1001, 104
        %v2061 = vpop.permute.xlu0 %2060
        %2062 = vrot.lane.b32.xlu0 %v1002, 104
        %v2063 = vpop.permute.xlu0 %2062
        %2064 = vrot.lane.b32.xlu0 %v1003, 104
        %v2065 = vpop.permute.xlu0 %2064
        %2066 = vrot.lane.b32.xlu0 %v996, 72
        %v2067 = vpop.permute.xlu0 %2066
        %2068 = vrot.lane.b32.xlu0 %v997, 72
        %v2069 = vpop.permute.xlu0 %2068
        %2070 = vrot.lane.b32.xlu0 %v998, 72
        %v2071 = vpop.permute.xlu0 %2070
        %2072 = vrot.lane.b32.xlu0 %v999, 72
        %v2073 = vpop.permute.xlu0 %2072
        %2074 = vrot.lane.b32.xlu0 %v1000, 72
        %v2075 = vpop.permute.xlu0 %2074
        %2076 = vrot.lane.b32.xlu0 %v1001, 72
        %v2077 = vpop.permute.xlu0 %2076
        %2078 = vrot.lane.b32.xlu0 %v1002, 72
        %v2079 = vpop.permute.xlu0 %2078
        %2080 = vrot.lane.b32.xlu0 %v1003, 72
        %v2081 = vpop.permute.xlu0 %2080
        %v2083 = vsel %vm363, %v2051, 0
        %v2086 = vsel %vm363, %v2053, 0
        %v2089 = vsel %vm363, %v2055, 0
        %v2092 = vsel %vm363, %v2057, 0
        %v2095 = vsel %vm363, %v2059, 0
        %v2098 = vsel %vm363, %v2061, 0
        %v2101 = vsel %vm363, %v2063, 0
        %v2104 = vsel %vm363, %v2065, 0
        %v2107 = vsel %vm363, %v2067, 0
        %v2110 = vsel %vm363, %v2069, 0
        %v2113 = vsel %vm363, %v2071, 0
        %v2116 = vsel %vm363, %v2073, 0
        %v2119 = vsel %vm363, %v2075, 0
        %v2122 = vsel %vm363, %v2077, 0
        %v2125 = vsel %vm363, %v2079, 0
        %v2128 = vsel %vm363, %v2081, 0
        %2130 = vmatpush.bf16.xpose.msra.mxu0 %v2128
        %2131 = vmatpush.bf16.xpose.msra.mxu0 %v2125
        %2132 = vmatpush.bf16.xpose.msra.mxu0 %v2122
        %2133 = vmatpush.bf16.xpose.msra.mxu0 %v2119
        %2134 = vmatpush.bf16.xpose.msra.mxu0 %v2116
        %2135 = vmatpush.bf16.xpose.msra.mxu0 %v2113
        %2136 = vmatpush.bf16.xpose.msra.mxu0 %v2110
        %2137 = vmatpush.bf16.xpose.msra.mxu0 %v2107
        %2138 = vmatmul.bf16.gmra.mxu0 %v2083
        %v2139 = vpop.f32.mrf.mxu0
        %v2140 = vadd.f32 %v948, %v2139
        %v2141 = vpop.f32.mrf.mxu0
        %v2142 = vadd.f32 %v949, %v2141
        %2143 = vmatmul.bf16.gmra.mxu0 %v2086
        %v2144 = vpop.f32.mrf.mxu0
        %v2145 = vadd.f32 %v950, %v2144
        %v2146 = vpop.f32.mrf.mxu0
        %v2147 = vadd.f32 %v951, %v2146
        %2148 = vmatmul.bf16.gmra.mxu0 %v2089
        %v2149 = vpop.f32.mrf.mxu0
        %v2150 = vadd.f32 %v952, %v2149
        %v2151 = vpop.f32.mrf.mxu0
        %v2152 = vadd.f32 %v953, %v2151
        %2153 = vmatmul.bf16.gmra.mxu0 %v2092
        %v2154 = vpop.f32.mrf.mxu0
        %v2155 = vadd.f32 %v954, %v2154
        %v2156 = vpop.f32.mrf.mxu0
        %v2157 = vadd.f32 %v955, %v2156
        %2158 = vmatmul.bf16.gmra.mxu0 %v2095
        %v2159 = vpop.f32.mrf.mxu0
        %v2160 = vadd.f32 %v956, %v2159
        %v2161 = vpop.f32.mrf.mxu0
        %v2162 = vadd.f32 %v957, %v2161
        %2163 = vmatmul.bf16.gmra.mxu0 %v2098
        %v2164 = vpop.f32.mrf.mxu0
        %v2165 = vadd.f32 %v958, %v2164
        %v2166 = vpop.f32.mrf.mxu0
        %v2167 = vadd.f32 %v959, %v2166
        %2168 = vmatmul.bf16.gmra.mxu0 %v2101
        %v2169 = vpop.f32.mrf.mxu0
        %v2170 = vadd.f32 %v960, %v2169
        %v2171 = vpop.f32.mrf.mxu0
        %v2172 = vadd.f32 %v961, %v2171
        %2173 = vmatmul.bf16.gmra.mxu0 %v2104
        %v2174 = vpop.f32.mrf.mxu0
        %v2175 = vadd.f32 %v962, %v2174
        %v2176 = vpop.f32.mrf.mxu0
        %v2177 = vadd.f32 %v963, %v2176
        %2178 = vdwg.mxu0
        %2179 = vmax.xlane.f32.xlu0 %v2140
        %v2180 = vpop.xlane.xlu0 %2179
        %2181 = vmax.xlane.f32.xlu0 %v2142
        %v2182 = vpop.xlane.xlu0 %2181
        %2183 = vmax.xlane.f32.xlu0 %v2145
        %v2184 = vpop.xlane.xlu0 %2183
        %2185 = vmax.xlane.f32.xlu0 %v2147
        %v2186 = vpop.xlane.xlu0 %2185
        %2187 = vmax.xlane.f32.xlu0 %v2150
        %v2188 = vpop.xlane.xlu0 %2187
        %2189 = vmax.xlane.f32.xlu0 %v2152
        %v2190 = vpop.xlane.xlu0 %2189
        %2191 = vmax.xlane.f32.xlu0 %v2155
        %v2192 = vpop.xlane.xlu0 %2191
        %2193 = vmax.xlane.f32.xlu0 %v2157
        %v2194 = vpop.xlane.xlu0 %2193
        %2195 = vmax.xlane.f32.xlu0 %v2160
        %v2196 = vpop.xlane.xlu0 %2195
        %2197 = vmax.xlane.f32.xlu0 %v2162
        %v2198 = vpop.xlane.xlu0 %2197
        %2199 = vmax.xlane.f32.xlu0 %v2165
        %v2200 = vpop.xlane.xlu0 %2199
        %2201 = vmax.xlane.f32.xlu0 %v2167
        %v2202 = vpop.xlane.xlu0 %2201
        %2203 = vmax.xlane.f32.xlu0 %v2170
        %v2204 = vpop.xlane.xlu0 %2203
        %2205 = vmax.xlane.f32.xlu0 %v2172
        %v2206 = vpop.xlane.xlu0 %2205
        %2207 = vmax.xlane.f32.xlu0 %v2175
        %v2208 = vpop.xlane.xlu0 %2207
        %2209 = vmax.xlane.f32.xlu0 %v2177
        %v2210 = vpop.xlane.xlu0 %2209
        %v2211 = vsub.f32 %v2140, %v2180
        %v2212 = vsub.f32 %v2142, %v2182
        %v2213 = vsub.f32 %v2145, %v2184
        %v2214 = vsub.f32 %v2147, %v2186
        %v2215 = vsub.f32 %v2150, %v2188
        %v2216 = vsub.f32 %v2152, %v2190
        %v2217 = vsub.f32 %v2155, %v2192
        %v2218 = vsub.f32 %v2157, %v2194
        %v2219 = vsub.f32 %v2160, %v2196
        %v2220 = vsub.f32 %v2162, %v2198
        %v2221 = vsub.f32 %v2165, %v2200
        %v2222 = vsub.f32 %v2167, %v2202
        %v2223 = vsub.f32 %v2170, %v2204
        %v2224 = vsub.f32 %v2172, %v2206
        %v2225 = vsub.f32 %v2175, %v2208
        %v2226 = vsub.f32 %v2177, %v2210
        %v2227 = vmul.f32 %v2211, 1.442695
        %v2228 = vpow.pop %v2227
        %v2229 = vmul.f32 %v2212, 1.442695
        %v2230 = vpow.pop %v2229
        %v2231 = vmul.f32 %v2213, 1.442695
        %v2232 = vpow.pop %v2231
        %v2233 = vmul.f32 %v2214, 1.442695
        %v2234 = vpow.pop %v2233
        %v2235 = vmul.f32 %v2215, 1.442695
        %v2236 = vpow.pop %v2235
        %v2237 = vmul.f32 %v2216, 1.442695
        %v2238 = vpow.pop %v2237
        %v2239 = vmul.f32 %v2217, 1.442695
        %v2240 = vpow.pop %v2239
        %v2241 = vmul.f32 %v2218, 1.442695
        %v2242 = vpow.pop %v2241
        %v2243 = vmul.f32 %v2219, 1.442695
        %v2244 = vpow.pop %v2243
        %v2245 = vmul.f32 %v2220, 1.442695
        %v2246 = vpow.pop %v2245
        %v2247 = vmul.f32 %v2221, 1.442695
        %v2248 = vpow.pop %v2247
        %v2249 = vmul.f32 %v2222, 1.442695
        %v2250 = vpow.pop %v2249
        %v2251 = vmul.f32 %v2223, 1.442695
        %v2252 = vpow.pop %v2251
        %v2253 = vmul.f32 %v2224, 1.442695
        %v2254 = vpow.pop %v2253
        %v2255 = vmul.f32 %v2225, 1.442695
        %v2256 = vpow.pop %v2255
        %v2257 = vmul.f32 %v2226, 1.442695
        %v2258 = vpow.pop %v2257
        %2259 = vadd.xlane.f32.xlu0 %v2228
        %v2260 = vpop.xlane.xlu0 %2259
        %2261 = vadd.xlane.f32.xlu0 %v2230
        %v2262 = vpop.xlane.xlu0 %2261
        %2263 = vadd.xlane.f32.xlu0 %v2232
        %v2264 = vpop.xlane.xlu0 %2263
        %2265 = vadd.xlane.f32.xlu0 %v2234
        %v2266 = vpop.xlane.xlu0 %2265
        %2267 = vadd.xlane.f32.xlu0 %v2236
        %v2268 = vpop.xlane.xlu0 %2267
        %2269 = vadd.xlane.f32.xlu0 %v2238
        %v2270 = vpop.xlane.xlu0 %2269
        %2271 = vadd.xlane.f32.xlu0 %v2240
        %v2272 = vpop.xlane.xlu0 %2271
        %2273 = vadd.xlane.f32.xlu0 %v2242
        %v2274 = vpop.xlane.xlu0 %2273
        %2275 = vadd.xlane.f32.xlu0 %v2244
        %v2276 = vpop.xlane.xlu0 %2275
        %2277 = vadd.xlane.f32.xlu0 %v2246
        %v2278 = vpop.xlane.xlu0 %2277
        %2279 = vadd.xlane.f32.xlu0 %v2248
        %v2280 = vpop.xlane.xlu0 %2279
        %2281 = vadd.xlane.f32.xlu0 %v2250
        %v2282 = vpop.xlane.xlu0 %2281
        %2283 = vadd.xlane.f32.xlu0 %v2252
        %v2284 = vpop.xlane.xlu0 %2283
        %2285 = vadd.xlane.f32.xlu0 %v2254
        %v2286 = vpop.xlane.xlu0 %2285
        %2287 = vadd.xlane.f32.xlu0 %v2256
        %v2288 = vpop.xlane.xlu0 %2287
        %2289 = vadd.xlane.f32.xlu0 %v2258
        %v2290 = vpop.xlane.xlu0 %2289
        %v2291 = vrcp.pop %v2260
        %v2292 = vrcp.pop %v2262
        %v2293 = vrcp.pop %v2264
        %v2294 = vrcp.pop %v2266
        %v2295 = vrcp.pop %v2268
        %v2296 = vrcp.pop %v2270
        %v2297 = vrcp.pop %v2272
        %v2298 = vrcp.pop %v2274
        %v2299 = vrcp.pop %v2276
        %v2300 = vrcp.pop %v2278
        %v2301 = vrcp.pop %v2280
        %v2302 = vrcp.pop %v2282
        %v2303 = vrcp.pop %v2284
        %v2304 = vrcp.pop %v2286
        %v2305 = vrcp.pop %v2288
        %v2306 = vrcp.pop %v2290
        %v2307 = vmul.f32 %v2228, %v2291
        %v2308 = vmul.f32 %v2230, %v2292
        %v2309 = vmul.f32 %v2232, %v2293
        %v2310 = vmul.f32 %v2234, %v2294
        %v2311 = vmul.f32 %v2236, %v2295
        %v2312 = vmul.f32 %v2238, %v2296
        %v2313 = vmul.f32 %v2240, %v2297
        %v2314 = vmul.f32 %v2242, %v2298
        %v2315 = vmul.f32 %v2244, %v2299
        %v2316 = vmul.f32 %v2246, %v2300
        %v2317 = vmul.f32 %v2248, %v2301
        %v2318 = vmul.f32 %v2250, %v2302
        %v2319 = vmul.f32 %v2252, %v2303
        %v2320 = vmul.f32 %v2254, %v2304
        %v2321 = vmul.f32 %v2256, %v2305
        %v2322 = vmul.f32 %v2258, %v2306
        %v2323 = vpack.c.bf16 %v2308, %v2307
        %v2324 = vpack.c.bf16 %v2310, %v2309
        %v2325 = vpack.c.bf16 %v2312, %v2311
        %v2326 = vpack.c.bf16 %v2314, %v2313
        %v2327 = vpack.c.bf16 %v2316, %v2315
        %v2328 = vpack.c.bf16 %v2318, %v2317
        %v2329 = vpack.c.bf16 %v2320, %v2319
        %v2330 = vpack.c.bf16 %v2322, %v2321
        %2331 = vrot.lane.b32.xlu0 %v996, 40
        %v2332 = vpop.permute.xlu0 %2331
        %2333 = vrot.lane.b32.xlu0 %v997, 40
        %v2334 = vpop.permute.xlu0 %2333
        %2335 = vrot.lane.b32.xlu0 %v998, 40
        %v2336 = vpop.permute.xlu0 %2335
        %2337 = vrot.lane.b32.xlu0 %v999, 40
        %v2338 = vpop.permute.xlu0 %2337
        %2339 = vrot.lane.b32.xlu0 %v1000, 40
        %v2340 = vpop.permute.xlu0 %2339
        %2341 = vrot.lane.b32.xlu0 %v1001, 40
        %v2342 = vpop.permute.xlu0 %2341
        %2343 = vrot.lane.b32.xlu0 %v1002, 40
        %v2344 = vpop.permute.xlu0 %2343
        %2345 = vrot.lane.b32.xlu0 %v1003, 40
        %v2346 = vpop.permute.xlu0 %2345
        %2355 = vmatpush.bf16.msra.mxu0 %v2346
        %2356 = vmatpush.bf16.msra.mxu0 %v2344
        %2357 = vmatpush.bf16.msra.mxu0 %v2342
        %2358 = vmatpush.bf16.msra.mxu0 %v2340
        %2359 = vmatpush.bf16.msra.mxu0 %v2338
        %2360 = vmatpush.bf16.msra.mxu0 %v2336
        %2361 = vmatpush.bf16.msra.mxu0 %v2334
        %2362 = vmatpush.bf16.msra.mxu0 %v2332
        %2363 = vmatmul.bf16.gmra.mxu0 %v2323
        %v2364 = vpop.f32.mrf.mxu0
        %v2365 = vadd.f32 0.0, %v2364
        %v2366 = vpop.f32.mrf.mxu0
        %v2367 = vadd.f32 0.0, %v2366
        %2368 = vmatmul.bf16.gmra.mxu0 %v2324
        %v2369 = vpop.f32.mrf.mxu0
        %v2370 = vadd.f32 0.0, %v2369
        %v2371 = vpop.f32.mrf.mxu0
        %v2372 = vadd.f32 0.0, %v2371
        %2373 = vmatmul.bf16.gmra.mxu0 %v2325
        %v2374 = vpop.f32.mrf.mxu0
        %v2375 = vadd.f32 0.0, %v2374
        %v2376 = vpop.f32.mrf.mxu0
        %v2377 = vadd.f32 0.0, %v2376
        %2378 = vmatmul.bf16.gmra.mxu0 %v2326
        %v2379 = vpop.f32.mrf.mxu0
        %v2380 = vadd.f32 0.0, %v2379
        %v2381 = vpop.f32.mrf.mxu0
        %v2382 = vadd.f32 0.0, %v2381
        %2383 = vmatmul.bf16.gmra.mxu0 %v2327
        %v2384 = vpop.f32.mrf.mxu0
        %v2385 = vadd.f32 0.0, %v2384
        %v2386 = vpop.f32.mrf.mxu0
        %v2387 = vadd.f32 0.0, %v2386
        %2388 = vmatmul.bf16.gmra.mxu0 %v2328
        %v2389 = vpop.f32.mrf.mxu0
        %v2390 = vadd.f32 0.0, %v2389
        %v2391 = vpop.f32.mrf.mxu0
        %v2392 = vadd.f32 0.0, %v2391
        %2393 = vmatmul.bf16.gmra.mxu0 %v2329
        %v2394 = vpop.f32.mrf.mxu0
        %v2395 = vadd.f32 0.0, %v2394
        %v2396 = vpop.f32.mrf.mxu0
        %v2397 = vadd.f32 0.0, %v2396
        %2398 = vmatmul.bf16.gmra.mxu0 %v2330
        %v2399 = vpop.f32.mrf.mxu0
        %v2400 = vadd.f32 0.0, %v2399
        %v2401 = vpop.f32.mrf.mxu0
        %v2402 = vadd.f32 0.0, %v2401
        %2403 = vdwg.mxu0
        %2420 = vrot.lane.b32.xlu0 %v1657, 8
        %v2421 = vpop.permute.xlu0 %2420
        %2422 = vrot.lane.b32.xlu0 %v1659, 8
        %v2423 = vpop.permute.xlu0 %2422
        %2424 = vrot.lane.b32.xlu0 %v1662, 8
        %v2425 = vpop.permute.xlu0 %2424
        %2426 = vrot.lane.b32.xlu0 %v1664, 8
        %v2427 = vpop.permute.xlu0 %2426
        %2428 = vrot.lane.b32.xlu0 %v1667, 8
        %v2429 = vpop.permute.xlu0 %2428
        %2430 = vrot.lane.b32.xlu0 %v1669, 8
        %v2431 = vpop.permute.xlu0 %2430
        %2432 = vrot.lane.b32.xlu0 %v1672, 8
        %v2433 = vpop.permute.xlu0 %2432
        %2434 = vrot.lane.b32.xlu0 %v1674, 8
        %v2435 = vpop.permute.xlu0 %2434
        %2436 = vrot.lane.b32.xlu0 %v1677, 8
        %v2437 = vpop.permute.xlu0 %2436
        %2438 = vrot.lane.b32.xlu0 %v1679, 8
        %v2439 = vpop.permute.xlu0 %2438
        %2440 = vrot.lane.b32.xlu0 %v1682, 8
        %v2441 = vpop.permute.xlu0 %2440
        %2442 = vrot.lane.b32.xlu0 %v1684, 8
        %v2443 = vpop.permute.xlu0 %2442
        %2444 = vrot.lane.b32.xlu0 %v1687, 8
        %v2445 = vpop.permute.xlu0 %2444
        %2446 = vrot.lane.b32.xlu0 %v1689, 8
        %v2447 = vpop.permute.xlu0 %2446
        %2448 = vrot.lane.b32.xlu0 %v1692, 8
        %v2449 = vpop.permute.xlu0 %2448
        %2450 = vrot.lane.b32.xlu0 %v1694, 8
        %v2451 = vpop.permute.xlu0 %2450
        %2484 = vrot.lane.b32.xlu0 %v2011, 16
        %v2485 = vpop.permute.xlu0 %2484
        %2486 = vrot.lane.b32.xlu0 %v2013, 16
        %v2487 = vpop.permute.xlu0 %2486
        %2488 = vrot.lane.b32.xlu0 %v2016, 16
        %v2489 = vpop.permute.xlu0 %2488
        %2490 = vrot.lane.b32.xlu0 %v2018, 16
        %v2491 = vpop.permute.xlu0 %2490
        %2492 = vrot.lane.b32.xlu0 %v2021, 16
        %v2493 = vpop.permute.xlu0 %2492
        %2494 = vrot.lane.b32.xlu0 %v2023, 16
        %v2495 = vpop.permute.xlu0 %2494
        %2496 = vrot.lane.b32.xlu0 %v2026, 16
        %v2497 = vpop.permute.xlu0 %2496
        %2498 = vrot.lane.b32.xlu0 %v2028, 16
        %v2499 = vpop.permute.xlu0 %2498
        %2500 = vrot.lane.b32.xlu0 %v2031, 16
        %v2501 = vpop.permute.xlu0 %2500
        %2502 = vrot.lane.b32.xlu0 %v2033, 16
        %v2503 = vpop.permute.xlu0 %2502
        %2504 = vrot.lane.b32.xlu0 %v2036, 16
        %v2505 = vpop.permute.xlu0 %2504
        %2506 = vrot.lane.b32.xlu0 %v2038, 16
        %v2507 = vpop.permute.xlu0 %2506
        %2508 = vrot.lane.b32.xlu0 %v2041, 16
        %v2509 = vpop.permute.xlu0 %2508
        %2510 = vrot.lane.b32.xlu0 %v2043, 16
        %v2511 = vpop.permute.xlu0 %2510
        %2512 = vrot.lane.b32.xlu0 %v2046, 16
        %v2513 = vpop.permute.xlu0 %2512
        %2514 = vrot.lane.b32.xlu0 %v2048, 16
        %v2515 = vpop.permute.xlu0 %2514
        %2548 = vrot.lane.b32.xlu0 %v2365, 24
        %v2549 = vpop.permute.xlu0 %2548
        %2550 = vrot.lane.b32.xlu0 %v2367, 24
        %v2551 = vpop.permute.xlu0 %2550
        %2552 = vrot.lane.b32.xlu0 %v2370, 24
        %v2553 = vpop.permute.xlu0 %2552
        %2554 = vrot.lane.b32.xlu0 %v2372, 24
        %v2555 = vpop.permute.xlu0 %2554
        %2556 = vrot.lane.b32.xlu0 %v2375, 24
        %v2557 = vpop.permute.xlu0 %2556
        %2558 = vrot.lane.b32.xlu0 %v2377, 24
        %v2559 = vpop.permute.xlu0 %2558
        %2560 = vrot.lane.b32.xlu0 %v2380, 24
        %v2561 = vpop.permute.xlu0 %2560
        %2562 = vrot.lane.b32.xlu0 %v2382, 24
        %v2563 = vpop.permute.xlu0 %2562
        %2564 = vrot.lane.b32.xlu0 %v2385, 24
        %v2565 = vpop.permute.xlu0 %2564
        %2566 = vrot.lane.b32.xlu0 %v2387, 24
        %v2567 = vpop.permute.xlu0 %2566
        %2568 = vrot.lane.b32.xlu0 %v2390, 24
        %v2569 = vpop.permute.xlu0 %2568
        %2570 = vrot.lane.b32.xlu0 %v2392, 24
        %v2571 = vpop.permute.xlu0 %2570
        %2572 = vrot.lane.b32.xlu0 %v2395, 24
        %v2573 = vpop.permute.xlu0 %2572
        %2574 = vrot.lane.b32.xlu0 %v2397, 24
        %v2575 = vpop.permute.xlu0 %2574
        %2576 = vrot.lane.b32.xlu0 %v2400, 24
        %v2577 = vpop.permute.xlu0 %2576
        %2578 = vrot.lane.b32.xlu0 %v2402, 24
        %v2579 = vpop.permute.xlu0 %2578
        %v2596 = vsel %vm363, %v1303, %v2421
        %v2597 = vsel %vm363, %v1305, %v2423
        %v2598 = vsel %vm363, %v1308, %v2425
        %v2599 = vsel %vm363, %v1310, %v2427
        %v2600 = vsel %vm363, %v1313, %v2429
        %v2601 = vsel %vm363, %v1315, %v2431
        %v2602 = vsel %vm363, %v1318, %v2433
        %v2603 = vsel %vm363, %v1320, %v2435
        %v2604 = vsel %vm363, %v1323, %v2437
        %v2605 = vsel %vm363, %v1325, %v2439
        %v2606 = vsel %vm363, %v1328, %v2441
        %v2607 = vsel %vm363, %v1330, %v2443
        %v2608 = vsel %vm363, %v1333, %v2445
        %v2609 = vsel %vm363, %v1335, %v2447
        %v2610 = vsel %vm363, %v1338, %v2449
        %v2611 = vsel %vm363, %v1340, %v2451
        %vm2612 = vcmask 130048
        %v2613 = vsel %vm2612, %v2596, %v2485
        %v2614 = vsel %vm2612, %v2597, %v2487
        %v2615 = vsel %vm2612, %v2598, %v2489
        %v2616 = vsel %vm2612, %v2599, %v2491
        %v2617 = vsel %vm2612, %v2600, %v2493
        %v2618 = vsel %vm2612, %v2601, %v2495
        %v2619 = vsel %vm2612, %v2602, %v2497
        %v2620 = vsel %vm2612, %v2603, %v2499
        %v2621 = vsel %vm2612, %v2604, %v2501
        %v2622 = vsel %vm2612, %v2605, %v2503
        %v2623 = vsel %vm2612, %v2606, %v2505
        %v2624 = vsel %vm2612, %v2607, %v2507
        %v2625 = vsel %vm2612, %v2608, %v2509
        %v2626 = vsel %vm2612, %v2609, %v2511
        %v2627 = vsel %vm2612, %v2610, %v2513
        %v2628 = vsel %vm2612, %v2611, %v2515
        %vm2629 = vcmask 195584
        %v2630 = vsel %vm2629, %v2613, %v2549
        %v2631 = vsel %vm2629, %v2614, %v2551
        %v2632 = vsel %vm2629, %v2615, %v2553
        %v2633 = vsel %vm2629, %v2616, %v2555
        %v2634 = vsel %vm2629, %v2617, %v2557
        %v2635 = vsel %vm2629, %v2618, %v2559
        %v2636 = vsel %vm2629, %v2619, %v2561
        %v2637 = vsel %vm2629, %v2620, %v2563
        %v2638 = vsel %vm2629, %v2621, %v2565
        %v2639 = vsel %vm2629, %v2622, %v2567
        %v2640 = vsel %vm2629, %v2623, %v2569
        %v2641 = vsel %vm2629, %v2624, %v2571
        %v2642 = vsel %vm2629, %v2625, %v2573
        %v2643 = vsel %vm2629, %v2626, %v2575
        %v2644 = vsel %vm2629, %v2627, %v2577
        %v2645 = vsel %vm2629, %v2628, %v2579
        %v2646 = vsel %vm441, %v2630, 0.0
        %2647 = vadd.xlane.f32.xlu0 %v2646
        %v2648 = vpop.xlane.xlu0 %2647
        %v2649 = vsel %vm441, %v2631, 0.0
        %2650 = vadd.xlane.f32.xlu0 %v2649
        %v2651 = vpop.xlane.xlu0 %2650
        %v2652 = vsel %vm441, %v2632, 0.0
        %2653 = vadd.xlane.f32.xlu0 %v2652
        %v2654 = vpop.xlane.xlu0 %2653
        %v2655 = vsel %vm441, %v2633, 0.0
        %2656 = vadd.xlane.f32.xlu0 %v2655
        %v2657 = vpop.xlane.xlu0 %2656
        %v2658 = vsel %vm441, %v2634, 0.0
        %2659 = vadd.xlane.f32.xlu0 %v2658
        %v2660 = vpop.xlane.xlu0 %2659
        %v2661 = vsel %vm441, %v2635, 0.0
        %2662 = vadd.xlane.f32.xlu0 %v2661
        %v2663 = vpop.xlane.xlu0 %2662
        %v2664 = vsel %vm441, %v2636, 0.0
        %2665 = vadd.xlane.f32.xlu0 %v2664
        %v2666 = vpop.xlane.xlu0 %2665
        %v2667 = vsel %vm441, %v2637, 0.0
        %2668 = vadd.xlane.f32.xlu0 %v2667
        %v2669 = vpop.xlane.xlu0 %2668
        %v2670 = vsel %vm441, %v2638, 0.0
        %2671 = vadd.xlane.f32.xlu0 %v2670
        %v2672 = vpop.xlane.xlu0 %2671
        %v2673 = vsel %vm441, %v2639, 0.0
        %2674 = vadd.xlane.f32.xlu0 %v2673
        %v2675 = vpop.xlane.xlu0 %2674
        %v2676 = vsel %vm441, %v2640, 0.0
        %2677 = vadd.xlane.f32.xlu0 %v2676
        %v2678 = vpop.xlane.xlu0 %2677
        %v2679 = vsel %vm441, %v2641, 0.0
        %2680 = vadd.xlane.f32.xlu0 %v2679
        %v2681 = vpop.xlane.xlu0 %2680
        %v2682 = vsel %vm441, %v2642, 0.0
        %2683 = vadd.xlane.f32.xlu0 %v2682
        %v2684 = vpop.xlane.xlu0 %2683
        %v2685 = vsel %vm441, %v2643, 0.0
        %2686 = vadd.xlane.f32.xlu0 %v2685
        %v2687 = vpop.xlane.xlu0 %2686
        %v2688 = vsel %vm441, %v2644, 0.0
        %2689 = vadd.xlane.f32.xlu0 %v2688
        %v2690 = vpop.xlane.xlu0 %2689
        %v2691 = vsel %vm441, %v2645, 0.0
        %2692 = vadd.xlane.f32.xlu0 %v2691
        %v2693 = vpop.xlane.xlu0 %2692
        %v2694 = vmul.f32 %v2648, %v496
        %v2695 = vmul.f32 %v2651, %v496
        %v2696 = vmul.f32 %v2654, %v496
        %v2697 = vmul.f32 %v2657, %v496
        %v2698 = vmul.f32 %v2660, %v496
        %v2699 = vmul.f32 %v2663, %v496
        %v2700 = vmul.f32 %v2666, %v496
        %v2701 = vmul.f32 %v2669, %v496
        %v2702 = vmul.f32 %v2672, %v496
        %v2703 = vmul.f32 %v2675, %v496
        %v2704 = vmul.f32 %v2678, %v496
        %v2705 = vmul.f32 %v2681, %v496
        %v2706 = vmul.f32 %v2684, %v496
        %v2707 = vmul.f32 %v2687, %v496
        %v2708 = vmul.f32 %v2690, %v496
        %v2709 = vmul.f32 %v2693, %v496
        %v2710 = vsub.f32 %v2630, %v2694
        %v2711 = vsub.f32 %v2631, %v2695
        %v2712 = vsub.f32 %v2632, %v2696
        %v2713 = vsub.f32 %v2633, %v2697
        %v2714 = vsub.f32 %v2634, %v2698
        %v2715 = vsub.f32 %v2635, %v2699
        %v2716 = vsub.f32 %v2636, %v2700
        %v2717 = vsub.f32 %v2637, %v2701
        %v2718 = vsub.f32 %v2638, %v2702
        %v2719 = vsub.f32 %v2639, %v2703
        %v2720 = vsub.f32 %v2640, %v2704
        %v2721 = vsub.f32 %v2641, %v2705
        %v2722 = vsub.f32 %v2642, %v2706
        %v2723 = vsub.f32 %v2643, %v2707
        %v2724 = vsub.f32 %v2644, %v2708
        %v2725 = vsub.f32 %v2645, %v2709
        %v2726 = vmul.f32 %v2710, %v2710
        %v2727 = vmul.f32 %v2711, %v2711
        %v2728 = vmul.f32 %v2712, %v2712
        %v2729 = vmul.f32 %v2713, %v2713
        %v2730 = vmul.f32 %v2714, %v2714
        %v2731 = vmul.f32 %v2715, %v2715
        %v2732 = vmul.f32 %v2716, %v2716
        %v2733 = vmul.f32 %v2717, %v2717
        %v2734 = vmul.f32 %v2718, %v2718
        %v2735 = vmul.f32 %v2719, %v2719
        %v2736 = vmul.f32 %v2720, %v2720
        %v2737 = vmul.f32 %v2721, %v2721
        %v2738 = vmul.f32 %v2722, %v2722
        %v2739 = vmul.f32 %v2723, %v2723
        %v2740 = vmul.f32 %v2724, %v2724
        %v2741 = vmul.f32 %v2725, %v2725
        %v2742 = vsel %vm441, %v2726, 0.0
        %2743 = vadd.xlane.f32.xlu0 %v2742
        %v2744 = vpop.xlane.xlu0 %2743
        %v2745 = vsel %vm441, %v2727, 0.0
        %2746 = vadd.xlane.f32.xlu0 %v2745
        %v2747 = vpop.xlane.xlu0 %2746
        %v2748 = vsel %vm441, %v2728, 0.0
        %2749 = vadd.xlane.f32.xlu0 %v2748
        %v2750 = vpop.xlane.xlu0 %2749
        %v2751 = vsel %vm441, %v2729, 0.0
        %2752 = vadd.xlane.f32.xlu0 %v2751
        %v2753 = vpop.xlane.xlu0 %2752
        %v2754 = vsel %vm441, %v2730, 0.0
        %2755 = vadd.xlane.f32.xlu0 %v2754
        %v2756 = vpop.xlane.xlu0 %2755
        %v2757 = vsel %vm441, %v2731, 0.0
        %2758 = vadd.xlane.f32.xlu0 %v2757
        %v2759 = vpop.xlane.xlu0 %2758
        %v2760 = vsel %vm441, %v2732, 0.0
        %2761 = vadd.xlane.f32.xlu0 %v2760
        %v2762 = vpop.xlane.xlu0 %2761
        %v2763 = vsel %vm441, %v2733, 0.0
        %2764 = vadd.xlane.f32.xlu0 %v2763
        %v2765 = vpop.xlane.xlu0 %2764
        %v2766 = vsel %vm441, %v2734, 0.0
        %2767 = vadd.xlane.f32.xlu0 %v2766
        %v2768 = vpop.xlane.xlu0 %2767
        %v2769 = vsel %vm441, %v2735, 0.0
        %2770 = vadd.xlane.f32.xlu0 %v2769
        %v2771 = vpop.xlane.xlu0 %2770
        %v2772 = vsel %vm441, %v2736, 0.0
        %2773 = vadd.xlane.f32.xlu0 %v2772
        %v2774 = vpop.xlane.xlu0 %2773
        %v2775 = vsel %vm441, %v2737, 0.0
        %2776 = vadd.xlane.f32.xlu0 %v2775
        %v2777 = vpop.xlane.xlu0 %2776
        %v2778 = vsel %vm441, %v2738, 0.0
        %2779 = vadd.xlane.f32.xlu0 %v2778
        %v2780 = vpop.xlane.xlu0 %2779
        %v2781 = vsel %vm441, %v2739, 0.0
        %2782 = vadd.xlane.f32.xlu0 %v2781
        %v2783 = vpop.xlane.xlu0 %2782
        %v2784 = vsel %vm441, %v2740, 0.0
        %2785 = vadd.xlane.f32.xlu0 %v2784
        %v2786 = vpop.xlane.xlu0 %2785
        %v2787 = vsel %vm441, %v2741, 0.0
        %2788 = vadd.xlane.f32.xlu0 %v2787
        %v2789 = vpop.xlane.xlu0 %2788
        %v2790 = vmul.f32 %v2744, %v496
        %v2791 = vmul.f32 %v2747, %v496
        %v2792 = vmul.f32 %v2750, %v496
        %v2793 = vmul.f32 %v2753, %v496
        %v2794 = vmul.f32 %v2756, %v496
        %v2795 = vmul.f32 %v2759, %v496
        %v2796 = vmul.f32 %v2762, %v496
        %v2797 = vmul.f32 %v2765, %v496
        %v2798 = vmul.f32 %v2768, %v496
        %v2799 = vmul.f32 %v2771, %v496
        %v2800 = vmul.f32 %v2774, %v496
        %v2801 = vmul.f32 %v2777, %v496
        %v2802 = vmul.f32 %v2780, %v496
        %v2803 = vmul.f32 %v2783, %v496
        %v2804 = vmul.f32 %v2786, %v496
        %v2805 = vmul.f32 %v2789, %v496
        %v2806 = vadd.f32 %v2790, 1e-05
        %v2807 = vadd.f32 %v2791, 1e-05
        %v2808 = vadd.f32 %v2792, 1e-05
        %v2809 = vadd.f32 %v2793, 1e-05
        %v2810 = vadd.f32 %v2794, 1e-05
        %v2811 = vadd.f32 %v2795, 1e-05
        %v2812 = vadd.f32 %v2796, 1e-05
        %v2813 = vadd.f32 %v2797, 1e-05
        %v2814 = vadd.f32 %v2798, 1e-05
        %v2815 = vadd.f32 %v2799, 1e-05
        %v2816 = vadd.f32 %v2800, 1e-05
        %v2817 = vadd.f32 %v2801, 1e-05
        %v2818 = vadd.f32 %v2802, 1e-05
        %v2819 = vadd.f32 %v2803, 1e-05
        %v2820 = vadd.f32 %v2804, 1e-05
        %v2821 = vadd.f32 %v2805, 1e-05
        %v2822 = vrsqrt.pop %v2806
        %v2823 = vmul.f32 %v2822, %v2806
        %v2824 = vmul.f32 %v2823, %v2822
        %v2825 = vmul.f32 0.5, %v2824
        %v2826 = vsub.f32 1.5, %v2825
        %v2827 = vmul.f32 %v2822, %v2826
        %vm2828 = vweird.f32 %v2806
        %vm2829 = vweird.f32 %v2822
        %vm2830 = vmor %vm2828, %vm2829
        %v2831 = vsel %vm2830, %v2822, %v2827
        %v2832 = vrsqrt.pop %v2807
        %v2833 = vmul.f32 %v2832, %v2807
        %v2834 = vmul.f32 %v2833, %v2832
        %v2835 = vmul.f32 0.5, %v2834
        %v2836 = vsub.f32 1.5, %v2835
        %v2837 = vmul.f32 %v2832, %v2836
        %vm2838 = vweird.f32 %v2807
        %vm2839 = vweird.f32 %v2832
        %vm2840 = vmor %vm2838, %vm2839
        %v2841 = vsel %vm2840, %v2832, %v2837
        %v2842 = vrsqrt.pop %v2808
        %v2843 = vmul.f32 %v2842, %v2808
        %v2844 = vmul.f32 %v2843, %v2842
        %v2845 = vmul.f32 0.5, %v2844
        %v2846 = vsub.f32 1.5, %v2845
        %v2847 = vmul.f32 %v2842, %v2846
        %vm2848 = vweird.f32 %v2808
        %vm2849 = vweird.f32 %v2842
        %vm2850 = vmor %vm2848, %vm2849
        %v2851 = vsel %vm2850, %v2842, %v2847
        %v2852 = vrsqrt.pop %v2809
        %v2853 = vmul.f32 %v2852, %v2809
        %v2854 = vmul.f32 %v2853, %v2852
        %v2855 = vmul.f32 0.5, %v2854
        %v2856 = vsub.f32 1.5, %v2855
        %v2857 = vmul.f32 %v2852, %v2856
        %vm2858 = vweird.f32 %v2809
        %vm2859 = vweird.f32 %v2852
        %vm2860 = vmor %vm2858, %vm2859
        %v2861 = vsel %vm2860, %v2852, %v2857
        %v2862 = vrsqrt.pop %v2810
        %v2863 = vmul.f32 %v2862, %v2810
        %v2864 = vmul.f32 %v2863, %v2862
        %v2865 = vmul.f32 0.5, %v2864
        %v2866 = vsub.f32 1.5, %v2865
        %v2867 = vmul.f32 %v2862, %v2866
        %vm2868 = vweird.f32 %v2810
        %vm2869 = vweird.f32 %v2862
        %vm2870 = vmor %vm2868, %vm2869
        %v2871 = vsel %vm2870, %v2862, %v2867
        %v2872 = vrsqrt.pop %v2811
        %v2873 = vmul.f32 %v2872, %v2811
        %v2874 = vmul.f32 %v2873, %v2872
        %v2875 = vmul.f32 0.5, %v2874
        %v2876 = vsub.f32 1.5, %v2875
        %v2877 = vmul.f32 %v2872, %v2876
        %vm2878 = vweird.f32 %v2811
        %vm2879 = vweird.f32 %v2872
        %vm2880 = vmor %vm2878, %vm2879
        %v2881 = vsel %vm2880, %v2872, %v2877
        %v2882 = vrsqrt.pop %v2812
        %v2883 = vmul.f32 %v2882, %v2812
        %v2884 = vmul.f32 %v2883, %v2882
        %v2885 = vmul.f32 0.5, %v2884
        %v2886 = vsub.f32 1.5, %v2885
        %v2887 = vmul.f32 %v2882, %v2886
        %vm2888 = vweird.f32 %v2812
        %vm2889 = vweird.f32 %v2882
        %vm2890 = vmor %vm2888, %vm2889
        %v2891 = vsel %vm2890, %v2882, %v2887
        %v2892 = vrsqrt.pop %v2813
        %v2893 = vmul.f32 %v2892, %v2813
        %v2894 = vmul.f32 %v2893, %v2892
        %v2895 = vmul.f32 0.5, %v2894
        %v2896 = vsub.f32 1.5, %v2895
        %v2897 = vmul.f32 %v2892, %v2896
        %vm2898 = vweird.f32 %v2813
        %vm2899 = vweird.f32 %v2892
        %vm2900 = vmor %vm2898, %vm2899
        %v2901 = vsel %vm2900, %v2892, %v2897
        %v2902 = vrsqrt.pop %v2814
        %v2903 = vmul.f32 %v2902, %v2814
        %v2904 = vmul.f32 %v2903, %v2902
        %v2905 = vmul.f32 0.5, %v2904
        %v2906 = vsub.f32 1.5, %v2905
        %v2907 = vmul.f32 %v2902, %v2906
        %vm2908 = vweird.f32 %v2814
        %vm2909 = vweird.f32 %v2902
        %vm2910 = vmor %vm2908, %vm2909
        %v2911 = vsel %vm2910, %v2902, %v2907
        %v2912 = vrsqrt.pop %v2815
        %v2913 = vmul.f32 %v2912, %v2815
        %v2914 = vmul.f32 %v2913, %v2912
        %v2915 = vmul.f32 0.5, %v2914
        %v2916 = vsub.f32 1.5, %v2915
        %v2917 = vmul.f32 %v2912, %v2916
        %vm2918 = vweird.f32 %v2815
        %vm2919 = vweird.f32 %v2912
        %vm2920 = vmor %vm2918, %vm2919
        %v2921 = vsel %vm2920, %v2912, %v2917
        %v2922 = vrsqrt.pop %v2816
        %v2923 = vmul.f32 %v2922, %v2816
        %v2924 = vmul.f32 %v2923, %v2922
        %v2925 = vmul.f32 0.5, %v2924
        %v2926 = vsub.f32 1.5, %v2925
        %v2927 = vmul.f32 %v2922, %v2926
        %vm2928 = vweird.f32 %v2816
        %vm2929 = vweird.f32 %v2922
        %vm2930 = vmor %vm2928, %vm2929
        %v2931 = vsel %vm2930, %v2922, %v2927
        %v2932 = vrsqrt.pop %v2817
        %v2933 = vmul.f32 %v2932, %v2817
        %v2934 = vmul.f32 %v2933, %v2932
        %v2935 = vmul.f32 0.5, %v2934
        %v2936 = vsub.f32 1.5, %v2935
        %v2937 = vmul.f32 %v2932, %v2936
        %vm2938 = vweird.f32 %v2817
        %vm2939 = vweird.f32 %v2932
        %vm2940 = vmor %vm2938, %vm2939
        %v2941 = vsel %vm2940, %v2932, %v2937
        %v2942 = vrsqrt.pop %v2818
        %v2943 = vmul.f32 %v2942, %v2818
        %v2944 = vmul.f32 %v2943, %v2942
        %v2945 = vmul.f32 0.5, %v2944
        %v2946 = vsub.f32 1.5, %v2945
        %v2947 = vmul.f32 %v2942, %v2946
        %vm2948 = vweird.f32 %v2818
        %vm2949 = vweird.f32 %v2942
        %vm2950 = vmor %vm2948, %vm2949
        %v2951 = vsel %vm2950, %v2942, %v2947
        %v2952 = vrsqrt.pop %v2819
        %v2953 = vmul.f32 %v2952, %v2819
        %v2954 = vmul.f32 %v2953, %v2952
        %v2955 = vmul.f32 0.5, %v2954
        %v2956 = vsub.f32 1.5, %v2955
        %v2957 = vmul.f32 %v2952, %v2956
        %vm2958 = vweird.f32 %v2819
        %vm2959 = vweird.f32 %v2952
        %vm2960 = vmor %vm2958, %vm2959
        %v2961 = vsel %vm2960, %v2952, %v2957
        %v2962 = vrsqrt.pop %v2820
        %v2963 = vmul.f32 %v2962, %v2820
        %v2964 = vmul.f32 %v2963, %v2962
        %v2965 = vmul.f32 0.5, %v2964
        %v2966 = vsub.f32 1.5, %v2965
        %v2967 = vmul.f32 %v2962, %v2966
        %vm2968 = vweird.f32 %v2820
        %vm2969 = vweird.f32 %v2962
        %vm2970 = vmor %vm2968, %vm2969
        %v2971 = vsel %vm2970, %v2962, %v2967
        %v2972 = vrsqrt.pop %v2821
        %v2973 = vmul.f32 %v2972, %v2821
        %v2974 = vmul.f32 %v2973, %v2972
        %v2975 = vmul.f32 0.5, %v2974
        %v2976 = vsub.f32 1.5, %v2975
        %v2977 = vmul.f32 %v2972, %v2976
        %vm2978 = vweird.f32 %v2821
        %vm2979 = vweird.f32 %v2972
        %vm2980 = vmor %vm2978, %vm2979
        %v2981 = vsel %vm2980, %v2972, %v2977
        %v2982 = vmul.f32 %v2710, %v2831
        %v2983 = vmul.f32 %v2711, %v2841
        %v2984 = vmul.f32 %v2712, %v2851
        %v2985 = vmul.f32 %v2713, %v2861
        %v2986 = vmul.f32 %v2714, %v2871
        %v2987 = vmul.f32 %v2715, %v2881
        %v2988 = vmul.f32 %v2716, %v2891
        %v2989 = vmul.f32 %v2717, %v2901
        %v2990 = vmul.f32 %v2718, %v2911
        %v2991 = vmul.f32 %v2719, %v2921
        %v2992 = vmul.f32 %v2720, %v2931
        %v2993 = vmul.f32 %v2721, %v2941
        %v2994 = vmul.f32 %v2722, %v2951
        %v2995 = vmul.f32 %v2723, %v2961
        %v2996 = vmul.f32 %v2724, %v2971
        %v2997 = vmul.f32 %v2725, %v2981
        %v2998 = vperm.slane %v335, 3
        %v2999 = vmul.f32 %v2982, %v2998
        %v3000 = vmul.f32 %v2983, %v2998
        %v3001 = vmul.f32 %v2984, %v2998
        %v3002 = vmul.f32 %v2985, %v2998
        %v3003 = vmul.f32 %v2986, %v2998
        %v3004 = vmul.f32 %v2987, %v2998
        %v3005 = vmul.f32 %v2988, %v2998
        %v3006 = vmul.f32 %v2989, %v2998
        %v3007 = vmul.f32 %v2990, %v2998
        %v3008 = vmul.f32 %v2991, %v2998
        %v3009 = vmul.f32 %v2992, %v2998
        %v3010 = vmul.f32 %v2993, %v2998
        %v3011 = vmul.f32 %v2994, %v2998
        %v3012 = vmul.f32 %v2995, %v2998
        %v3013 = vmul.f32 %v2996, %v2998
        %v3014 = vmul.f32 %v2997, %v2998
        %v3015 = vperm.slane %v335, 4
        %v3016 = vadd.f32 %v2999, %v3015
        %v3017 = vadd.f32 %v3000, %v3015
        %v3018 = vadd.f32 %v3001, %v3015
        %v3019 = vadd.f32 %v3002, %v3015
        %v3020 = vadd.f32 %v3003, %v3015
        %v3021 = vadd.f32 %v3004, %v3015
        %v3022 = vadd.f32 %v3005, %v3015
        %v3023 = vadd.f32 %v3006, %v3015
        %v3024 = vadd.f32 %v3007, %v3015
        %v3025 = vadd.f32 %v3008, %v3015
        %v3026 = vadd.f32 %v3009, %v3015
        %v3027 = vadd.f32 %v3010, %v3015
        %v3028 = vadd.f32 %v3011, %v3015
        %v3029 = vadd.f32 %v3012, %v3015
        %v3030 = vadd.f32 %v3013, %v3015
        %v3031 = vadd.f32 %v3014, %v3015
        %v3032 = vadd.f32 %v819, %v3016
        %v3033 = vadd.f32 %v820, %v3017
        %v3034 = vadd.f32 %v821, %v3018
        %v3035 = vadd.f32 %v822, %v3019
        %v3036 = vadd.f32 %v823, %v3020
        %v3037 = vadd.f32 %v824, %v3021
        %v3038 = vadd.f32 %v825, %v3022
        %v3039 = vadd.f32 %v826, %v3023
        %v3040 = vadd.f32 %v827, %v3024
        %v3041 = vadd.f32 %v828, %v3025
        %v3042 = vadd.f32 %v829, %v3026
        %v3043 = vadd.f32 %v830, %v3027
        %v3044 = vadd.f32 %v831, %v3028
        %v3045 = vadd.f32 %v832, %v3029
        %v3046 = vadd.f32 %v833, %v3030
        %v3047 = vadd.f32 %v834, %v3031
        %v3048 = vsel %vm441, %v3032, 0.0
        %3049 = vadd.xlane.f32.xlu0 %v3048
        %v3050 = vpop.xlane.xlu0 %3049
        %v3051 = vsel %vm441, %v3033, 0.0
        %3052 = vadd.xlane.f32.xlu0 %v3051
        %v3053 = vpop.xlane.xlu0 %3052
        %v3054 = vsel %vm441, %v3034, 0.0
        %3055 = vadd.xlane.f32.xlu0 %v3054
        %v3056 = vpop.xlane.xlu0 %3055
        %v3057 = vsel %vm441, %v3035, 0.0
        %3058 = vadd.xlane.f32.xlu0 %v3057
        %v3059 = vpop.xlane.xlu0 %3058
        %v3060 = vsel %vm441, %v3036, 0.0
        %3061 = vadd.xlane.f32.xlu0 %v3060
        %v3062 = vpop.xlane.xlu0 %3061
        %v3063 = vsel %vm441, %v3037, 0.0
        %3064 = vadd.xlane.f32.xlu0 %v3063
        %v3065 = vpop.xlane.xlu0 %3064
        %v3066 = vsel %vm441, %v3038, 0.0
        %3067 = vadd.xlane.f32.xlu0 %v3066
        %v3068 = vpop.xlane.xlu0 %3067
        %v3069 = vsel %vm441, %v3039, 0.0
        %3070 = vadd.xlane.f32.xlu0 %v3069
        %v3071 = vpop.xlane.xlu0 %3070
        %v3072 = vsel %vm441, %v3040, 0.0
        %3073 = vadd.xlane.f32.xlu0 %v3072
        %v3074 = vpop.xlane.xlu0 %3073
        %v3075 = vsel %vm441, %v3041, 0.0
        %3076 = vadd.xlane.f32.xlu0 %v3075
        %v3077 = vpop.xlane.xlu0 %3076
        %v3078 = vsel %vm441, %v3042, 0.0
        %3079 = vadd.xlane.f32.xlu0 %v3078
        %v3080 = vpop.xlane.xlu0 %3079
        %v3081 = vsel %vm441, %v3043, 0.0
        %3082 = vadd.xlane.f32.xlu0 %v3081
        %v3083 = vpop.xlane.xlu0 %3082
        %v3084 = vsel %vm441, %v3044, 0.0
        %3085 = vadd.xlane.f32.xlu0 %v3084
        %v3086 = vpop.xlane.xlu0 %3085
        %v3087 = vsel %vm441, %v3045, 0.0
        %3088 = vadd.xlane.f32.xlu0 %v3087
        %v3089 = vpop.xlane.xlu0 %3088
        %v3090 = vsel %vm441, %v3046, 0.0
        %3091 = vadd.xlane.f32.xlu0 %v3090
        %v3092 = vpop.xlane.xlu0 %3091
        %v3093 = vsel %vm441, %v3047, 0.0
        %3094 = vadd.xlane.f32.xlu0 %v3093
        %v3095 = vpop.xlane.xlu0 %3094
        %v3096 = vmul.f32 %v3050, %v496
        %v3097 = vmul.f32 %v3053, %v496
        %v3098 = vmul.f32 %v3056, %v496
        %v3099 = vmul.f32 %v3059, %v496
        %v3100 = vmul.f32 %v3062, %v496
        %v3101 = vmul.f32 %v3065, %v496
        %v3102 = vmul.f32 %v3068, %v496
        %v3103 = vmul.f32 %v3071, %v496
        %v3104 = vmul.f32 %v3074, %v496
        %v3105 = vmul.f32 %v3077, %v496
        %v3106 = vmul.f32 %v3080, %v496
        %v3107 = vmul.f32 %v3083, %v496
        %v3108 = vmul.f32 %v3086, %v496
        %v3109 = vmul.f32 %v3089, %v496
        %v3110 = vmul.f32 %v3092, %v496
        %v3111 = vmul.f32 %v3095, %v496
        %v3112 = vsub.f32 %v3032, %v3096
        %v3113 = vsub.f32 %v3033, %v3097
        %v3114 = vsub.f32 %v3034, %v3098
        %v3115 = vsub.f32 %v3035, %v3099
        %v3116 = vsub.f32 %v3036, %v3100
        %v3117 = vsub.f32 %v3037, %v3101
        %v3118 = vsub.f32 %v3038, %v3102
        %v3119 = vsub.f32 %v3039, %v3103
        %v3120 = vsub.f32 %v3040, %v3104
        %v3121 = vsub.f32 %v3041, %v3105
        %v3122 = vsub.f32 %v3042, %v3106
        %v3123 = vsub.f32 %v3043, %v3107
        %v3124 = vsub.f32 %v3044, %v3108
        %v3125 = vsub.f32 %v3045, %v3109
        %v3126 = vsub.f32 %v3046, %v3110
        %v3127 = vsub.f32 %v3047, %v3111
        %v3128 = vmul.f32 %v3112, %v3112
        %v3129 = vmul.f32 %v3113, %v3113
        %v3130 = vmul.f32 %v3114, %v3114
        %v3131 = vmul.f32 %v3115, %v3115
        %v3132 = vmul.f32 %v3116, %v3116
        %v3133 = vmul.f32 %v3117, %v3117
        %v3134 = vmul.f32 %v3118, %v3118
        %v3135 = vmul.f32 %v3119, %v3119
        %v3136 = vmul.f32 %v3120, %v3120
        %v3137 = vmul.f32 %v3121, %v3121
        %v3138 = vmul.f32 %v3122, %v3122
        %v3139 = vmul.f32 %v3123, %v3123
        %v3140 = vmul.f32 %v3124, %v3124
        %v3141 = vmul.f32 %v3125, %v3125
        %v3142 = vmul.f32 %v3126, %v3126
        %v3143 = vmul.f32 %v3127, %v3127
        %v3144 = vsel %vm441, %v3128, 0.0
        %3145 = vadd.xlane.f32.xlu0 %v3144
        %v3146 = vpop.xlane.xlu0 %3145
        %v3147 = vsel %vm441, %v3129, 0.0
        %3148 = vadd.xlane.f32.xlu0 %v3147
        %v3149 = vpop.xlane.xlu0 %3148
        %v3150 = vsel %vm441, %v3130, 0.0
        %3151 = vadd.xlane.f32.xlu0 %v3150
        %v3152 = vpop.xlane.xlu0 %3151
        %v3153 = vsel %vm441, %v3131, 0.0
        %3154 = vadd.xlane.f32.xlu0 %v3153
        %v3155 = vpop.xlane.xlu0 %3154
        %v3156 = vsel %vm441, %v3132, 0.0
        %3157 = vadd.xlane.f32.xlu0 %v3156
        %v3158 = vpop.xlane.xlu0 %3157
        %v3159 = vsel %vm441, %v3133, 0.0
        %3160 = vadd.xlane.f32.xlu0 %v3159
        %v3161 = vpop.xlane.xlu0 %3160
        %v3162 = vsel %vm441, %v3134, 0.0
        %3163 = vadd.xlane.f32.xlu0 %v3162
        %v3164 = vpop.xlane.xlu0 %3163
        %v3165 = vsel %vm441, %v3135, 0.0
        %3166 = vadd.xlane.f32.xlu0 %v3165
        %v3167 = vpop.xlane.xlu0 %3166
        %v3168 = vsel %vm441, %v3136, 0.0
        %3169 = vadd.xlane.f32.xlu0 %v3168
        %v3170 = vpop.xlane.xlu0 %3169
        %v3171 = vsel %vm441, %v3137, 0.0
        %3172 = vadd.xlane.f32.xlu0 %v3171
        %v3173 = vpop.xlane.xlu0 %3172
        %v3174 = vsel %vm441, %v3138, 0.0
        %3175 = vadd.xlane.f32.xlu0 %v3174
        %v3176 = vpop.xlane.xlu0 %3175
        %v3177 = vsel %vm441, %v3139, 0.0
        %3178 = vadd.xlane.f32.xlu0 %v3177
        %v3179 = vpop.xlane.xlu0 %3178
        %v3180 = vsel %vm441, %v3140, 0.0
        %3181 = vadd.xlane.f32.xlu0 %v3180
        %v3182 = vpop.xlane.xlu0 %3181
        %v3183 = vsel %vm441, %v3141, 0.0
        %3184 = vadd.xlane.f32.xlu0 %v3183
        %v3185 = vpop.xlane.xlu0 %3184
        %v3186 = vsel %vm441, %v3142, 0.0
        %3187 = vadd.xlane.f32.xlu0 %v3186
        %v3188 = vpop.xlane.xlu0 %3187
        %v3189 = vsel %vm441, %v3143, 0.0
        %3190 = vadd.xlane.f32.xlu0 %v3189
        %v3191 = vpop.xlane.xlu0 %3190
        %v3192 = vmul.f32 %v3146, %v496
        %v3193 = vmul.f32 %v3149, %v496
        %v3194 = vmul.f32 %v3152, %v496
        %v3195 = vmul.f32 %v3155, %v496
        %v3196 = vmul.f32 %v3158, %v496
        %v3197 = vmul.f32 %v3161, %v496
        %v3198 = vmul.f32 %v3164, %v496
        %v3199 = vmul.f32 %v3167, %v496
        %v3200 = vmul.f32 %v3170, %v496
        %v3201 = vmul.f32 %v3173, %v496
        %v3202 = vmul.f32 %v3176, %v496
        %v3203 = vmul.f32 %v3179, %v496
        %v3204 = vmul.f32 %v3182, %v496
        %v3205 = vmul.f32 %v3185, %v496
        %v3206 = vmul.f32 %v3188, %v496
        %v3207 = vmul.f32 %v3191, %v496
        %v3208 = vadd.f32 %v3192, 1e-05
        %v3209 = vadd.f32 %v3193, 1e-05
        %v3210 = vadd.f32 %v3194, 1e-05
        %v3211 = vadd.f32 %v3195, 1e-05
        %v3212 = vadd.f32 %v3196, 1e-05
        %v3213 = vadd.f32 %v3197, 1e-05
        %v3214 = vadd.f32 %v3198, 1e-05
        %v3215 = vadd.f32 %v3199, 1e-05
        %v3216 = vadd.f32 %v3200, 1e-05
        %v3217 = vadd.f32 %v3201, 1e-05
        %v3218 = vadd.f32 %v3202, 1e-05
        %v3219 = vadd.f32 %v3203, 1e-05
        %v3220 = vadd.f32 %v3204, 1e-05
        %v3221 = vadd.f32 %v3205, 1e-05
        %v3222 = vadd.f32 %v3206, 1e-05
        %v3223 = vadd.f32 %v3207, 1e-05
        %v3224 = vrsqrt.pop %v3208
        %v3225 = vmul.f32 %v3224, %v3208
        %v3226 = vmul.f32 %v3225, %v3224
        %v3227 = vmul.f32 0.5, %v3226
        %v3228 = vsub.f32 1.5, %v3227
        %v3229 = vmul.f32 %v3224, %v3228
        %vm3230 = vweird.f32 %v3208
        %vm3231 = vweird.f32 %v3224
        %vm3232 = vmor %vm3230, %vm3231
        %v3233 = vsel %vm3232, %v3224, %v3229
        %v3234 = vrsqrt.pop %v3209
        %v3235 = vmul.f32 %v3234, %v3209
        %v3236 = vmul.f32 %v3235, %v3234
        %v3237 = vmul.f32 0.5, %v3236
        %v3238 = vsub.f32 1.5, %v3237
        %v3239 = vmul.f32 %v3234, %v3238
        %vm3240 = vweird.f32 %v3209
        %vm3241 = vweird.f32 %v3234
        %vm3242 = vmor %vm3240, %vm3241
        %v3243 = vsel %vm3242, %v3234, %v3239
        %v3244 = vrsqrt.pop %v3210
        %v3245 = vmul.f32 %v3244, %v3210
        %v3246 = vmul.f32 %v3245, %v3244
        %v3247 = vmul.f32 0.5, %v3246
        %v3248 = vsub.f32 1.5, %v3247
        %v3249 = vmul.f32 %v3244, %v3248
        %vm3250 = vweird.f32 %v3210
        %vm3251 = vweird.f32 %v3244
        %vm3252 = vmor %vm3250, %vm3251
        %v3253 = vsel %vm3252, %v3244, %v3249
        %v3254 = vrsqrt.pop %v3211
        %v3255 = vmul.f32 %v3254, %v3211
        %v3256 = vmul.f32 %v3255, %v3254
        %v3257 = vmul.f32 0.5, %v3256
        %v3258 = vsub.f32 1.5, %v3257
        %v3259 = vmul.f32 %v3254, %v3258
        %vm3260 = vweird.f32 %v3211
        %vm3261 = vweird.f32 %v3254
        %vm3262 = vmor %vm3260, %vm3261
        %v3263 = vsel %vm3262, %v3254, %v3259
        %v3264 = vrsqrt.pop %v3212
        %v3265 = vmul.f32 %v3264, %v3212
        %v3266 = vmul.f32 %v3265, %v3264
        %v3267 = vmul.f32 0.5, %v3266
        %v3268 = vsub.f32 1.5, %v3267
        %v3269 = vmul.f32 %v3264, %v3268
        %vm3270 = vweird.f32 %v3212
        %vm3271 = vweird.f32 %v3264
        %vm3272 = vmor %vm3270, %vm3271
        %v3273 = vsel %vm3272, %v3264, %v3269
        %v3274 = vrsqrt.pop %v3213
        %v3275 = vmul.f32 %v3274, %v3213
        %v3276 = vmul.f32 %v3275, %v3274
        %v3277 = vmul.f32 0.5, %v3276
        %v3278 = vsub.f32 1.5, %v3277
        %v3279 = vmul.f32 %v3274, %v3278
        %vm3280 = vweird.f32 %v3213
        %vm3281 = vweird.f32 %v3274
        %vm3282 = vmor %vm3280, %vm3281
        %v3283 = vsel %vm3282, %v3274, %v3279
        %v3284 = vrsqrt.pop %v3214
        %v3285 = vmul.f32 %v3284, %v3214
        %v3286 = vmul.f32 %v3285, %v3284
        %v3287 = vmul.f32 0.5, %v3286
        %v3288 = vsub.f32 1.5, %v3287
        %v3289 = vmul.f32 %v3284, %v3288
        %vm3290 = vweird.f32 %v3214
        %vm3291 = vweird.f32 %v3284
        %vm3292 = vmor %vm3290, %vm3291
        %v3293 = vsel %vm3292, %v3284, %v3289
        %v3294 = vrsqrt.pop %v3215
        %v3295 = vmul.f32 %v3294, %v3215
        %v3296 = vmul.f32 %v3295, %v3294
        %v3297 = vmul.f32 0.5, %v3296
        %v3298 = vsub.f32 1.5, %v3297
        %v3299 = vmul.f32 %v3294, %v3298
        %vm3300 = vweird.f32 %v3215
        %vm3301 = vweird.f32 %v3294
        %vm3302 = vmor %vm3300, %vm3301
        %v3303 = vsel %vm3302, %v3294, %v3299
        %v3304 = vrsqrt.pop %v3216
        %v3305 = vmul.f32 %v3304, %v3216
        %v3306 = vmul.f32 %v3305, %v3304
        %v3307 = vmul.f32 0.5, %v3306
        %v3308 = vsub.f32 1.5, %v3307
        %v3309 = vmul.f32 %v3304, %v3308
        %vm3310 = vweird.f32 %v3216
        %vm3311 = vweird.f32 %v3304
        %vm3312 = vmor %vm3310, %vm3311
        %v3313 = vsel %vm3312, %v3304, %v3309
        %v3314 = vrsqrt.pop %v3217
        %v3315 = vmul.f32 %v3314, %v3217
        %v3316 = vmul.f32 %v3315, %v3314
        %v3317 = vmul.f32 0.5, %v3316
        %v3318 = vsub.f32 1.5, %v3317
        %v3319 = vmul.f32 %v3314, %v3318
        %vm3320 = vweird.f32 %v3217
        %vm3321 = vweird.f32 %v3314
        %vm3322 = vmor %vm3320, %vm3321
        %v3323 = vsel %vm3322, %v3314, %v3319
        %v3324 = vrsqrt.pop %v3218
        %v3325 = vmul.f32 %v3324, %v3218
        %v3326 = vmul.f32 %v3325, %v3324
        %v3327 = vmul.f32 0.5, %v3326
        %v3328 = vsub.f32 1.5, %v3327
        %v3329 = vmul.f32 %v3324, %v3328
        %vm3330 = vweird.f32 %v3218
        %vm3331 = vweird.f32 %v3324
        %vm3332 = vmor %vm3330, %vm3331
        %v3333 = vsel %vm3332, %v3324, %v3329
        %v3334 = vrsqrt.pop %v3219
        %v3335 = vmul.f32 %v3334, %v3219
        %v3336 = vmul.f32 %v3335, %v3334
        %v3337 = vmul.f32 0.5, %v3336
        %v3338 = vsub.f32 1.5, %v3337
        %v3339 = vmul.f32 %v3334, %v3338
        %vm3340 = vweird.f32 %v3219
        %vm3341 = vweird.f32 %v3334
        %vm3342 = vmor %vm3340, %vm3341
        %v3343 = vsel %vm3342, %v3334, %v3339
        %v3344 = vrsqrt.pop %v3220
        %v3345 = vmul.f32 %v3344, %v3220
        %v3346 = vmul.f32 %v3345, %v3344
        %v3347 = vmul.f32 0.5, %v3346
        %v3348 = vsub.f32 1.5, %v3347
        %v3349 = vmul.f32 %v3344, %v3348
        %vm3350 = vweird.f32 %v3220
        %vm3351 = vweird.f32 %v3344
        %vm3352 = vmor %vm3350, %vm3351
        %v3353 = vsel %vm3352, %v3344, %v3349
        %v3354 = vrsqrt.pop %v3221
        %v3355 = vmul.f32 %v3354, %v3221
        %v3356 = vmul.f32 %v3355, %v3354
        %v3357 = vmul.f32 0.5, %v3356
        %v3358 = vsub.f32 1.5, %v3357
        %v3359 = vmul.f32 %v3354, %v3358
        %vm3360 = vweird.f32 %v3221
        %vm3361 = vweird.f32 %v3354
        %vm3362 = vmor %vm3360, %vm3361
        %v3363 = vsel %vm3362, %v3354, %v3359
        %v3364 = vrsqrt.pop %v3222
        %v3365 = vmul.f32 %v3364, %v3222
        %v3366 = vmul.f32 %v3365, %v3364
        %v3367 = vmul.f32 0.5, %v3366
        %v3368 = vsub.f32 1.5, %v3367
        %v3369 = vmul.f32 %v3364, %v3368
        %vm3370 = vweird.f32 %v3222
        %vm3371 = vweird.f32 %v3364
        %vm3372 = vmor %vm3370, %vm3371
        %v3373 = vsel %vm3372, %v3364, %v3369
        %v3374 = vrsqrt.pop %v3223
        %v3375 = vmul.f32 %v3374, %v3223
        %v3376 = vmul.f32 %v3375, %v3374
        %v3377 = vmul.f32 0.5, %v3376
        %v3378 = vsub.f32 1.5, %v3377
        %v3379 = vmul.f32 %v3374, %v3378
        %vm3380 = vweird.f32 %v3223
        %vm3381 = vweird.f32 %v3374
        %vm3382 = vmor %vm3380, %vm3381
        %v3383 = vsel %vm3382, %v3374, %v3379
        %v3384 = vmul.f32 %v3112, %v3233
        %v3385 = vmul.f32 %v3113, %v3243
        %v3386 = vmul.f32 %v3114, %v3253
        %v3387 = vmul.f32 %v3115, %v3263
        %v3388 = vmul.f32 %v3116, %v3273
        %v3389 = vmul.f32 %v3117, %v3283
        %v3390 = vmul.f32 %v3118, %v3293
        %v3391 = vmul.f32 %v3119, %v3303
        %v3392 = vmul.f32 %v3120, %v3313
        %v3393 = vmul.f32 %v3121, %v3323
        %v3394 = vmul.f32 %v3122, %v3333
        %v3395 = vmul.f32 %v3123, %v3343
        %v3396 = vmul.f32 %v3124, %v3353
        %v3397 = vmul.f32 %v3125, %v3363
        %v3398 = vmul.f32 %v3126, %v3373
        %v3399 = vmul.f32 %v3127, %v3383
        %v3400 = vperm.slane %v335, 5
        %v3401 = vmul.f32 %v3384, %v3400
        %v3402 = vmul.f32 %v3385, %v3400
        %v3403 = vmul.f32 %v3386, %v3400
        %v3404 = vmul.f32 %v3387, %v3400
        %v3405 = vmul.f32 %v3388, %v3400
        %v3406 = vmul.f32 %v3389, %v3400
        %v3407 = vmul.f32 %v3390, %v3400
        %v3408 = vmul.f32 %v3391, %v3400
        %v3409 = vmul.f32 %v3392, %v3400
        %v3410 = vmul.f32 %v3393, %v3400
        %v3411 = vmul.f32 %v3394, %v3400
        %v3412 = vmul.f32 %v3395, %v3400
        %v3413 = vmul.f32 %v3396, %v3400
        %v3414 = vmul.f32 %v3397, %v3400
        %v3415 = vmul.f32 %v3398, %v3400
        %v3416 = vmul.f32 %v3399, %v3400
        %v3417 = vperm.slane %v335, 6
        %v3418 = vadd.f32 %v3401, %v3417
        %v3419 = vadd.f32 %v3402, %v3417
        %v3420 = vadd.f32 %v3403, %v3417
        %v3421 = vadd.f32 %v3404, %v3417
        %v3422 = vadd.f32 %v3405, %v3417
        %v3423 = vadd.f32 %v3406, %v3417
        %v3424 = vadd.f32 %v3407, %v3417
        %v3425 = vadd.f32 %v3408, %v3417
        %v3426 = vadd.f32 %v3409, %v3417
        %v3427 = vadd.f32 %v3410, %v3417
        %v3428 = vadd.f32 %v3411, %v3417
        %v3429 = vadd.f32 %v3412, %v3417
        %v3430 = vadd.f32 %v3413, %v3417
        %v3431 = vadd.f32 %v3414, %v3417
        %v3432 = vadd.f32 %v3415, %v3417
        %v3433 = vadd.f32 %v3416, %v3417
        %v3434 = vpack.c.bf16 %v3419, %v3418
        %v3435 = vpack.c.bf16 %v3421, %v3420
        %v3436 = vpack.c.bf16 %v3423, %v3422
        %v3437 = vpack.c.bf16 %v3425, %v3424
        %v3438 = vpack.c.bf16 %v3427, %v3426
        %v3439 = vpack.c.bf16 %v3429, %v3428
        %v3440 = vpack.c.bf16 %v3431, %v3430
        %v3441 = vpack.c.bf16 %v3433, %v3432
        %v3442 = vld [vmem:[%s6] sm:$0xf]
        %v3443 = vld [vmem:[%s6 + $0x4] sm:$0xf]
        %v3444 = vld [vmem:[%s6 + $0x8] sm:$0xf]
        %v3445 = vld [vmem:[%s6 + $0xc] sm:$0xf]
        %v3446 = vperm.slane %v335, 7
        %v3451 = vunpack.c.l.b16 %v3442
        %v3452 = vunpack.c.l.b16 %v3443
        %v3453 = vunpack.c.l.b16 %v3444
        %v3454 = vunpack.c.l.b16 %v3445
        %v3455 = vpack.c.b16 %v3452, %v3451
        %v3456 = vpack.c.b16 %v3454, %v3453
        %v3460 = vsel %vm441, %v3434, 0
        %v3463 = vsel %vm441, %v3435, 0
        %v3466 = vsel %vm441, %v3436, 0
        %v3469 = vsel %vm441, %v3437, 0
        %v3472 = vsel %vm441, %v3438, 0
        %v3475 = vsel %vm441, %v3439, 0
        %v3478 = vsel %vm441, %v3440, 0
        %v3481 = vsel %vm441, %v3441, 0
        %3483 = vmatpush.bf16.msra.mxu0 0
        %3484 = vmatpush.bf16.msra.mxu0 0
        %3485 = vmatpush.bf16.msra.mxu0 0
        %3486 = vmatpush.bf16.msra.mxu0 0
        %3487 = vmatpush.bf16.msra.mxu0 0
        %3488 = vmatpush.bf16.msra.mxu0 0
        %3489 = vmatpush.bf16.msra.mxu0 %v3456
        %3490 = vmatpush.bf16.msra.mxu0 %v3455
        %3491 = vmatmul.bf16.gmra.mxu0 %v3460
        %v3492 = vpop.f32.mrf.mxu0
        %v3493 = vadd.f32 %v3446, %v3492
        %v3494 = vpop.f32.mrf.mxu0
        %v3495 = vadd.f32 %v3446, %v3494
        %3496 = vmatmul.bf16.gmra.mxu0 %v3463
        %v3497 = vpop.f32.mrf.mxu0
        %v3498 = vadd.f32 %v3446, %v3497
        %v3499 = vpop.f32.mrf.mxu0
        %v3500 = vadd.f32 %v3446, %v3499
        %3501 = vmatmul.bf16.gmra.mxu0 %v3466
        %v3502 = vpop.f32.mrf.mxu0
        %v3503 = vadd.f32 %v3446, %v3502
        %v3504 = vpop.f32.mrf.mxu0
        %v3505 = vadd.f32 %v3446, %v3504
        %3506 = vmatmul.bf16.gmra.mxu0 %v3469
        %v3507 = vpop.f32.mrf.mxu0
        %v3508 = vadd.f32 %v3446, %v3507
        %v3509 = vpop.f32.mrf.mxu0
        %v3510 = vadd.f32 %v3446, %v3509
        %3511 = vmatmul.bf16.gmra.mxu0 %v3472
        %v3512 = vpop.f32.mrf.mxu0
        %v3513 = vadd.f32 %v3446, %v3512
        %v3514 = vpop.f32.mrf.mxu0
        %v3515 = vadd.f32 %v3446, %v3514
        %3516 = vmatmul.bf16.gmra.mxu0 %v3475
        %v3517 = vpop.f32.mrf.mxu0
        %v3518 = vadd.f32 %v3446, %v3517
        %v3519 = vpop.f32.mrf.mxu0
        %v3520 = vadd.f32 %v3446, %v3519
        %3521 = vmatmul.bf16.gmra.mxu0 %v3478
        %v3522 = vpop.f32.mrf.mxu0
        %v3523 = vadd.f32 %v3446, %v3522
        %v3524 = vpop.f32.mrf.mxu0
        %v3525 = vadd.f32 %v3446, %v3524
        %3526 = vmatmul.bf16.gmra.mxu0 %v3481
        %v3527 = vpop.f32.mrf.mxu0
        %v3528 = vadd.f32 %v3446, %v3527
        %v3529 = vpop.f32.mrf.mxu0
        %v3530 = vadd.f32 %v3446, %v3529
        %3531 = vdwg.mxu0
        %v3532 = vmax.f32 %v3493, 0.0
        %v3533 = vmax.f32 %v3495, 0.0
        %v3534 = vmax.f32 %v3498, 0.0
        %v3535 = vmax.f32 %v3500, 0.0
        %v3536 = vmax.f32 %v3503, 0.0
        %v3537 = vmax.f32 %v3505, 0.0
        %v3538 = vmax.f32 %v3508, 0.0
        %v3539 = vmax.f32 %v3510, 0.0
        %v3540 = vmax.f32 %v3513, 0.0
        %v3541 = vmax.f32 %v3515, 0.0
        %v3542 = vmax.f32 %v3518, 0.0
        %v3543 = vmax.f32 %v3520, 0.0
        %v3544 = vmax.f32 %v3523, 0.0
        %v3545 = vmax.f32 %v3525, 0.0
        %v3546 = vmax.f32 %v3528, 0.0
        %v3547 = vmax.f32 %v3530, 0.0
        %v3548 = vpack.c.bf16 %v3533, %v3532
        %v3549 = vpack.c.bf16 %v3535, %v3534
        %v3550 = vpack.c.bf16 %v3537, %v3536
        %v3551 = vpack.c.bf16 %v3539, %v3538
        %v3552 = vpack.c.bf16 %v3541, %v3540
        %v3553 = vpack.c.bf16 %v3543, %v3542
        %v3554 = vpack.c.bf16 %v3545, %v3544
        %v3555 = vpack.c.bf16 %v3547, %v3546
        %v3556 = vld [vmem:[%s7] sm:$0xf]
        %v3557 = vld [vmem:[%s7 + $0x4] sm:$0xf]
        %v3558 = vld [vmem:[%s7 + $0x8] sm:$0xf]
        %v3559 = vld [vmem:[%s7 + $0xc] sm:$0xf]
        %v3560 = vld [vmem:[%s7 + $0x10] sm:$0xf]
        %v3561 = vld [vmem:[%s7 + $0x14] sm:$0xf]
        %v3562 = vld [vmem:[%s7 + $0x18] sm:$0xf]
        %v3563 = vld [vmem:[%s7 + $0x1c] sm:$0xf]
        %v3564 = vperm.slane %v336, 0
        %v3573 = vunpack.c.l.b16 %v3556
        %v3574 = vunpack.c.l.b16 %v3557
        %v3575 = vunpack.c.l.b16 %v3558
        %v3576 = vunpack.c.l.b16 %v3559
        %v3577 = vunpack.c.l.b16 %v3560
        %v3578 = vunpack.c.l.b16 %v3561
        %v3579 = vunpack.c.l.b16 %v3562
        %v3580 = vunpack.c.l.b16 %v3563
        %v3581 = vpack.c.b16 %v3574, %v3573
        %v3582 = vpack.c.b16 %v3576, %v3575
        %v3583 = vpack.c.b16 %v3578, %v3577
        %v3584 = vpack.c.b16 %v3580, %v3579
        %vm3589 = vcmask 523264
        %v3591 = vsel %vm3589, %v3548, 0
        %v3594 = vsel %vm3589, %v3549, 0
        %v3597 = vsel %vm3589, %v3550, 0
        %v3600 = vsel %vm3589, %v3551, 0
        %v3603 = vsel %vm3589, %v3552, 0
        %v3606 = vsel %vm3589, %v3553, 0
        %v3609 = vsel %vm3589, %v3554, 0
        %v3612 = vsel %vm3589, %v3555, 0
        %3614 = vmatpush.bf16.msra.mxu0 0
        %3615 = vmatpush.bf16.msra.mxu0 0
        %3616 = vmatpush.bf16.msra.mxu0 0
        %3617 = vmatpush.bf16.msra.mxu0 0
        %3618 = vmatpush.bf16.msra.mxu0 %v3584
        %3619 = vmatpush.bf16.msra.mxu0 %v3583
        %3620 = vmatpush.bf16.msra.mxu0 %v3582
        %3621 = vmatpush.bf16.msra.mxu0 %v3581
        %3622 = vmatmul.bf16.gmra.mxu0 %v3591
        %v3623 = vpop.f32.mrf.mxu0
        %v3624 = vadd.f32 %v3564, %v3623
        %v3625 = vpop.f32.mrf.mxu0
        %v3626 = vadd.f32 %v3564, %v3625
        %3627 = vmatmul.bf16.gmra.mxu0 %v3594
        %v3628 = vpop.f32.mrf.mxu0
        %v3629 = vadd.f32 %v3564, %v3628
        %v3630 = vpop.f32.mrf.mxu0
        %v3631 = vadd.f32 %v3564, %v3630
        %3632 = vmatmul.bf16.gmra.mxu0 %v3597
        %v3633 = vpop.f32.mrf.mxu0
        %v3634 = vadd.f32 %v3564, %v3633
        %v3635 = vpop.f32.mrf.mxu0
        %v3636 = vadd.f32 %v3564, %v3635
        %3637 = vmatmul.bf16.gmra.mxu0 %v3600
        %v3638 = vpop.f32.mrf.mxu0
        %v3639 = vadd.f32 %v3564, %v3638
        %v3640 = vpop.f32.mrf.mxu0
        %v3641 = vadd.f32 %v3564, %v3640
        %3642 = vmatmul.bf16.gmra.mxu0 %v3603
        %v3643 = vpop.f32.mrf.mxu0
        %v3644 = vadd.f32 %v3564, %v3643
        %v3645 = vpop.f32.mrf.mxu0
        %v3646 = vadd.f32 %v3564, %v3645
        %3647 = vmatmul.bf16.gmra.mxu0 %v3606
        %v3648 = vpop.f32.mrf.mxu0
        %v3649 = vadd.f32 %v3564, %v3648
        %v3650 = vpop.f32.mrf.mxu0
        %v3651 = vadd.f32 %v3564, %v3650
        %3652 = vmatmul.bf16.gmra.mxu0 %v3609
        %v3653 = vpop.f32.mrf.mxu0
        %v3654 = vadd.f32 %v3564, %v3653
        %v3655 = vpop.f32.mrf.mxu0
        %v3656 = vadd.f32 %v3564, %v3655
        %3657 = vmatmul.bf16.gmra.mxu0 %v3612
        %v3658 = vpop.f32.mrf.mxu0
        %v3659 = vadd.f32 %v3564, %v3658
        %v3660 = vpop.f32.mrf.mxu0
        %v3661 = vadd.f32 %v3564, %v3660
        %3662 = vdwg.mxu0
        %v3663 = vadd.f32 %v3418, %v3624
        %v3664 = vadd.f32 %v3419, %v3626
        %v3665 = vadd.f32 %v3420, %v3629
        %v3666 = vadd.f32 %v3421, %v3631
        %v3667 = vadd.f32 %v3422, %v3634
        %v3668 = vadd.f32 %v3423, %v3636
        %v3669 = vadd.f32 %v3424, %v3639
        %v3670 = vadd.f32 %v3425, %v3641
        %v3671 = vadd.f32 %v3426, %v3644
        %v3672 = vadd.f32 %v3427, %v3646
        %v3673 = vadd.f32 %v3428, %v3649
        %v3674 = vadd.f32 %v3429, %v3651
        %v3675 = vadd.f32 %v3430, %v3654
        %v3676 = vadd.f32 %v3431, %v3656
        %v3677 = vadd.f32 %v3432, %v3659
        %v3678 = vadd.f32 %v3433, %v3661
        %v3679 = vsel %vm441, %v3663, 0.0
        %3680 = vadd.xlane.f32.xlu0 %v3679
        %v3681 = vpop.xlane.xlu0 %3680
        %v3682 = vsel %vm441, %v3664, 0.0
        %3683 = vadd.xlane.f32.xlu0 %v3682
        %v3684 = vpop.xlane.xlu0 %3683
        %v3685 = vsel %vm441, %v3665, 0.0
        %3686 = vadd.xlane.f32.xlu0 %v3685
        %v3687 = vpop.xlane.xlu0 %3686
        %v3688 = vsel %vm441, %v3666, 0.0
        %3689 = vadd.xlane.f32.xlu0 %v3688
        %v3690 = vpop.xlane.xlu0 %3689
        %v3691 = vsel %vm441, %v3667, 0.0
        %3692 = vadd.xlane.f32.xlu0 %v3691
        %v3693 = vpop.xlane.xlu0 %3692
        %v3694 = vsel %vm441, %v3668, 0.0
        %3695 = vadd.xlane.f32.xlu0 %v3694
        %v3696 = vpop.xlane.xlu0 %3695
        %v3697 = vsel %vm441, %v3669, 0.0
        %3698 = vadd.xlane.f32.xlu0 %v3697
        %v3699 = vpop.xlane.xlu0 %3698
        %v3700 = vsel %vm441, %v3670, 0.0
        %3701 = vadd.xlane.f32.xlu0 %v3700
        %v3702 = vpop.xlane.xlu0 %3701
        %v3703 = vsel %vm441, %v3671, 0.0
        %3704 = vadd.xlane.f32.xlu0 %v3703
        %v3705 = vpop.xlane.xlu0 %3704
        %v3706 = vsel %vm441, %v3672, 0.0
        %3707 = vadd.xlane.f32.xlu0 %v3706
        %v3708 = vpop.xlane.xlu0 %3707
        %v3709 = vsel %vm441, %v3673, 0.0
        %3710 = vadd.xlane.f32.xlu0 %v3709
        %v3711 = vpop.xlane.xlu0 %3710
        %v3712 = vsel %vm441, %v3674, 0.0
        %3713 = vadd.xlane.f32.xlu0 %v3712
        %v3714 = vpop.xlane.xlu0 %3713
        %v3715 = vsel %vm441, %v3675, 0.0
        %3716 = vadd.xlane.f32.xlu0 %v3715
        %v3717 = vpop.xlane.xlu0 %3716
        %v3718 = vsel %vm441, %v3676, 0.0
        %3719 = vadd.xlane.f32.xlu0 %v3718
        %v3720 = vpop.xlane.xlu0 %3719
        %v3721 = vsel %vm441, %v3677, 0.0
        %3722 = vadd.xlane.f32.xlu0 %v3721
        %v3723 = vpop.xlane.xlu0 %3722
        %v3724 = vsel %vm441, %v3678, 0.0
        %3725 = vadd.xlane.f32.xlu0 %v3724
        %v3726 = vpop.xlane.xlu0 %3725
        %v3727 = vmul.f32 %v3681, %v496
        %v3728 = vmul.f32 %v3684, %v496
        %v3729 = vmul.f32 %v3687, %v496
        %v3730 = vmul.f32 %v3690, %v496
        %v3731 = vmul.f32 %v3693, %v496
        %v3732 = vmul.f32 %v3696, %v496
        %v3733 = vmul.f32 %v3699, %v496
        %v3734 = vmul.f32 %v3702, %v496
        %v3735 = vmul.f32 %v3705, %v496
        %v3736 = vmul.f32 %v3708, %v496
        %v3737 = vmul.f32 %v3711, %v496
        %v3738 = vmul.f32 %v3714, %v496
        %v3739 = vmul.f32 %v3717, %v496
        %v3740 = vmul.f32 %v3720, %v496
        %v3741 = vmul.f32 %v3723, %v496
        %v3742 = vmul.f32 %v3726, %v496
        %v3743 = vsub.f32 %v3663, %v3727
        %v3744 = vsub.f32 %v3664, %v3728
        %v3745 = vsub.f32 %v3665, %v3729
        %v3746 = vsub.f32 %v3666, %v3730
        %v3747 = vsub.f32 %v3667, %v3731
        %v3748 = vsub.f32 %v3668, %v3732
        %v3749 = vsub.f32 %v3669, %v3733
        %v3750 = vsub.f32 %v3670, %v3734
        %v3751 = vsub.f32 %v3671, %v3735
        %v3752 = vsub.f32 %v3672, %v3736
        %v3753 = vsub.f32 %v3673, %v3737
        %v3754 = vsub.f32 %v3674, %v3738
        %v3755 = vsub.f32 %v3675, %v3739
        %v3756 = vsub.f32 %v3676, %v3740
        %v3757 = vsub.f32 %v3677, %v3741
        %v3758 = vsub.f32 %v3678, %v3742
        %v3759 = vmul.f32 %v3743, %v3743
        %v3760 = vmul.f32 %v3744, %v3744
        %v3761 = vmul.f32 %v3745, %v3745
        %v3762 = vmul.f32 %v3746, %v3746
        %v3763 = vmul.f32 %v3747, %v3747
        %v3764 = vmul.f32 %v3748, %v3748
        %v3765 = vmul.f32 %v3749, %v3749
        %v3766 = vmul.f32 %v3750, %v3750
        %v3767 = vmul.f32 %v3751, %v3751
        %v3768 = vmul.f32 %v3752, %v3752
        %v3769 = vmul.f32 %v3753, %v3753
        %v3770 = vmul.f32 %v3754, %v3754
        %v3771 = vmul.f32 %v3755, %v3755
        %v3772 = vmul.f32 %v3756, %v3756
        %v3773 = vmul.f32 %v3757, %v3757
        %v3774 = vmul.f32 %v3758, %v3758
        %v3775 = vsel %vm441, %v3759, 0.0
        %3776 = vadd.xlane.f32.xlu0 %v3775
        %v3777 = vpop.xlane.xlu0 %3776
        %v3778 = vsel %vm441, %v3760, 0.0
        %3779 = vadd.xlane.f32.xlu0 %v3778
        %v3780 = vpop.xlane.xlu0 %3779
        %v3781 = vsel %vm441, %v3761, 0.0
        %3782 = vadd.xlane.f32.xlu0 %v3781
        %v3783 = vpop.xlane.xlu0 %3782
        %v3784 = vsel %vm441, %v3762, 0.0
        %3785 = vadd.xlane.f32.xlu0 %v3784
        %v3786 = vpop.xlane.xlu0 %3785
        %v3787 = vsel %vm441, %v3763, 0.0
        %3788 = vadd.xlane.f32.xlu0 %v3787
        %v3789 = vpop.xlane.xlu0 %3788
        %v3790 = vsel %vm441, %v3764, 0.0
        %3791 = vadd.xlane.f32.xlu0 %v3790
        %v3792 = vpop.xlane.xlu0 %3791
        %v3793 = vsel %vm441, %v3765, 0.0
        %3794 = vadd.xlane.f32.xlu0 %v3793
        %v3795 = vpop.xlane.xlu0 %3794
        %v3796 = vsel %vm441, %v3766, 0.0
        %3797 = vadd.xlane.f32.xlu0 %v3796
        %v3798 = vpop.xlane.xlu0 %3797
        %v3799 = vsel %vm441, %v3767, 0.0
        %3800 = vadd.xlane.f32.xlu0 %v3799
        %v3801 = vpop.xlane.xlu0 %3800
        %v3802 = vsel %vm441, %v3768, 0.0
        %3803 = vadd.xlane.f32.xlu0 %v3802
        %v3804 = vpop.xlane.xlu0 %3803
        %v3805 = vsel %vm441, %v3769, 0.0
        %3806 = vadd.xlane.f32.xlu0 %v3805
        %v3807 = vpop.xlane.xlu0 %3806
        %v3808 = vsel %vm441, %v3770, 0.0
        %3809 = vadd.xlane.f32.xlu0 %v3808
        %v3810 = vpop.xlane.xlu0 %3809
        %v3811 = vsel %vm441, %v3771, 0.0
        %3812 = vadd.xlane.f32.xlu0 %v3811
        %v3813 = vpop.xlane.xlu0 %3812
        %v3814 = vsel %vm441, %v3772, 0.0
        %3815 = vadd.xlane.f32.xlu0 %v3814
        %v3816 = vpop.xlane.xlu0 %3815
        %v3817 = vsel %vm441, %v3773, 0.0
        %3818 = vadd.xlane.f32.xlu0 %v3817
        %v3819 = vpop.xlane.xlu0 %3818
        %v3820 = vsel %vm441, %v3774, 0.0
        %3821 = vadd.xlane.f32.xlu0 %v3820
        %v3822 = vpop.xlane.xlu0 %3821
        %v3823 = vmul.f32 %v3777, %v496
        %v3824 = vmul.f32 %v3780, %v496
        %v3825 = vmul.f32 %v3783, %v496
        %v3826 = vmul.f32 %v3786, %v496
        %v3827 = vmul.f32 %v3789, %v496
        %v3828 = vmul.f32 %v3792, %v496
        %v3829 = vmul.f32 %v3795, %v496
        %v3830 = vmul.f32 %v3798, %v496
        %v3831 = vmul.f32 %v3801, %v496
        %v3832 = vmul.f32 %v3804, %v496
        %v3833 = vmul.f32 %v3807, %v496
        %v3834 = vmul.f32 %v3810, %v496
        %v3835 = vmul.f32 %v3813, %v496
        %v3836 = vmul.f32 %v3816, %v496
        %v3837 = vmul.f32 %v3819, %v496
        %v3838 = vmul.f32 %v3822, %v496
        %v3839 = vadd.f32 %v3823, 1e-05
        %v3840 = vadd.f32 %v3824, 1e-05
        %v3841 = vadd.f32 %v3825, 1e-05
        %v3842 = vadd.f32 %v3826, 1e-05
        %v3843 = vadd.f32 %v3827, 1e-05
        %v3844 = vadd.f32 %v3828, 1e-05
        %v3845 = vadd.f32 %v3829, 1e-05
        %v3846 = vadd.f32 %v3830, 1e-05
        %v3847 = vadd.f32 %v3831, 1e-05
        %v3848 = vadd.f32 %v3832, 1e-05
        %v3849 = vadd.f32 %v3833, 1e-05
        %v3850 = vadd.f32 %v3834, 1e-05
        %v3851 = vadd.f32 %v3835, 1e-05
        %v3852 = vadd.f32 %v3836, 1e-05
        %v3853 = vadd.f32 %v3837, 1e-05
        %v3854 = vadd.f32 %v3838, 1e-05
        %v3855 = vrsqrt.pop %v3839
        %v3856 = vmul.f32 %v3855, %v3839
        %v3857 = vmul.f32 %v3856, %v3855
        %v3858 = vmul.f32 0.5, %v3857
        %v3859 = vsub.f32 1.5, %v3858
        %v3860 = vmul.f32 %v3855, %v3859
        %vm3861 = vweird.f32 %v3839
        %vm3862 = vweird.f32 %v3855
        %vm3863 = vmor %vm3861, %vm3862
        %v3864 = vsel %vm3863, %v3855, %v3860
        %v3865 = vrsqrt.pop %v3840
        %v3866 = vmul.f32 %v3865, %v3840
        %v3867 = vmul.f32 %v3866, %v3865
        %v3868 = vmul.f32 0.5, %v3867
        %v3869 = vsub.f32 1.5, %v3868
        %v3870 = vmul.f32 %v3865, %v3869
        %vm3871 = vweird.f32 %v3840
        %vm3872 = vweird.f32 %v3865
        %vm3873 = vmor %vm3871, %vm3872
        %v3874 = vsel %vm3873, %v3865, %v3870
        %v3875 = vrsqrt.pop %v3841
        %v3876 = vmul.f32 %v3875, %v3841
        %v3877 = vmul.f32 %v3876, %v3875
        %v3878 = vmul.f32 0.5, %v3877
        %v3879 = vsub.f32 1.5, %v3878
        %v3880 = vmul.f32 %v3875, %v3879
        %vm3881 = vweird.f32 %v3841
        %vm3882 = vweird.f32 %v3875
        %vm3883 = vmor %vm3881, %vm3882
        %v3884 = vsel %vm3883, %v3875, %v3880
        %v3885 = vrsqrt.pop %v3842
        %v3886 = vmul.f32 %v3885, %v3842
        %v3887 = vmul.f32 %v3886, %v3885
        %v3888 = vmul.f32 0.5, %v3887
        %v3889 = vsub.f32 1.5, %v3888
        %v3890 = vmul.f32 %v3885, %v3889
        %vm3891 = vweird.f32 %v3842
        %vm3892 = vweird.f32 %v3885
        %vm3893 = vmor %vm3891, %vm3892
        %v3894 = vsel %vm3893, %v3885, %v3890
        %v3895 = vrsqrt.pop %v3843
        %v3896 = vmul.f32 %v3895, %v3843
        %v3897 = vmul.f32 %v3896, %v3895
        %v3898 = vmul.f32 0.5, %v3897
        %v3899 = vsub.f32 1.5, %v3898
        %v3900 = vmul.f32 %v3895, %v3899
        %vm3901 = vweird.f32 %v3843
        %vm3902 = vweird.f32 %v3895
        %vm3903 = vmor %vm3901, %vm3902
        %v3904 = vsel %vm3903, %v3895, %v3900
        %v3905 = vrsqrt.pop %v3844
        %v3906 = vmul.f32 %v3905, %v3844
        %v3907 = vmul.f32 %v3906, %v3905
        %v3908 = vmul.f32 0.5, %v3907
        %v3909 = vsub.f32 1.5, %v3908
        %v3910 = vmul.f32 %v3905, %v3909
        %vm3911 = vweird.f32 %v3844
        %vm3912 = vweird.f32 %v3905
        %vm3913 = vmor %vm3911, %vm3912
        %v3914 = vsel %vm3913, %v3905, %v3910
        %v3915 = vrsqrt.pop %v3845
        %v3916 = vmul.f32 %v3915, %v3845
        %v3917 = vmul.f32 %v3916, %v3915
        %v3918 = vmul.f32 0.5, %v3917
        %v3919 = vsub.f32 1.5, %v3918
        %v3920 = vmul.f32 %v3915, %v3919
        %vm3921 = vweird.f32 %v3845
        %vm3922 = vweird.f32 %v3915
        %vm3923 = vmor %vm3921, %vm3922
        %v3924 = vsel %vm3923, %v3915, %v3920
        %v3925 = vrsqrt.pop %v3846
        %v3926 = vmul.f32 %v3925, %v3846
        %v3927 = vmul.f32 %v3926, %v3925
        %v3928 = vmul.f32 0.5, %v3927
        %v3929 = vsub.f32 1.5, %v3928
        %v3930 = vmul.f32 %v3925, %v3929
        %vm3931 = vweird.f32 %v3846
        %vm3932 = vweird.f32 %v3925
        %vm3933 = vmor %vm3931, %vm3932
        %v3934 = vsel %vm3933, %v3925, %v3930
        %v3935 = vrsqrt.pop %v3847
        %v3936 = vmul.f32 %v3935, %v3847
        %v3937 = vmul.f32 %v3936, %v3935
        %v3938 = vmul.f32 0.5, %v3937
        %v3939 = vsub.f32 1.5, %v3938
        %v3940 = vmul.f32 %v3935, %v3939
        %vm3941 = vweird.f32 %v3847
        %vm3942 = vweird.f32 %v3935
        %vm3943 = vmor %vm3941, %vm3942
        %v3944 = vsel %vm3943, %v3935, %v3940
        %v3945 = vrsqrt.pop %v3848
        %v3946 = vmul.f32 %v3945, %v3848
        %v3947 = vmul.f32 %v3946, %v3945
        %v3948 = vmul.f32 0.5, %v3947
        %v3949 = vsub.f32 1.5, %v3948
        %v3950 = vmul.f32 %v3945, %v3949
        %vm3951 = vweird.f32 %v3848
        %vm3952 = vweird.f32 %v3945
        %vm3953 = vmor %vm3951, %vm3952
        %v3954 = vsel %vm3953, %v3945, %v3950
        %v3955 = vrsqrt.pop %v3849
        %v3956 = vmul.f32 %v3955, %v3849
        %v3957 = vmul.f32 %v3956, %v3955
        %v3958 = vmul.f32 0.5, %v3957
        %v3959 = vsub.f32 1.5, %v3958
        %v3960 = vmul.f32 %v3955, %v3959
        %vm3961 = vweird.f32 %v3849
        %vm3962 = vweird.f32 %v3955
        %vm3963 = vmor %vm3961, %vm3962
        %v3964 = vsel %vm3963, %v3955, %v3960
        %v3965 = vrsqrt.pop %v3850
        %v3966 = vmul.f32 %v3965, %v3850
        %v3967 = vmul.f32 %v3966, %v3965
        %v3968 = vmul.f32 0.5, %v3967
        %v3969 = vsub.f32 1.5, %v3968
        %v3970 = vmul.f32 %v3965, %v3969
        %vm3971 = vweird.f32 %v3850
        %vm3972 = vweird.f32 %v3965
        %vm3973 = vmor %vm3971, %vm3972
        %v3974 = vsel %vm3973, %v3965, %v3970
        %v3975 = vrsqrt.pop %v3851
        %v3976 = vmul.f32 %v3975, %v3851
        %v3977 = vmul.f32 %v3976, %v3975
        %v3978 = vmul.f32 0.5, %v3977
        %v3979 = vsub.f32 1.5, %v3978
        %v3980 = vmul.f32 %v3975, %v3979
        %vm3981 = vweird.f32 %v3851
        %vm3982 = vweird.f32 %v3975
        %vm3983 = vmor %vm3981, %vm3982
        %v3984 = vsel %vm3983, %v3975, %v3980
        %v3985 = vrsqrt.pop %v3852
        %v3986 = vmul.f32 %v3985, %v3852
        %v3987 = vmul.f32 %v3986, %v3985
        %v3988 = vmul.f32 0.5, %v3987
        %v3989 = vsub.f32 1.5, %v3988
        %v3990 = vmul.f32 %v3985, %v3989
        %vm3991 = vweird.f32 %v3852
        %vm3992 = vweird.f32 %v3985
        %vm3993 = vmor %vm3991, %vm3992
        %v3994 = vsel %vm3993, %v3985, %v3990
        %v3995 = vrsqrt.pop %v3853
        %v3996 = vmul.f32 %v3995, %v3853
        %v3997 = vmul.f32 %v3996, %v3995
        %v3998 = vmul.f32 0.5, %v3997
        %v3999 = vsub.f32 1.5, %v3998
        %v4000 = vmul.f32 %v3995, %v3999
        %vm4001 = vweird.f32 %v3853
        %vm4002 = vweird.f32 %v3995
        %vm4003 = vmor %vm4001, %vm4002
        %v4004 = vsel %vm4003, %v3995, %v4000
        %v4005 = vrsqrt.pop %v3854
        %v4006 = vmul.f32 %v4005, %v3854
        %v4007 = vmul.f32 %v4006, %v4005
        %v4008 = vmul.f32 0.5, %v4007
        %v4009 = vsub.f32 1.5, %v4008
        %v4010 = vmul.f32 %v4005, %v4009
        %vm4011 = vweird.f32 %v3854
        %vm4012 = vweird.f32 %v4005
        %vm4013 = vmor %vm4011, %vm4012
        %v4014 = vsel %vm4013, %v4005, %v4010
        %v4015 = vmul.f32 %v3743, %v3864
        %v4016 = vmul.f32 %v3744, %v3874
        %v4017 = vmul.f32 %v3745, %v3884
        %v4018 = vmul.f32 %v3746, %v3894
        %v4019 = vmul.f32 %v3747, %v3904
        %v4020 = vmul.f32 %v3748, %v3914
        %v4021 = vmul.f32 %v3749, %v3924
        %v4022 = vmul.f32 %v3750, %v3934
        %v4023 = vmul.f32 %v3751, %v3944
        %v4024 = vmul.f32 %v3752, %v3954
        %v4025 = vmul.f32 %v3753, %v3964
        %v4026 = vmul.f32 %v3754, %v3974
        %v4027 = vmul.f32 %v3755, %v3984
        %v4028 = vmul.f32 %v3756, %v3994
        %v4029 = vmul.f32 %v3757, %v4004
        %v4030 = vmul.f32 %v3758, %v4014
        %v4031 = vperm.slane %v336, 1
        %v4032 = vmul.f32 %v4015, %v4031
        %v4033 = vmul.f32 %v4016, %v4031
        %v4034 = vmul.f32 %v4017, %v4031
        %v4035 = vmul.f32 %v4018, %v4031
        %v4036 = vmul.f32 %v4019, %v4031
        %v4037 = vmul.f32 %v4020, %v4031
        %v4038 = vmul.f32 %v4021, %v4031
        %v4039 = vmul.f32 %v4022, %v4031
        %v4040 = vmul.f32 %v4023, %v4031
        %v4041 = vmul.f32 %v4024, %v4031
        %v4042 = vmul.f32 %v4025, %v4031
        %v4043 = vmul.f32 %v4026, %v4031
        %v4044 = vmul.f32 %v4027, %v4031
        %v4045 = vmul.f32 %v4028, %v4031
        %v4046 = vmul.f32 %v4029, %v4031
        %v4047 = vmul.f32 %v4030, %v4031
        %v4048 = vperm.slane %v336, 2
        %v4049 = vadd.f32 %v4032, %v4048
        %v4050 = vadd.f32 %v4033, %v4048
        %v4051 = vadd.f32 %v4034, %v4048
        %v4052 = vadd.f32 %v4035, %v4048
        %v4053 = vadd.f32 %v4036, %v4048
        %v4054 = vadd.f32 %v4037, %v4048
        %v4055 = vadd.f32 %v4038, %v4048
        %v4056 = vadd.f32 %v4039, %v4048
        %v4057 = vadd.f32 %v4040, %v4048
        %v4058 = vadd.f32 %v4041, %v4048
        %v4059 = vadd.f32 %v4042, %v4048
        %v4060 = vadd.f32 %v4043, %v4048
        %v4061 = vadd.f32 %v4044, %v4048
        %v4062 = vadd.f32 %v4045, %v4048
        %v4063 = vadd.f32 %v4046, %v4048
        %v4064 = vadd.f32 %v4047, %v4048
        %v4065 = vld [vmem:[%s3] sm:$0xff]
        %v4066 = vld [vmem:[%s3 + $0x8] sm:$0xff]
        %4067 = vmatpush.msra.mxu0 %v4064
        %4068 = vmatpush.msra.mxu0 %v4063
        %4069 = vmatpush.msra.mxu0 %v4062
        %4070 = vmatpush.msra.mxu0 %v4061
        %4071 = vmatpush.msra.mxu0 %v4060
        %4072 = vmatpush.msra.mxu0 %v4059
        %4073 = vmatpush.msra.mxu0 %v4058
        %4074 = vmatpush.msra.mxu0 %v4057
        %4075 = vmatpush.msra.mxu0 %v4056
        %4076 = vmatpush.msra.mxu0 %v4055
        %4077 = vmatpush.msra.mxu0 %v4054
        %4078 = vmatpush.msra.mxu0 %v4053
        %4079 = vmatpush.msra.mxu0 %v4052
        %4080 = vmatpush.msra.mxu0 %v4051
        %4081 = vmatpush.msra.mxu0 %v4050
        %4082 = vmatpush.msra.mxu0 %v4049
        %4083 = vmatmul.f32.gmra.mxu0 %v4065
        %v4084 = vpop.f32.mrf.mxu0
        %v4085 = vadd.f32 0.0, %v4084
        %4086 = vmatmul.f32.gmra.mxu0 %v4066
        %v4087 = vpop.f32.mrf.mxu0
        %v4088 = vadd.f32 0.0, %v4087
        %4089 = vdwg.mxu0
        %v4090 = vpack.c.bf16 %v4088, %v4085
        %v4091 = vld [vmem:[%s8] sm:$0xf]
        %v4092 = vld [vmem:[%s8 + $0x4] sm:$0xf]
        %v4093 = vld [vmem:[%s8 + $0x8] sm:$0xf]
        %v4094 = vld [vmem:[%s8 + $0xc] sm:$0xf]
        %v4095 = vperm.slane %v336, 3
        %v4100 = vunpack.c.l.b16 %v4091
        %v4101 = vunpack.c.l.b16 %v4092
        %v4102 = vunpack.c.l.b16 %v4093
        %v4103 = vunpack.c.l.b16 %v4094
        %v4104 = vpack.c.b16 %v4101, %v4100
        %v4105 = vpack.c.b16 %v4103, %v4102
        %v4109 = vsel %vm441, %v4090, 0
        %4111 = vmatpush.bf16.msra.mxu0 0
        %4112 = vmatpush.bf16.msra.mxu0 0
        %4113 = vmatpush.bf16.msra.mxu0 0
        %4114 = vmatpush.bf16.msra.mxu0 0
        %4115 = vmatpush.bf16.msra.mxu0 0
        %4116 = vmatpush.bf16.msra.mxu0 0
        %4117 = vmatpush.bf16.msra.mxu0 %v4105
        %4118 = vmatpush.bf16.msra.mxu0 %v4104
        %4119 = vmatmul.bf16.gmra.mxu0 %v4109
        %v4120 = vpop.f32.mrf.mxu0
        %v4121 = vadd.f32 %v4095, %v4120
        %v4122 = vpop.f32.mrf.mxu0
        %v4123 = vadd.f32 %v4095, %v4122
        %4124 = vdwg.mxu0
        %4125 = vst [vmem:[%s326] sm:$0xff] %v4121
        %4126 = vst [vmem:[%s326 + $0x8] sm:$0xff] %v4123
        %s4127 = sand.u32 %s225, 1
        %s4128 = scalar_lea.sflag [#allocation3], %s4127
        %s4129 = sand.u32 %s225, 1
        %s4130 = smul.addr %s4129, 16
        %s4131 = scalar_lea.vmem [#allocation2], %s4130
        // Predicated region
        $region57: #{tpu_custom_call.1} parent=55 // pred_check
          %p4132 = pneg %p235
        $region58: #{tpu_custom_call.1} parent=55 // pred_check_branch
          %4134 = sbr.rel (%p4132) target = $region60
        $region59: #{tpu_custom_call.1} parent=55 // pred_region
          %s4135 = smul.u32 2, %s23
          %4137 = vsyncadd %s4128, 0
          %s4138 = smul.addr %s4135, 8
          %s4139 = scalar_lea.hbm %s9, %s4138
          %s4140 = sshll.u32 %s4131, 4
          %s4141 = int_to_ptr.vmem [resolvable:$true] %s4140
          %s4142 = sshll.u32 %s4139, 4
          %s4143 = int_to_ptr.hbm [resolvable:$true] %s4142
          %4148 = dma.vmem_to_hbm [thread:$0]  %s4141, 256, %s4143, %s4128, 128, 128, 8
        $region60: #{tpu_custom_call.1} parent=55 // pred_fallthru
          _
      $region56: #{tpu_custom_call.1} parent=5 // pred_fallthru
        _
      %p4149 = scmp.le.s32.totalorder 2, %s18
      // Predicated region
      $region61: #{tpu_custom_call.1} parent=5 // pred_check
        %p4150 = pneg %p4149
      $region62: #{tpu_custom_call.1} parent=5 // pred_check_branch
        %4152 = sbr.rel (%p4150) target = $region64
      $region63: #{tpu_custom_call.1} parent=5 // pred_region
        %s4153 = ssub.s32 %s18, 2
        // Predicated region
        $region65: #{tpu_custom_call.1} parent=63 // pred_check
          %p4154 = pneg %p241
        $region66: #{tpu_custom_call.1} parent=63 // pred_check_branch
          %4156 = sbr.rel (%p4154) target = $region68
        $region67: #{tpu_custom_call.1} parent=63 // pred_region
          %s4157 = sand.u32 %s226, 1
          %s4158 = scalar_lea.sflag [#allocation3], %s4157
          %s4159 = sand.u32 %s226, 1
          %s4160 = smul.addr %s4159, 16
          %s4161 = scalar_lea.vmem [#allocation2], %s4160
          %4163 = dma.done %s4158, 256
        $region68: #{tpu_custom_call.1} parent=63 // pred_fallthru
          _
      $region64: #{tpu_custom_call.1} parent=5 // pred_fallthru
        _
    $region6: #{tpu_custom_call.1} parent=1 // loop_footer
      %s22 = sadd.s32 1, %s18
    $region7: #{tpu_custom_call.1} parent=1 // loop_footer_branch
      %17 = sbr.rel target = $region3
    $region8: #{tpu_custom_call.1} parent=1 // loop_exit
      _
    %4164 = vsyncpa [#allocation3], 1
    %s4165 = scalar_lea.sflag [#allocation3], 1
    %4166 = vsyncpa %s4165, 1

</llo_original>
